<compile_context>
chip_gen: v6e
topology: v6e:2x2x1
jax: 0.10.0
libtpu: 0.0.40
codegen_flags: <defaults>
</compile_context>

<pallas_src>
import functools

import jax
import jax.numpy as jnp
import numpy as np
from jax import lax
from jax.experimental import pallas as pl
from jax.experimental.pallas import tpu as pltpu

LANE = 128


def _round_up(x, m):
    return (x + m - 1) // m * m


def _pick_tile_h(H, W, cin_p, cmid_p, cout_p, out_bytes, budget_bytes):
    """Largest row tile (multiple of 4, <= 64, <= round_up(H,4)) fitting the VMEM budget."""
    wp = W + 2
    weights = 2 * 9 * (cin_p * cmid_p + cmid_p * cout_p)          # bf16, single-buffered
    cap = max(4, min(64, _round_up(H, 4)))
    for th in range(cap, 0, -4):
        hm, hh = th + 2, th + 4
        pipelined = 2 * (hh * wp * cin_p * 2                       # main+halo in, x2 buf
                         + th * W * cout_p * out_bytes)            # out tile, x2 buf
        live = (hh * W * 3 * cin_p * 2                             # xcat (bf16)
                + hm * W * cmid_p * 4                              # acc1 / y1 (f32)
                + hm * W * 3 * cmid_p * 2                          # mcat (bf16)
                + th * W * cout_p * 4)                             # acc2 (f32)
        if weights + pipelined + 2 * live <= budget_bytes:
            return th
    return 4


def double_conv_kernel(xm_ref, xh_ref, w1_ref, s1_ref, b1_ref,
                       w2_ref, s2_ref, b2_ref, o_ref, *, h_img):
    # xm_ref : (1, TILE_H, W+2, Cin_p)  bf16 rows [i*TILE_H, (i+1)*TILE_H) of padded input
    # xh_ref : (1, 4,      W+2, Cin_p)  bf16 4-row halo just below the main block
    # w1_ref : (3, 3*Cin_p,  Cmid_p)    bf16 conv1 taps, row index = kw*Cin_p + cin
    # w2_ref : (3, 3*Cmid_p, Cout_p)    bf16 conv2 taps
    # s*/b*  : (1, C)                   f32 folded BatchNorm scale / shift
    # o_ref  : (1, TILE_H, W, Cout_p)   out_dtype
    tile_h = xm_ref.shape[1]
    wp = xm_ref.shape[2]
    w = wp - 2
    hm = tile_h + 2
    cin3 = w1_ref.shape[1]
    cmid = w1_ref.shape[2]
    cmid3 = w2_ref.shape[1]
    cout = w2_ref.shape[2]
    i = pl.program_id(1)

    # Padded-input window for this row tile: TILE_H + 4 rows (2-row halo each side).
    x = jnp.concatenate([xm_ref[0], xh_ref[0]], axis=0)            # (tile_h+4, W+2, Cin_p)

    # Hoisted "im2col over kw": one lane-concat of the three column-shifted views,
    # reused by all three kh row-windows below (leading-axis slices are cheap).
    xcat = jnp.concatenate([x[:, 0:w], x[:, 1:w + 1], x[:, 2:w + 2]], axis=-1)

    # ---- conv1: 3x3 / pad=1 / no bias.  One MXU matmul per kernel row, K = 3*Cin_p.
    acc1 = jnp.zeros((hm * w, cmid), jnp.float32)
    for kh in range(3):
        acc1 = acc1 + jnp.dot(xcat[kh:kh + hm].reshape(hm * w, cin3), w1_ref[kh],
                              preferred_element_type=jnp.float32)

    # folded BN + ReLU (f32 epilogue)
    y1 = jnp.maximum(acc1 * s1_ref[...] + b1_ref[...], 0.0)

    # conv2 zero-pads the *intermediate*: zero the (boundary-only) intermediate rows
    # that fall outside the image (row r valid iff 0 <= i*TILE_H - 1 + r < H).
    f = lax.broadcasted_iota(jnp.int32, (hm * w, 1), 0)
    lo = (1 - i * tile_h) * w
    hi = (h_img + 1 - i * tile_h) * w
    y1 = y1 * ((f >= lo) & (f < hi)).astype(jnp.float32)

    y1b = y1.reshape(hm, w, cmid).astype(jnp.bfloat16)

    # conv2 taps built directly from the live value: zero side columns + hoisted
    # kw lane-concat (no VMEM staging scratch, no per-kh shifted-slice rebuilds).
    zcol = jnp.zeros((hm, 1, cmid), jnp.bfloat16)
    left = jnp.concatenate([zcol, y1b[:, 0:w - 1]], axis=1)
    right = jnp.concatenate([y1b[:, 1:w], zcol], axis=1)
    mcat = jnp.concatenate([left, y1b, right], axis=-1)            # (hm, W, 3*Cmid_p)

    # ---- conv2: 3x3 / pad=1 / no bias, same 3-matmul structure (K = 3*Cmid_p).
    acc2 = jnp.zeros((tile_h * w, cout), jnp.float32)
    for kh in range(3):
        acc2 = acc2 + jnp.dot(mcat[kh:kh + tile_h].reshape(tile_h * w, cmid3),
                              w2_ref[kh], preferred_element_type=jnp.float32)

    y2 = jnp.maximum(acc2 * s2_ref[...] + b2_ref[...], 0.0)
    o_ref[...] = y2.reshape(1, tile_h, w, cout).astype(o_ref.dtype)


def double_conv(x_nchw, w1, g1, be1, m1, v1, w2, g2, be2, m2, v2,
                eps=1e-5, tile_h=None, out_dtype=jnp.bfloat16,
                vmem_limit_bytes=64 * 1024 * 1024):
    """x_nchw: (N, Cin, H, W). w1: (Cmid, Cin, 3, 3). w2: (Cout, Cmid, 3, 3)."""
    N, Cin, H, W = map(int, x_nchw.shape)
    Cmid, Cout = int(w1.shape[0]), int(w2.shape[0])

    cin_p = _round_up(Cin, LANE)
    cmid_p = _round_up(Cmid, LANE)
    cout_p = _round_up(Cout, LANE)
    out_bytes = np.dtype(out_dtype).itemsize

    if tile_h is None:
        tile_h = _pick_tile_h(H, W, cin_p, cmid_p, cout_p, out_bytes,
                              budget_bytes=int(0.6 * vmem_limit_bytes))
    assert tile_h % 4 == 0, "tile_h must be a multiple of 4 (halo block granularity)"

    n_h = pl.cdiv(H, tile_h)
    hp = n_h * tile_h + 4            # 2 halo rows each side + row-tile round-up
    wp = W + 2

    # NCHW -> NHWC, bf16 operands; zero-pad H(2, hp-2-H), W(1,1), C -> cin_p.
    x = jnp.transpose(x_nchw, (0, 2, 3, 1)).astype(jnp.bfloat16)
    xp = jnp.pad(x, ((0, 0), (2, hp - 2 - H), (1, 1), (0, cin_p - Cin)))

    # Fold eval-mode BatchNorm into per-channel scale/shift (f32), lane-pad with zeros.
    s1 = (g1 / jnp.sqrt(v1 + eps)).astype(jnp.float32)
    b1 = (be1 - m1 * s1).astype(jnp.float32)
    s2 = (g2 / jnp.sqrt(v2 + eps)).astype(jnp.float32)
    b2 = (be2 - m2 * s2).astype(jnp.float32)
    s1p = jnp.pad(s1, (0, cmid_p - Cmid)).reshape(1, cmid_p)
    b1p = jnp.pad(b1, (0, cmid_p - Cmid)).reshape(1, cmid_p)
    s2p = jnp.pad(s2, (0, cout_p - Cout)).reshape(1, cout_p)
    b2p = jnp.pad(b2, (0, cout_p - Cout)).reshape(1, cout_p)

    # OIHW -> (kh, kw*Cin_p + cin, cout), channel-padded, bf16.
    # TODO(synk): for tiny-Cin stems a tight (kw,cin) packing (K=round_up(3*Cin,128))
    #             would cut MXU K-passes 3x; not implemented (needs lane shuffles).
    def pack_weights(wgt, ci, ci_p, co, co_p):
        wt = jnp.transpose(wgt, (2, 3, 1, 0))                      # (3, 3, ci, co)
        wt = jnp.pad(wt, ((0, 0), (0, 0), (0, ci_p - ci), (0, co_p - co)))
        return wt.reshape(3, 3 * ci_p, co_p).astype(jnp.bfloat16)

    w1k = pack_weights(w1, Cin, cin_p, Cmid, cmid_p)
    w2k = pack_weights(w2, Cmid, cmid_p, Cout, cout_p)

    kernel = functools.partial(double_conv_kernel, h_img=H)
    invariant = pl.Buffered(1)       # single-buffer operands whose block never changes

    out_full = pl.pallas_call(
        kernel,
        out_shape=jax.ShapeDtypeStruct((N, n_h * tile_h, W, cout_p), out_dtype),
        grid_spec=pltpu.PrefetchScalarGridSpec(
            num_scalar_prefetch=0,
            grid=(N, n_h),
            in_specs=[
                # main row tile of the padded input
                pl.BlockSpec((1, tile_h, wp, cin_p), lambda n, i: (n, i, 0, 0)),
                # 4-row halo immediately below (second view of the same array)
                pl.BlockSpec((1, 4, wp, cin_p),
                             lambda n, i: (n, (i + 1) * (tile_h // 4), 0, 0)),
                pl.BlockSpec((3, 3 * cin_p, cmid_p), lambda n, i: (0, 0, 0),
                             pipeline_mode=invariant),
                pl.BlockSpec((1, cmid_p), lambda n, i: (0, 0), pipeline_mode=invariant),
                pl.BlockSpec((1, cmid_p), lambda n, i: (0, 0), pipeline_mode=invariant),
                pl.BlockSpec((3, 3 * cmid_p, cout_p), lambda n, i: (0, 0, 0),
                             pipeline_mode=invariant),
                pl.BlockSpec((1, cout_p), lambda n, i: (0, 0), pipeline_mode=invariant),
                pl.BlockSpec((1, cout_p), lambda n, i: (0, 0), pipeline_mode=invariant),
            ],
            out_specs=pl.BlockSpec((1, tile_h, W, cout_p),
                                   lambda n, i: (n, i, 0, 0)),
        ),
        compiler_params=pltpu.CompilerParams(
            dimension_semantics=("parallel", "parallel"),
            vmem_limit_bytes=vmem_limit_bytes),
    )(xp, xp, w1k, s1p, b1p, w2k, s2p, b2p)

    # strip row-tile round-up and channel padding, back to NCHW
    return jnp.transpose(out_full[:, :H, :, :Cout], (0, 3, 1, 2))


def _reference(x, w1, s1, b1, w2, s2, b2):
    """Pure-JAX NCHW reference, with the same intentional bf16 operand rounding."""
    bf = lambda a: a.astype(jnp.bfloat16).astype(jnp.float32)
    dn = ('NCHW', 'OIHW', 'NCHW')
    y = lax.conv_general_dilated(bf(x), bf(w1), (1, 1), ((1, 1), (1, 1)),
                                 dimension_numbers=dn)
    y = jnp.maximum(y * s1[None, :, None, None] + b1[None, :, None, None], 0.0)
    y = lax.conv_general_dilated(bf(y), bf(w2), (1, 1), ((1, 1), (1, 1)),
                                 dimension_numbers=dn)
    y = jnp.maximum(y * s2[None, :, None, None] + b2[None, :, None, None], 0.0)
    return y


if __name__ == "__main__":
    N, Cin, H, W = 2, 4, 16, 16
    Cmid = Cout = 8
    eps = 1e-5

    key = jax.random.PRNGKey(0)
    ks = jax.random.split(key, 9)

    x = jax.random.normal(ks[0], (N, Cin, H, W), jnp.float32)

    # conv weights (PyTorch OIHW layout), no bias
    w1 = jax.random.normal(ks[1], (Cmid, Cin, 3, 3), jnp.float32) * 0.2
    w2 = jax.random.normal(ks[2], (Cout, Cmid, 3, 3), jnp.float32) * 0.2

    # BatchNorm parameters / running stats (deterministic, non-trivial)
    g1 = 1.0 + 0.1 * jax.random.normal(ks[3], (Cmid,), jnp.float32)
    be1 = 0.1 * jax.random.normal(ks[4], (Cmid,), jnp.float32)
    m1 = 0.1 * jax.random.normal(ks[5], (Cmid,), jnp.float32)
    v1 = 1.0 + 0.1 * jax.random.uniform(ks[6], (Cmid,), jnp.float32)

    g2 = 1.0 + 0.1 * jax.random.normal(ks[7], (Cout,), jnp.float32)
    be2 = 0.1 * jax.random.normal(ks[8], (Cout,), jnp.float32)
    m2 = jnp.linspace(-0.1, 0.1, Cout, dtype=jnp.float32)
    v2 = 1.0 + jnp.linspace(0.0, 0.2, Cout, dtype=jnp.float32)

    out = double_conv(x, w1, g1, be1, m1, v1, w2, g2, be2, m2, v2, eps=eps)
    out = jax.block_until_ready(out)

    # verify against pure-JAX reference (bf16 operand/output aware tolerance)
    s1 = g1 / jnp.sqrt(v1 + eps); b1 = be1 - m1 * s1
    s2 = g2 / jnp.sqrt(v2 + eps); b2 = be2 - m2 * s2
    ref = _reference(x, w1, s1, b1, w2, s2, b2)
    assert out.shape == (N, Cout, H, W)
    np.testing.assert_allclose(np.asarray(out.astype(jnp.float32)), np.asarray(ref),
                               rtol=2e-2, atol=2e-2)

    print("KERNEL_OK")
</pallas_src>

<mosaic_0001>
module attributes {stable_mosaic.version = 11 : i64} {
  func.func @double_conv_kernel(%arg0: i32, %arg1: i32, %arg2: memref<1x16x18x128xbf16, #tpu.memory_space<vmem>>, %arg3: memref<1x4x18x128xbf16, #tpu.memory_space<vmem>>, %arg4: memref<3x384x128xbf16, #tpu.memory_space<vmem>>, %arg5: memref<1x128xf32, #tpu.memory_space<vmem>>, %arg6: memref<1x128xf32, #tpu.memory_space<vmem>>, %arg7: memref<3x384x128xbf16, #tpu.memory_space<vmem>>, %arg8: memref<1x128xf32, #tpu.memory_space<vmem>>, %arg9: memref<1x128xf32, #tpu.memory_space<vmem>>, %arg10: memref<1x16x16x128xbf16, #tpu.memory_space<vmem>>) attributes {dimension_semantics = [#tpu.dimension_semantics<parallel>, #tpu.dimension_semantics<parallel>], iteration_bounds = array<i64: 2, 1>, scalar_prefetch = 0 : i64, scratch_operands = 0 : i64, tpu.core_type = #tpu.core_type<tc>, window_params = [{transform_indices = @transform_0, window_bounds = array<i64: 1, 16, 18, 128>}, {transform_indices = @transform_1, window_bounds = array<i64: 1, 4, 18, 128>}, {pipeline_mode = #tpu.pipeline_mode<synchronous>, transform_indices = @transform_2, window_bounds = array<i64: 3, 384, 128>}, {pipeline_mode = #tpu.pipeline_mode<synchronous>, transform_indices = @transform_3, window_bounds = array<i64: 1, 128>}, {pipeline_mode = #tpu.pipeline_mode<synchronous>, transform_indices = @transform_4, window_bounds = array<i64: 1, 128>}, {pipeline_mode = #tpu.pipeline_mode<synchronous>, transform_indices = @transform_5, window_bounds = array<i64: 3, 384, 128>}, {pipeline_mode = #tpu.pipeline_mode<synchronous>, transform_indices = @transform_6, window_bounds = array<i64: 1, 128>}, {pipeline_mode = #tpu.pipeline_mode<synchronous>, transform_indices = @transform_7, window_bounds = array<i64: 1, 128>}, {transform_indices = @transform_8, window_bounds = array<i64: 1, 16, 16, 128>}]} {
    %c0 = arith.constant 0 : index
    %c0_0 = arith.constant 0 : index
    %c0_1 = arith.constant 0 : index
    %c0_2 = arith.constant 0 : index
    %0 = vector.load %arg2[%c0, %c0_0, %c0_1, %c0_2] : memref<1x16x18x128xbf16, #tpu.memory_space<vmem>>, vector<1x16x18x128xbf16>
    %1 = vector.shape_cast %0 : vector<1x16x18x128xbf16> to vector<16x18x128xbf16>
    %c0_3 = arith.constant 0 : index
    %c0_4 = arith.constant 0 : index
    %c0_5 = arith.constant 0 : index
    %c0_6 = arith.constant 0 : index
    %2 = vector.load %arg3[%c0_3, %c0_4, %c0_5, %c0_6] : memref<1x4x18x128xbf16, #tpu.memory_space<vmem>>, vector<1x4x18x128xbf16>
    %3 = vector.shape_cast %2 : vector<1x4x18x128xbf16> to vector<4x18x128xbf16>
    %4 = tpu.concatenate %1, %3 in 0 : vector<16x18x128xbf16>, vector<4x18x128xbf16> -> vector<20x18x128xbf16>
    %5 = vector.extract_strided_slice %4 {offsets = [0, 0, 0], sizes = [20, 16, 128], strides = [1, 1, 1]} : vector<20x18x128xbf16> to vector<20x16x128xbf16>
    %6 = vector.extract_strided_slice %4 {offsets = [0, 1, 0], sizes = [20, 16, 128], strides = [1, 1, 1]} : vector<20x18x128xbf16> to vector<20x16x128xbf16>
    %7 = vector.extract_strided_slice %4 {offsets = [0, 2, 0], sizes = [20, 16, 128], strides = [1, 1, 1]} : vector<20x18x128xbf16> to vector<20x16x128xbf16>
    %8 = tpu.concatenate %5, %6, %7 in 2 : vector<20x16x128xbf16>, vector<20x16x128xbf16>, vector<20x16x128xbf16> -> vector<20x16x384xbf16>
    %cst = arith.constant 0.000000e+00 : f32
    %9 = vector.broadcast %cst : f32 to vector<288x128xf32>
    %10 = vector.extract_strided_slice %8 {offsets = [0, 0, 0], sizes = [18, 16, 384], strides = [1, 1, 1]} : vector<20x16x384xbf16> to vector<18x16x384xbf16>
    %11 = vector.shape_cast %10 : vector<18x16x384xbf16> to vector<288x384xbf16>
    %c0_7 = arith.constant 0 : index
    %c0_8 = arith.constant 0 : index
    %c0_9 = arith.constant 0 : index
    %12 = vector.load %arg4[%c0_7, %c0_8, %c0_9] : memref<3x384x128xbf16, #tpu.memory_space<vmem>>, vector<1x384x128xbf16>
    %13 = vector.shape_cast %12 : vector<1x384x128xbf16> to vector<384x128xbf16>
    %cst_10 = arith.constant dense<0.000000e+00> : vector<288x128xf32>
    %14 = tpu.matmul %11, %13, %cst_10 {dimension_numbers = #tpu.dot_dimension_numbers<[1], [0], [0], [1], [0, 0, 1, 1], [], []>} : vector<288x384xbf16>, vector<384x128xbf16>, vector<288x128xf32> -> vector<288x128xf32>
    %15 = arith.addf %9, %14 : vector<288x128xf32>
    %16 = vector.extract_strided_slice %8 {offsets = [1, 0, 0], sizes = [18, 16, 384], strides = [1, 1, 1]} : vector<20x16x384xbf16> to vector<18x16x384xbf16>
    %17 = vector.shape_cast %16 : vector<18x16x384xbf16> to vector<288x384xbf16>
    %c1 = arith.constant 1 : index
    %c0_11 = arith.constant 0 : index
    %c0_12 = arith.constant 0 : index
    %18 = vector.load %arg4[%c1, %c0_11, %c0_12] : memref<3x384x128xbf16, #tpu.memory_space<vmem>>, vector<1x384x128xbf16>
    %19 = vector.shape_cast %18 : vector<1x384x128xbf16> to vector<384x128xbf16>
    %cst_13 = arith.constant dense<0.000000e+00> : vector<288x128xf32>
    %20 = tpu.matmul %17, %19, %cst_13 {dimension_numbers = #tpu.dot_dimension_numbers<[1], [0], [0], [1], [0, 0, 1, 1], [], []>} : vector<288x384xbf16>, vector<384x128xbf16>, vector<288x128xf32> -> vector<288x128xf32>
    %21 = arith.addf %15, %20 : vector<288x128xf32>
    %22 = vector.extract_strided_slice %8 {offsets = [2, 0, 0], sizes = [18, 16, 384], strides = [1, 1, 1]} : vector<20x16x384xbf16> to vector<18x16x384xbf16>
    %23 = vector.shape_cast %22 : vector<18x16x384xbf16> to vector<288x384xbf16>
    %c2 = arith.constant 2 : index
    %c0_14 = arith.constant 0 : index
    %c0_15 = arith.constant 0 : index
    %24 = vector.load %arg4[%c2, %c0_14, %c0_15] : memref<3x384x128xbf16, #tpu.memory_space<vmem>>, vector<1x384x128xbf16>
    %25 = vector.shape_cast %24 : vector<1x384x128xbf16> to vector<384x128xbf16>
    %cst_16 = arith.constant dense<0.000000e+00> : vector<288x128xf32>
    %26 = tpu.matmul %23, %25, %cst_16 {dimension_numbers = #tpu.dot_dimension_numbers<[1], [0], [0], [1], [0, 0, 1, 1], [], []>} : vector<288x384xbf16>, vector<384x128xbf16>, vector<288x128xf32> -> vector<288x128xf32>
    %27 = arith.addf %21, %26 : vector<288x128xf32>
    %c0_17 = arith.constant 0 : index
    %c0_18 = arith.constant 0 : index
    %28 = vector.load %arg5[%c0_17, %c0_18] : memref<1x128xf32, #tpu.memory_space<vmem>>, vector<1x128xf32>
    %29 = vector.broadcast %28 : vector<1x128xf32> to vector<288x128xf32>
    %30 = arith.mulf %27, %29 : vector<288x128xf32>
    %c0_19 = arith.constant 0 : index
    %c0_20 = arith.constant 0 : index
    %31 = vector.load %arg6[%c0_19, %c0_20] : memref<1x128xf32, #tpu.memory_space<vmem>>, vector<1x128xf32>
    %32 = vector.broadcast %31 : vector<1x128xf32> to vector<288x128xf32>
    %33 = arith.addf %30, %32 : vector<288x128xf32>
    %cst_21 = arith.constant 0.000000e+00 : f32
    %34 = vector.broadcast %cst_21 : f32 to vector<288x128xf32>
    %35 = arith.maximumf %33, %34 : vector<288x128xf32>
    %36 = tpu.iota {dimensions = array<i32: 0>} : vector<288x1xi32>
    %c16_i32 = arith.constant 16 : i32
    %37 = arith.muli %arg1, %c16_i32 : i32
    %c1_i32 = arith.constant 1 : i32
    %38 = arith.subi %c1_i32, %37 : i32
    %c16_i32_22 = arith.constant 16 : i32
    %39 = arith.muli %38, %c16_i32_22 : i32
    %c16_i32_23 = arith.constant 16 : i32
    %40 = arith.muli %arg1, %c16_i32_23 : i32
    %c17_i32 = arith.constant 17 : i32
    %41 = arith.subi %c17_i32, %40 : i32
    %c16_i32_24 = arith.constant 16 : i32
    %42 = arith.muli %41, %c16_i32_24 : i32
    %43 = vector.broadcast %39 : i32 to vector<288x1xi32>
    %44 = arith.cmpi sge, %36, %43 : vector<288x1xi32>
    %45 = vector.broadcast %42 : i32 to vector<288x1xi32>
    %46 = arith.cmpi slt, %36, %45 : vector<288x1xi32>
    %47 = arith.andi %44, %46 : vector<288x1xi1>
    %48 = arith.extui %47 : vector<288x1xi1> to vector<288x1xi32>
    %49 = arith.sitofp %48 : vector<288x1xi32> to vector<288x1xf32>
    %50 = vector.broadcast %49 : vector<288x1xf32> to vector<288x128xf32>
    %51 = arith.mulf %35, %50 : vector<288x128xf32>
    %52 = vector.shape_cast %51 : vector<288x128xf32> to vector<18x16x128xf32>
    %53 = arith.truncf %52 : vector<18x16x128xf32> to vector<18x16x128xbf16>
    %cst_25 = arith.constant 0.000000e+00 : bf16
    %54 = vector.broadcast %cst_25 : bf16 to vector<18x1x128xbf16>
    %55 = vector.extract_strided_slice %53 {offsets = [0, 0, 0], sizes = [18, 15, 128], strides = [1, 1, 1]} : vector<18x16x128xbf16> to vector<18x15x128xbf16>
    %56 = tpu.concatenate %54, %55 in 1 : vector<18x1x128xbf16>, vector<18x15x128xbf16> -> vector<18x16x128xbf16>
    %57 = vector.extract_strided_slice %53 {offsets = [0, 1, 0], sizes = [18, 15, 128], strides = [1, 1, 1]} : vector<18x16x128xbf16> to vector<18x15x128xbf16>
    %58 = tpu.concatenate %57, %54 in 1 : vector<18x15x128xbf16>, vector<18x1x128xbf16> -> vector<18x16x128xbf16>
    %59 = tpu.concatenate %56, %53, %58 in 2 : vector<18x16x128xbf16>, vector<18x16x128xbf16>, vector<18x16x128xbf16> -> vector<18x16x384xbf16>
    %cst_26 = arith.constant 0.000000e+00 : f32
    %60 = vector.broadcast %cst_26 : f32 to vector<256x128xf32>
    %61 = vector.extract_strided_slice %59 {offsets = [0, 0, 0], sizes = [16, 16, 384], strides = [1, 1, 1]} : vector<18x16x384xbf16> to vector<16x16x384xbf16>
    %62 = vector.shape_cast %61 : vector<16x16x384xbf16> to vector<256x384xbf16>
    %c0_27 = arith.constant 0 : index
    %c0_28 = arith.constant 0 : index
    %c0_29 = arith.constant 0 : index
    %63 = vector.load %arg7[%c0_27, %c0_28, %c0_29] : memref<3x384x128xbf16, #tpu.memory_space<vmem>>, vector<1x384x128xbf16>
    %64 = vector.shape_cast %63 : vector<1x384x128xbf16> to vector<384x128xbf16>
    %cst_30 = arith.constant dense<0.000000e+00> : vector<256x128xf32>
    %65 = tpu.matmul %62, %64, %cst_30 {dimension_numbers = #tpu.dot_dimension_numbers<[1], [0], [0], [1], [0, 0, 1, 1], [], []>} : vector<256x384xbf16>, vector<384x128xbf16>, vector<256x128xf32> -> vector<256x128xf32>
    %66 = arith.addf %60, %65 : vector<256x128xf32>
    %67 = vector.extract_strided_slice %59 {offsets = [1, 0, 0], sizes = [16, 16, 384], strides = [1, 1, 1]} : vector<18x16x384xbf16> to vector<16x16x384xbf16>
    %68 = vector.shape_cast %67 : vector<16x16x384xbf16> to vector<256x384xbf16>
    %c1_31 = arith.constant 1 : index
    %c0_32 = arith.constant 0 : index
    %c0_33 = arith.constant 0 : index
    %69 = vector.load %arg7[%c1_31, %c0_32, %c0_33] : memref<3x384x128xbf16, #tpu.memory_space<vmem>>, vector<1x384x128xbf16>
    %70 = vector.shape_cast %69 : vector<1x384x128xbf16> to vector<384x128xbf16>
    %cst_34 = arith.constant dense<0.000000e+00> : vector<256x128xf32>
    %71 = tpu.matmul %68, %70, %cst_34 {dimension_numbers = #tpu.dot_dimension_numbers<[1], [0], [0], [1], [0, 0, 1, 1], [], []>} : vector<256x384xbf16>, vector<384x128xbf16>, vector<256x128xf32> -> vector<256x128xf32>
    %72 = arith.addf %66, %71 : vector<256x128xf32>
    %73 = vector.extract_strided_slice %59 {offsets = [2, 0, 0], sizes = [16, 16, 384], strides = [1, 1, 1]} : vector<18x16x384xbf16> to vector<16x16x384xbf16>
    %74 = vector.shape_cast %73 : vector<16x16x384xbf16> to vector<256x384xbf16>
    %c2_35 = arith.constant 2 : index
    %c0_36 = arith.constant 0 : index
    %c0_37 = arith.constant 0 : index
    %75 = vector.load %arg7[%c2_35, %c0_36, %c0_37] : memref<3x384x128xbf16, #tpu.memory_space<vmem>>, vector<1x384x128xbf16>
    %76 = vector.shape_cast %75 : vector<1x384x128xbf16> to vector<384x128xbf16>
    %cst_38 = arith.constant dense<0.000000e+00> : vector<256x128xf32>
    %77 = tpu.matmul %74, %76, %cst_38 {dimension_numbers = #tpu.dot_dimension_numbers<[1], [0], [0], [1], [0, 0, 1, 1], [], []>} : vector<256x384xbf16>, vector<384x128xbf16>, vector<256x128xf32> -> vector<256x128xf32>
    %78 = arith.addf %72, %77 : vector<256x128xf32>
    %c0_39 = arith.constant 0 : index
    %c0_40 = arith.constant 0 : index
    %79 = vector.load %arg8[%c0_39, %c0_40] : memref<1x128xf32, #tpu.memory_space<vmem>>, vector<1x128xf32>
    %80 = vector.broadcast %79 : vector<1x128xf32> to vector<256x128xf32>
    %81 = arith.mulf %78, %80 : vector<256x128xf32>
    %c0_41 = arith.constant 0 : index
    %c0_42 = arith.constant 0 : index
    %82 = vector.load %arg9[%c0_41, %c0_42] : memref<1x128xf32, #tpu.memory_space<vmem>>, vector<1x128xf32>
    %83 = vector.broadcast %82 : vector<1x128xf32> to vector<256x128xf32>
    %84 = arith.addf %81, %83 : vector<256x128xf32>
    %cst_43 = arith.constant 0.000000e+00 : f32
    %85 = vector.broadcast %cst_43 : f32 to vector<256x128xf32>
    %86 = arith.maximumf %84, %85 : vector<256x128xf32>
    %87 = vector.shape_cast %86 : vector<256x128xf32> to vector<1x16x16x128xf32>
    %88 = arith.truncf %87 : vector<1x16x16x128xf32> to vector<1x16x16x128xbf16>
    %c0_44 = arith.constant 0 : index
    %c0_45 = arith.constant 0 : index
    %c0_46 = arith.constant 0 : index
    %c0_47 = arith.constant 0 : index
    %89 = vector.load %arg10[%c0_44, %c0_45, %c0_46, %c0_47] : memref<1x16x16x128xbf16, #tpu.memory_space<vmem>>, vector<1x16x16x128xbf16>
    tpu.vector_store %arg10[%c0_44, %c0_45, %c0_46, %c0_47], %88 {strides = array<i32>} : memref<1x16x16x128xbf16, #tpu.memory_space<vmem>>, vector<1x16x16x128xbf16>,
    return
  }
  func.func @transform_0(%arg0: i32, %arg1: i32) -> (i32, i32, i32, i32) {
    %c0_i32 = arith.constant 0 : i32
    %c0_i32_0 = arith.constant 0 : i32
    %c0_i32_1 = arith.constant 0 : i32
    return %arg0, %arg1, %c0_i32, %c0_i32_0 : i32, i32, i32, i32
  }
  func.func @transform_1(%arg0: i32, %arg1: i32) -> (i32, i32, i32, i32) {
    %c1_i32 = arith.constant 1 : i32
    %0 = arith.addi %arg1, %c1_i32 : i32
    %c4_i32 = arith.constant 4 : i32
    %1 = arith.muli %0, %c4_i32 : i32
    %c0_i32 = arith.constant 0 : i32
    %c0_i32_0 = arith.constant 0 : i32
    %c0_i32_1 = arith.constant 0 : i32
    return %arg0, %1, %c0_i32, %c0_i32_0 : i32, i32, i32, i32
  }
  func.func @transform_2(%arg0: i32, %arg1: i32) -> (i32, i32, i32) {
    %c0_i32 = arith.constant 0 : i32
    %c0_i32_0 = arith.constant 0 : i32
    %c0_i32_1 = arith.constant 0 : i32
    %c0_i32_2 = arith.constant 0 : i32
    return %c0_i32, %c0_i32_0, %c0_i32_1 : i32, i32, i32
  }
  func.func @transform_3(%arg0: i32, %arg1: i32) -> (i32, i32) {
    %c0_i32 = arith.constant 0 : i32
    %c0_i32_0 = arith.constant 0 : i32
    %c0_i32_1 = arith.constant 0 : i32
    return %c0_i32, %c0_i32_0 : i32, i32
  }
  func.func @transform_4(%arg0: i32, %arg1: i32) -> (i32, i32) {
    %c0_i32 = arith.constant 0 : i32
    %c0_i32_0 = arith.constant 0 : i32
    %c0_i32_1 = arith.constant 0 : i32
    return %c0_i32, %c0_i32_0 : i32, i32
  }
  func.func @transform_5(%arg0: i32, %arg1: i32) -> (i32, i32, i32) {
    %c0_i32 = arith.constant 0 : i32
    %c0_i32_0 = arith.constant 0 : i32
    %c0_i32_1 = arith.constant 0 : i32
    %c0_i32_2 = arith.constant 0 : i32
    return %c0_i32, %c0_i32_0, %c0_i32_1 : i32, i32, i32
  }
  func.func @transform_6(%arg0: i32, %arg1: i32) -> (i32, i32) {
    %c0_i32 = arith.constant 0 : i32
    %c0_i32_0 = arith.constant 0 : i32
    %c0_i32_1 = arith.constant 0 : i32
    return %c0_i32, %c0_i32_0 : i32, i32
  }
  func.func @transform_7(%arg0: i32, %arg1: i32) -> (i32, i32) {
    %c0_i32 = arith.constant 0 : i32
    %c0_i32_0 = arith.constant 0 : i32
    %c0_i32_1 = arith.constant 0 : i32
    return %c0_i32, %c0_i32_0 : i32, i32
  }
  func.func @transform_8(%arg0: i32, %arg1: i32) -> (i32, i32, i32, i32) {
    %c0_i32 = arith.constant 0 : i32
    %c0_i32_0 = arith.constant 0 : i32
    %c0_i32_1 = arith.constant 0 : i32
    return %arg0, %arg1, %c0_i32, %c0_i32_0 : i32, i32, i32, i32
  }
}

</mosaic_0001>

<llo_original>
// kernel: tpu_custom_call.1
$region0: #{tpu_custom_call.1}
  #allocation0 [shape = 'u32[]', space=smem, size = 0x4, offset = 0x4, fixed_abs, tag = 'smem constant byte address 0x4 - core index']
  #allocation1 [shape = 'u32[144,128]{1,0:T(1,128)}', space=vmem, size = 0x12000, scoped, tag = 'internal scratch']
  %s0 = inlined_call_operand.vmem [shape: bf16[2,20,18,128], index: 0, kind: input, shape index: {}]
  %s1 = inlined_call_operand.vmem [shape: bf16[2,20,18,128], index: 1, kind: input, shape index: {}]
  %s2 = inlined_call_operand.vmem [shape: bf16[3,384,128], index: 2, kind: input, shape index: {}]
  %s3 = inlined_call_operand.vmem [shape: f32[1,128], index: 3, kind: input, shape index: {}]
  %s4 = inlined_call_operand.vmem [shape: f32[1,128], index: 4, kind: input, shape index: {}]
  %s5 = inlined_call_operand.vmem [shape: bf16[3,384,128], index: 5, kind: input, shape index: {}]
  %s6 = inlined_call_operand.vmem [shape: f32[1,128], index: 6, kind: input, shape index: {}]
  %s7 = inlined_call_operand.vmem [shape: f32[1,128], index: 7, kind: input, shape index: {}]
  %s8 = inlined_call_operand.hbm [shape: bf16[2,16,16,128], index: 8, kind: output, shape index: {}]
  %s9 = sld [smem:[#allocation0]]
  $region65: #{tpu_custom_call.1} parent=0
    _
  %s11 = ssub.s32 1, %s9
  %s12 = scalar_select 0, %s11, %s9
  $region1: #{tpu_custom_call.1} parent=0
    #allocation2 [shape = 'u8[131072]{0}', space=vmem, size = 0x20000, scoped, tag = 'output window, operand 0']
    #allocation3 [shape = 's32[2]{0}', space=sflag, size = 0x8, scoped, tag = 'scoped memory for tpu_custom_call.1']
    %13 = vsyncpa [#allocation3], 0
    %s14 = scalar_lea.sflag [#allocation3], 1
    %15 = vsyncpa %s14, 0
    loop: start=0, step=1, limit=4
    $region2: #{tpu_custom_call.1} parent=1 // loop_pre_header
      _
    $region3: #{tpu_custom_call.1} parent=1 // loop_header
      %s17 = sphi 0, %s21
      %p18 = scmp.ge.s32.totalorder %s17, 4
      %s24 = sphi 0, %s36
      %s25 = sphi 0, %s32
      %s26 = sphi 0, %s24
      %s27 = sphi 0, %s25
      %s28 = sphi 0, %s26
      %s29 = sphi 0, %s27
      %s41 = sphi 0, %s43
      %s44 = sphi 0, %s41
      %s45 = sphi 0, %s44
      %s61 = sphi 0, %s45
      %s73 = sphi 0, %s75
      %s76 = sphi 0, %s73
      %s77 = sphi 0, %s76
      %s93 = sphi 0, %s77
      %s97 = sphi 0, %s97
      %s99 = sphi 0, %s97
      %s100 = sphi 0, %s99
      %s114 = sphi 0, %s100
      %s118 = sphi 0, %s118
      %s120 = sphi 0, %s118
      %s121 = sphi 0, %s120
      %s135 = sphi 0, %s121
      %s139 = sphi 0, %s139
      %s141 = sphi 0, %s139
      %s142 = sphi 0, %s141
      %s156 = sphi 0, %s142
      %s160 = sphi 0, %s160
      %s162 = sphi 0, %s160
      %s163 = sphi 0, %s162
      %s177 = sphi 0, %s163
      %s181 = sphi 0, %s181
      %s183 = sphi 0, %s181
      %s184 = sphi 0, %s183
      %s198 = sphi 0, %s184
      %s202 = sphi 0, %s202
      %s204 = sphi 0, %s202
      %s205 = sphi 0, %s204
      %s219 = sphi 0, %s205
      %s227 = sphi 0, %s229
      %s230 = sphi 0, %s227
      %s231 = sphi 0, %s230
      %s247 = sphi 0, %s231
    $region4: #{tpu_custom_call.1} parent=1 // loop_header_branch
      %20 = sbr.rel (%p18) target = $region8
    $region5: #{tpu_custom_call.1} parent=1 // loop_body
      %s22 = ssub.s32 %s17, 1
      %s23 = ssub.s32 %s17, 2
      %s30 = sadd.s32 1, %s25
      %p31 = scmp.ge.s32.totalorder %s30, 1
      %s32 = scalar_select %p31, 0, %s30
      %s33 = sadd.s32 1, %s24
      %s34 = scalar_select %p31, %s33, %s24
      %p35 = scmp.ge.s32.totalorder %s34, 2
      %s36 = scalar_select %p35, 0, %s34
      %s37 = ssub.s32 %s24, %s36
      %s38 = ssub.s32 %s25, %s32
      %s39 = sor.u32 %s37, %s38
      %p40 = scmp.eq.s32.totalorder %s39, 0
      %s42 = sadd.s32 %s41, 1
      %s43 = scalar_select %p40, %s41, %s42
      %p46 = pneg %p40
      %p47 = scmp.eq.s32.totalorder %s17, 1
      %p48 = por %p46, %p47
      %p49 = scmp.ne.s32.totalorder %s41, %s44
      %p50 = scmp.eq.s32.totalorder %s17, 0
      %p51 = por %p49, %p50
      %p52 = scmp.ne.s32.totalorder %s41, %s44
      %p53 = scmp.eq.s32.totalorder %s22, 1
      %p54 = por %p52, %p53
      %p55 = scmp.ne.s32.totalorder %s44, %s45
      %p56 = scmp.eq.s32.totalorder %s22, 0
      %p57 = por %p55, %p56
      %p58 = scmp.ne.s32.totalorder %s44, %s45
      %p59 = scmp.eq.s32.totalorder %s23, 1
      %p60 = por %p58, %p59
      %p62 = scmp.ne.s32.totalorder %s45, %s61
      %p63 = scmp.eq.s32.totalorder %s23, 0
      %p64 = por %p62, %p63
      %s65 = sadd.s32 %s25, 1
      %s66 = smul.u32 %s65, 4
      %s67 = sadd.s32 %s32, 1
      %s68 = smul.u32 %s67, 4
      %s69 = ssub.s32 %s24, %s36
      %s70 = ssub.s32 %s66, %s68
      %s71 = sor.u32 %s69, %s70
      %p72 = scmp.eq.s32.totalorder %s71, 0
      %s74 = sadd.s32 %s73, 1
      %s75 = scalar_select %p72, %s73, %s74
      %p78 = pneg %p72
      %p79 = scmp.eq.s32.totalorder %s17, 1
      %p80 = por %p78, %p79
      %p81 = scmp.ne.s32.totalorder %s73, %s76
      %p82 = scmp.eq.s32.totalorder %s17, 0
      %p83 = por %p81, %p82
      %p84 = scmp.ne.s32.totalorder %s73, %s76
      %p85 = scmp.eq.s32.totalorder %s22, 1
      %p86 = por %p84, %p85
      %p87 = scmp.ne.s32.totalorder %s76, %s77
      %p88 = scmp.eq.s32.totalorder %s22, 0
      %p89 = por %p87, %p88
      %p90 = scmp.ne.s32.totalorder %s76, %s77
      %p91 = scmp.eq.s32.totalorder %s23, 1
      %p92 = por %p90, %p91
      %p94 = scmp.ne.s32.totalorder %s77, %s93
      %p95 = scmp.eq.s32.totalorder %s23, 0
      %p96 = por %p94, %p95
      %s98 = sadd.s32 %s97, 1
      %p101 = scmp.eq.s32.totalorder %s17, 1
      %p102 = scmp.ne.s32.totalorder %s97, %s99
      %p103 = scmp.eq.s32.totalorder %s17, 0
      %p104 = por %p102, %p103
      %p105 = scmp.ne.s32.totalorder %s97, %s99
      %p106 = scmp.eq.s32.totalorder %s22, 1
      %p107 = por %p105, %p106
      %p108 = scmp.ne.s32.totalorder %s99, %s100
      %p109 = scmp.eq.s32.totalorder %s22, 0
      %p110 = por %p108, %p109
      %p111 = scmp.ne.s32.totalorder %s99, %s100
      %p112 = scmp.eq.s32.totalorder %s23, 1
      %p113 = por %p111, %p112
      %p115 = scmp.ne.s32.totalorder %s100, %s114
      %p116 = scmp.eq.s32.totalorder %s23, 0
      %p117 = por %p115, %p116
      %s119 = sadd.s32 %s118, 1
      %p122 = scmp.eq.s32.totalorder %s17, 1
      %p123 = scmp.ne.s32.totalorder %s118, %s120
      %p124 = scmp.eq.s32.totalorder %s17, 0
      %p125 = por %p123, %p124
      %p126 = scmp.ne.s32.totalorder %s118, %s120
      %p127 = scmp.eq.s32.totalorder %s22, 1
      %p128 = por %p126, %p127
      %p129 = scmp.ne.s32.totalorder %s120, %s121
      %p130 = scmp.eq.s32.totalorder %s22, 0
      %p131 = por %p129, %p130
      %p132 = scmp.ne.s32.totalorder %s120, %s121
      %p133 = scmp.eq.s32.totalorder %s23, 1
      %p134 = por %p132, %p133
      %p136 = scmp.ne.s32.totalorder %s121, %s135
      %p137 = scmp.eq.s32.totalorder %s23, 0
      %p138 = por %p136, %p137
      %s140 = sadd.s32 %s139, 1
      %p143 = scmp.eq.s32.totalorder %s17, 1
      %p144 = scmp.ne.s32.totalorder %s139, %s141
      %p145 = scmp.eq.s32.totalorder %s17, 0
      %p146 = por %p144, %p145
      %p147 = scmp.ne.s32.totalorder %s139, %s141
      %p148 = scmp.eq.s32.totalorder %s22, 1
      %p149 = por %p147, %p148
      %p150 = scmp.ne.s32.totalorder %s141, %s142
      %p151 = scmp.eq.s32.totalorder %s22, 0
      %p152 = por %p150, %p151
      %p153 = scmp.ne.s32.totalorder %s141, %s142
      %p154 = scmp.eq.s32.totalorder %s23, 1
      %p155 = por %p153, %p154
      %p157 = scmp.ne.s32.totalorder %s142, %s156
      %p158 = scmp.eq.s32.totalorder %s23, 0
      %p159 = por %p157, %p158
      %s161 = sadd.s32 %s160, 1
      %p164 = scmp.eq.s32.totalorder %s17, 1
      %p165 = scmp.ne.s32.totalorder %s160, %s162
      %p166 = scmp.eq.s32.totalorder %s17, 0
      %p167 = por %p165, %p166
      %p168 = scmp.ne.s32.totalorder %s160, %s162
      %p169 = scmp.eq.s32.totalorder %s22, 1
      %p170 = por %p168, %p169
      %p171 = scmp.ne.s32.totalorder %s162, %s163
      %p172 = scmp.eq.s32.totalorder %s22, 0
      %p173 = por %p171, %p172
      %p174 = scmp.ne.s32.totalorder %s162, %s163
      %p175 = scmp.eq.s32.totalorder %s23, 1
      %p176 = por %p174, %p175
      %p178 = scmp.ne.s32.totalorder %s163, %s177
      %p179 = scmp.eq.s32.totalorder %s23, 0
      %p180 = por %p178, %p179
      %s182 = sadd.s32 %s181, 1
      %p185 = scmp.eq.s32.totalorder %s17, 1
      %p186 = scmp.ne.s32.totalorder %s181, %s183
      %p187 = scmp.eq.s32.totalorder %s17, 0
      %p188 = por %p186, %p187
      %p189 = scmp.ne.s32.totalorder %s181, %s183
      %p190 = scmp.eq.s32.totalorder %s22, 1
      %p191 = por %p189, %p190
      %p192 = scmp.ne.s32.totalorder %s183, %s184
      %p193 = scmp.eq.s32.totalorder %s22, 0
      %p194 = por %p192, %p193
      %p195 = scmp.ne.s32.totalorder %s183, %s184
      %p196 = scmp.eq.s32.totalorder %s23, 1
      %p197 = por %p195, %p196
      %p199 = scmp.ne.s32.totalorder %s184, %s198
      %p200 = scmp.eq.s32.totalorder %s23, 0
      %p201 = por %p199, %p200
      %s203 = sadd.s32 %s202, 1
      %p206 = scmp.eq.s32.totalorder %s17, 1
      %p207 = scmp.ne.s32.totalorder %s202, %s204
      %p208 = scmp.eq.s32.totalorder %s17, 0
      %p209 = por %p207, %p208
      %p210 = scmp.ne.s32.totalorder %s202, %s204
      %p211 = scmp.eq.s32.totalorder %s22, 1
      %p212 = por %p210, %p211
      %p213 = scmp.ne.s32.totalorder %s204, %s205
      %p214 = scmp.eq.s32.totalorder %s22, 0
      %p215 = por %p213, %p214
      %p216 = scmp.ne.s32.totalorder %s204, %s205
      %p217 = scmp.eq.s32.totalorder %s23, 1
      %p218 = por %p216, %p217
      %p220 = scmp.ne.s32.totalorder %s205, %s219
      %p221 = scmp.eq.s32.totalorder %s23, 0
      %p222 = por %p220, %p221
      %s223 = ssub.s32 %s24, %s36
      %s224 = ssub.s32 %s25, %s32
      %s225 = sor.u32 %s223, %s224
      %p226 = scmp.eq.s32.totalorder %s225, 0
      %s228 = sadd.s32 %s227, 1
      %s229 = scalar_select %p226, %s227, %s228
      %p232 = pneg %p226
      %p233 = scmp.eq.s32.totalorder %s17, 1
      %p234 = por %p232, %p233
      %p235 = scmp.ne.s32.totalorder %s227, %s230
      %p236 = scmp.eq.s32.totalorder %s17, 0
      %p237 = por %p235, %p236
      %p238 = scmp.ne.s32.totalorder %s227, %s230
      %p239 = scmp.eq.s32.totalorder %s22, 1
      %p240 = por %p238, %p239
      %p241 = scmp.ne.s32.totalorder %s230, %s231
      %p242 = scmp.eq.s32.totalorder %s22, 0
      %p243 = por %p241, %p242
      %p244 = scmp.ne.s32.totalorder %s230, %s231
      %p245 = scmp.eq.s32.totalorder %s23, 1
      %p246 = por %p244, %p245
      %p248 = scmp.ne.s32.totalorder %s231, %s247
      %p249 = scmp.eq.s32.totalorder %s23, 0
      %p250 = por %p248, %p249
      %p251 = scmp.le.s32.totalorder 1, %s17
      %p252 = scmp.lt.s32.totalorder %s17, 3
      %p253 = pnand %p251, %p252
      %p254 = pneg %p253
      // Predicated region
      $region9: #{tpu_custom_call.1} parent=5 // pred_check
        _
      $region10: #{tpu_custom_call.1} parent=5 // pred_check_branch
        %256 = sbr.rel (%p253) target = $region12
      $region11: #{tpu_custom_call.1} parent=5 // pred_region
        %s257 = ssub.s32 %s17, 1
        // Predicated region
        $region13: #{tpu_custom_call.1} parent=11 // pred_check
          %p258 = pneg %p110
        $region14: #{tpu_custom_call.1} parent=11 // pred_check_branch
          %260 = sbr.rel (%p258) target = $region16
        $region15: #{tpu_custom_call.1} parent=11 // pred_region
          _
        $region16: #{tpu_custom_call.1} parent=11 // pred_fallthru
          _
        // Predicated region
        $region17: #{tpu_custom_call.1} parent=11 // pred_check
          %p261 = pneg %p131
        $region18: #{tpu_custom_call.1} parent=11 // pred_check_branch
          %263 = sbr.rel (%p261) target = $region20
        $region19: #{tpu_custom_call.1} parent=11 // pred_region
          _
        $region20: #{tpu_custom_call.1} parent=11 // pred_fallthru
          _
        // Predicated region
        $region21: #{tpu_custom_call.1} parent=11 // pred_check
          %p264 = pneg %p152
        $region22: #{tpu_custom_call.1} parent=11 // pred_check_branch
          %266 = sbr.rel (%p264) target = $region24
        $region23: #{tpu_custom_call.1} parent=11 // pred_region
          _
        $region24: #{tpu_custom_call.1} parent=11 // pred_fallthru
          _
        // Predicated region
        $region25: #{tpu_custom_call.1} parent=11 // pred_check
          %p267 = pneg %p173
        $region26: #{tpu_custom_call.1} parent=11 // pred_check_branch
          %269 = sbr.rel (%p267) target = $region28
        $region27: #{tpu_custom_call.1} parent=11 // pred_region
          _
        $region28: #{tpu_custom_call.1} parent=11 // pred_fallthru
          _
        // Predicated region
        $region29: #{tpu_custom_call.1} parent=11 // pred_check
          %p270 = pneg %p194
        $region30: #{tpu_custom_call.1} parent=11 // pred_check_branch
          %272 = sbr.rel (%p270) target = $region32
        $region31: #{tpu_custom_call.1} parent=11 // pred_region
          _
        $region32: #{tpu_custom_call.1} parent=11 // pred_fallthru
          _
        // Predicated region
        $region33: #{tpu_custom_call.1} parent=11 // pred_check
          %p273 = pneg %p215
        $region34: #{tpu_custom_call.1} parent=11 // pred_check_branch
          %275 = sbr.rel (%p273) target = $region36
        $region35: #{tpu_custom_call.1} parent=11 // pred_region
          _
        $region36: #{tpu_custom_call.1} parent=11 // pred_fallthru
          _
      $region12: #{tpu_custom_call.1} parent=5 // pred_fallthru
        _
      %p276 = scmp.lt.s32.totalorder %s17, 2
      // Predicated region
      $region37: #{tpu_custom_call.1} parent=5 // pred_check
        %p277 = pneg %p276
      $region38: #{tpu_custom_call.1} parent=5 // pred_check_branch
        %279 = sbr.rel (%p277) target = $region40
      $region39: #{tpu_custom_call.1} parent=5 // pred_region
        // Predicated region
        $region41: #{tpu_custom_call.1} parent=39 // pred_check
          %p280 = pneg %p51
        $region42: #{tpu_custom_call.1} parent=39 // pred_check_branch
          %282 = sbr.rel (%p280) target = $region44
        $region43: #{tpu_custom_call.1} parent=39 // pred_region
          %s283 = smul.u32 16, %s25
          %s284 = ssub.s32 20, %s283
          %p285 = scmp.lt.s32.totalorder %s284, 16
          %s286 = scalar_select %p285, %s284, 16
          %s287 = smul.u32 64, %s286
          %s288 = smul.u32 %s287, 3
          %p289 = scmp.lt.s32.totalorder %s24, 1
          %s290 = scalar_select %p289, %s24, 1
          %p291 = scmp.lt.s32.totalorder %s283, 19
          %s292 = scalar_select %p291, %s283, 19
          %s293 = smul.addr %s292, 3
          %s294 = smul.addr %s290, 60
          %s295 = sadd.s32 %s293, %s294
          %s296 = smul.addr %s295, 4
          %s297 = scalar_lea.vmem %s0, %s296
          %s298 = smul.u32 16, %s25
          %s299 = ssub.s32 20, %s298
          %p300 = scmp.lt.s32.totalorder %s299, 16
          %s301 = scalar_select %p300, %s299, 16
          %s302 = smul.u32 64, %s301
          %s303 = smul.u32 %s302, 3
        $region44: #{tpu_custom_call.1} parent=39 // pred_fallthru
          _
        // Predicated region
        $region45: #{tpu_custom_call.1} parent=39 // pred_check
          %p304 = pneg %p83
        $region46: #{tpu_custom_call.1} parent=39 // pred_check_branch
          %306 = sbr.rel (%p304) target = $region48
        $region47: #{tpu_custom_call.1} parent=39 // pred_region
          %s307 = sadd.s32 %s25, 1
          %s308 = smul.u32 %s307, 4
          %s309 = smul.u32 4, %s308
          %p310 = scmp.lt.s32.totalorder %s24, 1
          %s311 = scalar_select %p310, %s24, 1
          %p312 = scmp.lt.s32.totalorder %s309, 19
          %s313 = scalar_select %p312, %s309, 19
          %s314 = smul.addr %s313, 3
          %s315 = smul.addr %s311, 60
          %s316 = sadd.s32 %s314, %s315
          %s317 = smul.addr %s316, 4
          %s318 = scalar_lea.vmem %s1, %s317
          %s319 = sadd.s32 %s25, 1
          %s320 = smul.u32 %s319, 4
          %s321 = smul.u32 4, %s320
        $region48: #{tpu_custom_call.1} parent=39 // pred_fallthru
          _
      $region40: #{tpu_custom_call.1} parent=5 // pred_fallthru
        _
      %p322 = scmp.le.s32.totalorder 1, %s17
      %p323 = scmp.lt.s32.totalorder %s17, 3
      %p324 = pnand %p322, %p323
      %p325 = pneg %p324
      // Predicated region
      $region49: #{tpu_custom_call.1} parent=5 // pred_check
        _
      $region50: #{tpu_custom_call.1} parent=5 // pred_check_branch
        %327 = sbr.rel (%p324) target = $region52
      $region51: #{tpu_custom_call.1} parent=5 // pred_region
        %s328 = ssub.s32 %s17, 1
        %s329 = smul.u32 16, %s27
        %s330 = ssub.s32 20, %s329
        %p331 = scmp.lt.s32.totalorder %s330, 16
        %s332 = scalar_select %p331, %s330, 16
        %s333 = smul.u32 64, %s332
        %s334 = smul.u32 %s333, 3
        %p335 = scmp.lt.s32.totalorder %s26, 1
        %s336 = scalar_select %p335, %s26, 1
        %p337 = scmp.lt.s32.totalorder %s329, 19
        %s338 = scalar_select %p337, %s329, 19
        %s339 = smul.addr %s338, 3
        %s340 = smul.addr %s336, 60
        %s341 = sadd.s32 %s339, %s340
        %s342 = smul.addr %s341, 4
        %s343 = scalar_lea.vmem %s0, %s342
        %p344 = pneg %p57
        %p345 = pneg %p54
        %s346 = sadd.s32 %s27, 1
        %s347 = smul.u32 %s346, 4
        %s348 = smul.u32 4, %s347
        %p349 = scmp.lt.s32.totalorder %s26, 1
        %s350 = scalar_select %p349, %s26, 1
        %p351 = scmp.lt.s32.totalorder %s348, 19
        %s352 = scalar_select %p351, %s348, 19
        %s353 = smul.addr %s352, 3
        %s354 = smul.addr %s350, 60
        %s355 = sadd.s32 %s353, %s354
        %s356 = smul.addr %s355, 4
        %s357 = scalar_lea.vmem %s1, %s356
        %p358 = pneg %p89
        %p359 = pneg %p86
        %p360 = pneg %p110
        %p361 = pneg %p107
        %p362 = pneg %p131
        %p363 = pneg %p128
        %p364 = pneg %p152
        %p365 = pneg %p149
        %p366 = pneg %p173
        %p367 = pneg %p170
        %p368 = pneg %p194
        %p369 = pneg %p191
        %p370 = pneg %p215
        %p371 = pneg %p212
        %p372 = pneg %p243
        %p373 = pneg %p240
        %s374 = sand.u32 %s230, 1
        %s375 = scalar_lea.sflag [#allocation3], %s374
        %s376 = sand.u32 %s230, 1
        %s377 = smul.addr %s376, 128
        %s378 = scalar_lea.vmem [#allocation2], %s377
        %s379 = smul.u32 16, %s27
        %s380 = ssub.s32 20, %s379
        %p381 = scmp.lt.s32.totalorder %s380, 16
        %s382 = scalar_select %p381, %s380, 16
        %s383 = smul.u32 64, %s382
        %s384 = smul.u32 %s383, 3
        %p385 = scmp.lt.s32.totalorder %s26, 1
        %s386 = scalar_select %p385, %s26, 1
        %p387 = scmp.lt.s32.totalorder %s379, 19
        %s388 = scalar_select %p387, %s379, 19
        %s389 = smul.addr %s388, 3
        %s390 = smul.addr %s386, 60
        %s391 = sadd.s32 %s389, %s390
        %s392 = smul.addr %s391, 4
        %s393 = scalar_lea.vmem %s0, %s392
        %s394 = smul.u32 16, %s27
        %s395 = ssub.s32 20, %s394
        %p396 = scmp.lt.s32.totalorder %s395, 16
        %s397 = scalar_select %p396, %s395, 16
        %s398 = smul.u32 64, %s397
        %s399 = smul.u32 %s398, 3
        %s400 = sadd.s32 %s27, 1
        %s401 = smul.u32 %s400, 4
        %s402 = smul.u32 4, %s401
        %p403 = scmp.lt.s32.totalorder %s26, 1
        %s404 = scalar_select %p403, %s26, 1
        %p405 = scmp.lt.s32.totalorder %s402, 19
        %s406 = scalar_select %p405, %s402, 19
        %s407 = smul.addr %s406, 3
        %s408 = smul.addr %s404, 60
        %s409 = sadd.s32 %s407, %s408
        %s410 = smul.addr %s409, 4
        %s411 = scalar_lea.vmem %s1, %s410
        %s412 = sadd.s32 %s27, 1
        %s413 = smul.u32 %s412, 4
        %s414 = smul.u32 4, %s413
        %s415 = smul.u32 16, %s27
        %v417 = vld [vmem:[%s393] sm:$0xf]
        %v418 = vld [vmem:[%s393 + $0x4] sm:$0xf]
        %v419 = vld [vmem:[%s393 + $0x8] sm:$0x1]
        %v420 = vld [vmem:[%s393 + $0xc] sm:$0xf]
        %v421 = vld [vmem:[%s393 + $0x10] sm:$0xf]
        %v422 = vld [vmem:[%s393 + $0x14] sm:$0x1]
        %v423 = vld [vmem:[%s393 + $0x18] sm:$0xf]
        %v424 = vld [vmem:[%s393 + $0x1c] sm:$0xf]
        %v425 = vld [vmem:[%s393 + $0x20] sm:$0x1]
        %v426 = vld [vmem:[%s393 + $0x24] sm:$0xf]
        %v427 = vld [vmem:[%s393 + $0x28] sm:$0xf]
        %v428 = vld [vmem:[%s393 + $0x2c] sm:$0x1]
        %v429 = vld [vmem:[%s393 + $0x30] sm:$0xf]
        %v430 = vld [vmem:[%s393 + $0x34] sm:$0xf]
        %v431 = vld [vmem:[%s393 + $0x38] sm:$0x1]
        %v432 = vld [vmem:[%s393 + $0x3c] sm:$0xf]
        %v433 = vld [vmem:[%s393 + $0x40] sm:$0xf]
        %v434 = vld [vmem:[%s393 + $0x44] sm:$0x1]
        %v435 = vld [vmem:[%s393 + $0x48] sm:$0xf]
        %v436 = vld [vmem:[%s393 + $0x4c] sm:$0xf]
        %v437 = vld [vmem:[%s393 + $0x50] sm:$0x1]
        %v438 = vld [vmem:[%s393 + $0x54] sm:$0xf]
        %v439 = vld [vmem:[%s393 + $0x58] sm:$0xf]
        %v440 = vld [vmem:[%s393 + $0x5c] sm:$0x1]
        %v441 = vld [vmem:[%s393 + $0x60] sm:$0xf]
        %v442 = vld [vmem:[%s393 + $0x64] sm:$0xf]
        %v443 = vld [vmem:[%s393 + $0x68] sm:$0x1]
        %v444 = vld [vmem:[%s393 + $0x6c] sm:$0xf]
        %v445 = vld [vmem:[%s393 + $0x70] sm:$0xf]
        %v446 = vld [vmem:[%s393 + $0x74] sm:$0x1]
        %v447 = vld [vmem:[%s393 + $0x78] sm:$0xf]
        %v448 = vld [vmem:[%s393 + $0x7c] sm:$0xf]
        %v449 = vld [vmem:[%s393 + $0x80] sm:$0x1]
        %v450 = vld [vmem:[%s393 + $0x84] sm:$0xf]
        %v451 = vld [vmem:[%s393 + $0x88] sm:$0xf]
        %v452 = vld [vmem:[%s393 + $0x8c] sm:$0x1]
        %v453 = vld [vmem:[%s393 + $0x90] sm:$0xf]
        %v454 = vld [vmem:[%s393 + $0x94] sm:$0xf]
        %v455 = vld [vmem:[%s393 + $0x98] sm:$0x1]
        %v456 = vld [vmem:[%s393 + $0x9c] sm:$0xf]
        %v457 = vld [vmem:[%s393 + $0xa0] sm:$0xf]
        %v458 = vld [vmem:[%s393 + $0xa4] sm:$0x1]
        %v459 = vld [vmem:[%s393 + $0xa8] sm:$0xf]
        %v460 = vld [vmem:[%s393 + $0xac] sm:$0xf]
        %v461 = vld [vmem:[%s393 + $0xb0] sm:$0x1]
        %v462 = vld [vmem:[%s393 + $0xb4] sm:$0xf]
        %v463 = vld [vmem:[%s393 + $0xb8] sm:$0xf]
        %v464 = vld [vmem:[%s393 + $0xbc] sm:$0x1]
        %v465 = vld [vmem:[%s411] sm:$0xf]
        %v466 = vld [vmem:[%s411 + $0x4] sm:$0xf]
        %v467 = vld [vmem:[%s411 + $0x8] sm:$0x1]
        %v468 = vld [vmem:[%s411 + $0xc] sm:$0xf]
        %v469 = vld [vmem:[%s411 + $0x10] sm:$0xf]
        %v470 = vld [vmem:[%s411 + $0x14] sm:$0x1]
        %v471 = vld [vmem:[%s411 + $0x18] sm:$0xf]
        %v472 = vld [vmem:[%s411 + $0x1c] sm:$0xf]
        %v473 = vld [vmem:[%s411 + $0x20] sm:$0x1]
        %v474 = vld [vmem:[%s411 + $0x24] sm:$0xf]
        %v475 = vld [vmem:[%s411 + $0x28] sm:$0xf]
        %v476 = vld [vmem:[%s411 + $0x2c] sm:$0x1]
        %v517 = vunpack.c.l.b16 %v417
        %v518 = vunpack.c.l.b16 %v418
        %v519 = vunpack.c.l.b16 %v420
        %v520 = vunpack.c.l.b16 %v421
        %v521 = vunpack.c.l.b16 %v423
        %v522 = vunpack.c.l.b16 %v424
        %v523 = vunpack.c.l.b16 %v426
        %v524 = vunpack.c.l.b16 %v427
        %v525 = vunpack.c.l.b16 %v429
        %v526 = vunpack.c.l.b16 %v430
        %v527 = vunpack.c.l.b16 %v432
        %v528 = vunpack.c.l.b16 %v433
        %v529 = vunpack.c.l.b16 %v435
        %v530 = vunpack.c.l.b16 %v436
        %v531 = vunpack.c.l.b16 %v438
        %v532 = vunpack.c.l.b16 %v439
        %v533 = vunpack.c.l.b16 %v441
        %v534 = vunpack.c.l.b16 %v442
        %v535 = vunpack.c.l.b16 %v444
        %v536 = vunpack.c.l.b16 %v445
        %v537 = vunpack.c.l.b16 %v447
        %v538 = vunpack.c.l.b16 %v448
        %v539 = vunpack.c.l.b16 %v450
        %v540 = vunpack.c.l.b16 %v451
        %v541 = vunpack.c.l.b16 %v453
        %v542 = vunpack.c.l.b16 %v454
        %v543 = vunpack.c.l.b16 %v456
        %v544 = vunpack.c.l.b16 %v457
        %v545 = vunpack.c.l.b16 %v459
        %v546 = vunpack.c.l.b16 %v460
        %v547 = vunpack.c.l.b16 %v462
        %v548 = vunpack.c.l.b16 %v463
        %v549 = vunpack.c.l.b16 %v465
        %v550 = vunpack.c.l.b16 %v466
        %v551 = vunpack.c.l.b16 %v468
        %v552 = vunpack.c.l.b16 %v469
        %v553 = vunpack.c.l.b16 %v471
        %v554 = vunpack.c.l.b16 %v472
        %v555 = vunpack.c.l.b16 %v474
        %v556 = vunpack.c.l.b16 %v475
        %v557 = vpack.c.b16 %v518, %v517
        %v558 = vpack.c.b16 %v520, %v519
        %v559 = vpack.c.b16 %v522, %v521
        %v560 = vpack.c.b16 %v524, %v523
        %v561 = vpack.c.b16 %v526, %v525
        %v562 = vpack.c.b16 %v528, %v527
        %v563 = vpack.c.b16 %v530, %v529
        %v564 = vpack.c.b16 %v532, %v531
        %v565 = vpack.c.b16 %v534, %v533
        %v566 = vpack.c.b16 %v536, %v535
        %v567 = vpack.c.b16 %v538, %v537
        %v568 = vpack.c.b16 %v540, %v539
        %v569 = vpack.c.b16 %v542, %v541
        %v570 = vpack.c.b16 %v544, %v543
        %v571 = vpack.c.b16 %v546, %v545
        %v572 = vpack.c.b16 %v548, %v547
        %v573 = vpack.c.b16 %v550, %v549
        %v574 = vpack.c.b16 %v552, %v551
        %v575 = vpack.c.b16 %v554, %v553
        %v576 = vpack.c.b16 %v556, %v555
        %v617 = vunpack.c.l.b16 %v419
        %v618 = vunpack.c.l.b16 %v422
        %v619 = vunpack.c.l.b16 %v425
        %v620 = vunpack.c.l.b16 %v428
        %v621 = vunpack.c.l.b16 %v431
        %v622 = vunpack.c.l.b16 %v434
        %v623 = vunpack.c.l.b16 %v437
        %v624 = vunpack.c.l.b16 %v440
        %v625 = vunpack.c.l.b16 %v443
        %v626 = vunpack.c.l.b16 %v446
        %v627 = vunpack.c.l.b16 %v449
        %v628 = vunpack.c.l.b16 %v452
        %v629 = vunpack.c.l.b16 %v455
        %v630 = vunpack.c.l.b16 %v458
        %v631 = vunpack.c.l.b16 %v461
        %v632 = vunpack.c.l.b16 %v464
        %v633 = vunpack.c.l.b16 %v467
        %v634 = vunpack.c.l.b16 %v470
        %v635 = vunpack.c.l.b16 %v473
        %v636 = vunpack.c.l.b16 %v476
        %v637 = vpack.c.b16 %v617, %v617
        %v638 = vpack.c.b16 %v618, %v618
        %v639 = vpack.c.b16 %v619, %v619
        %v640 = vpack.c.b16 %v620, %v620
        %v641 = vpack.c.b16 %v621, %v621
        %v642 = vpack.c.b16 %v622, %v622
        %v643 = vpack.c.b16 %v623, %v623
        %v644 = vpack.c.b16 %v624, %v624
        %v645 = vpack.c.b16 %v625, %v625
        %v646 = vpack.c.b16 %v626, %v626
        %v647 = vpack.c.b16 %v627, %v627
        %v648 = vpack.c.b16 %v628, %v628
        %v649 = vpack.c.b16 %v629, %v629
        %v650 = vpack.c.b16 %v630, %v630
        %v651 = vpack.c.b16 %v631, %v631
        %v652 = vpack.c.b16 %v632, %v632
        %v653 = vpack.c.b16 %v633, %v633
        %v654 = vpack.c.b16 %v634, %v634
        %v655 = vpack.c.b16 %v635, %v635
        %v656 = vpack.c.b16 %v636, %v636
        %vm657 = vsmask.f32 7424
        %v659 = vshrl.u32 %v557, 16
        %v661 = vshll.u32 %v557, 16
        %v663 = vrot.slane %v661, 1
        %v664 = vor.u32 %v659, %v663
        %v666 = vshll.u32 %v637, 16
        %v668 = vrot.slane %v666, 1
        %v669 = vsel %vm657, %v664, %v668
        %v671 = vshrl.u32 %v558, 16
        %v673 = vshll.u32 %v558, 16
        %v675 = vrot.slane %v673, 1
        %v676 = vor.u32 %v671, %v675
        %v678 = vshll.u32 %v638, 16
        %v680 = vrot.slane %v678, 1
        %v681 = vsel %vm657, %v676, %v680
        %v683 = vshrl.u32 %v559, 16
        %v685 = vshll.u32 %v559, 16
        %v687 = vrot.slane %v685, 1
        %v688 = vor.u32 %v683, %v687
        %v690 = vshll.u32 %v639, 16
        %v692 = vrot.slane %v690, 1
        %v693 = vsel %vm657, %v688, %v692
        %v695 = vshrl.u32 %v560, 16
        %v697 = vshll.u32 %v560, 16
        %v699 = vrot.slane %v697, 1
        %v700 = vor.u32 %v695, %v699
        %v702 = vshll.u32 %v640, 16
        %v704 = vrot.slane %v702, 1
        %v705 = vsel %vm657, %v700, %v704
        %v707 = vshrl.u32 %v561, 16
        %v709 = vshll.u32 %v561, 16
        %v711 = vrot.slane %v709, 1
        %v712 = vor.u32 %v707, %v711
        %v714 = vshll.u32 %v641, 16
        %v716 = vrot.slane %v714, 1
        %v717 = vsel %vm657, %v712, %v716
        %v719 = vshrl.u32 %v562, 16
        %v721 = vshll.u32 %v562, 16
        %v723 = vrot.slane %v721, 1
        %v724 = vor.u32 %v719, %v723
        %v726 = vshll.u32 %v642, 16
        %v728 = vrot.slane %v726, 1
        %v729 = vsel %vm657, %v724, %v728
        %v731 = vshrl.u32 %v563, 16
        %v733 = vshll.u32 %v563, 16
        %v735 = vrot.slane %v733, 1
        %v736 = vor.u32 %v731, %v735
        %v738 = vshll.u32 %v643, 16
        %v740 = vrot.slane %v738, 1
        %v741 = vsel %vm657, %v736, %v740
        %v743 = vshrl.u32 %v564, 16
        %v745 = vshll.u32 %v564, 16
        %v747 = vrot.slane %v745, 1
        %v748 = vor.u32 %v743, %v747
        %v750 = vshll.u32 %v644, 16
        %v752 = vrot.slane %v750, 1
        %v753 = vsel %vm657, %v748, %v752
        %v755 = vshrl.u32 %v565, 16
        %v757 = vshll.u32 %v565, 16
        %v759 = vrot.slane %v757, 1
        %v760 = vor.u32 %v755, %v759
        %v762 = vshll.u32 %v645, 16
        %v764 = vrot.slane %v762, 1
        %v765 = vsel %vm657, %v760, %v764
        %v767 = vshrl.u32 %v566, 16
        %v769 = vshll.u32 %v566, 16
        %v771 = vrot.slane %v769, 1
        %v772 = vor.u32 %v767, %v771
        %v774 = vshll.u32 %v646, 16
        %v776 = vrot.slane %v774, 1
        %v777 = vsel %vm657, %v772, %v776
        %v779 = vshrl.u32 %v567, 16
        %v781 = vshll.u32 %v567, 16
        %v783 = vrot.slane %v781, 1
        %v784 = vor.u32 %v779, %v783
        %v786 = vshll.u32 %v647, 16
        %v788 = vrot.slane %v786, 1
        %v789 = vsel %vm657, %v784, %v788
        %v791 = vshrl.u32 %v568, 16
        %v793 = vshll.u32 %v568, 16
        %v795 = vrot.slane %v793, 1
        %v796 = vor.u32 %v791, %v795
        %v798 = vshll.u32 %v648, 16
        %v800 = vrot.slane %v798, 1
        %v801 = vsel %vm657, %v796, %v800
        %v803 = vshrl.u32 %v569, 16
        %v805 = vshll.u32 %v569, 16
        %v807 = vrot.slane %v805, 1
        %v808 = vor.u32 %v803, %v807
        %v810 = vshll.u32 %v649, 16
        %v812 = vrot.slane %v810, 1
        %v813 = vsel %vm657, %v808, %v812
        %v815 = vshrl.u32 %v570, 16
        %v817 = vshll.u32 %v570, 16
        %v819 = vrot.slane %v817, 1
        %v820 = vor.u32 %v815, %v819
        %v822 = vshll.u32 %v650, 16
        %v824 = vrot.slane %v822, 1
        %v825 = vsel %vm657, %v820, %v824
        %v827 = vshrl.u32 %v571, 16
        %v829 = vshll.u32 %v571, 16
        %v831 = vrot.slane %v829, 1
        %v832 = vor.u32 %v827, %v831
        %v834 = vshll.u32 %v651, 16
        %v836 = vrot.slane %v834, 1
        %v837 = vsel %vm657, %v832, %v836
        %v839 = vshrl.u32 %v572, 16
        %v841 = vshll.u32 %v572, 16
        %v843 = vrot.slane %v841, 1
        %v844 = vor.u32 %v839, %v843
        %v846 = vshll.u32 %v652, 16
        %v848 = vrot.slane %v846, 1
        %v849 = vsel %vm657, %v844, %v848
        %v851 = vshrl.u32 %v573, 16
        %v853 = vshll.u32 %v573, 16
        %v855 = vrot.slane %v853, 1
        %v856 = vor.u32 %v851, %v855
        %v858 = vshll.u32 %v653, 16
        %v860 = vrot.slane %v858, 1
        %v861 = vsel %vm657, %v856, %v860
        %v863 = vshrl.u32 %v574, 16
        %v865 = vshll.u32 %v574, 16
        %v867 = vrot.slane %v865, 1
        %v868 = vor.u32 %v863, %v867
        %v870 = vshll.u32 %v654, 16
        %v872 = vrot.slane %v870, 1
        %v873 = vsel %vm657, %v868, %v872
        %v875 = vshrl.u32 %v575, 16
        %v877 = vshll.u32 %v575, 16
        %v879 = vrot.slane %v877, 1
        %v880 = vor.u32 %v875, %v879
        %v882 = vshll.u32 %v655, 16
        %v884 = vrot.slane %v882, 1
        %v885 = vsel %vm657, %v880, %v884
        %v887 = vshrl.u32 %v576, 16
        %v889 = vshll.u32 %v576, 16
        %v891 = vrot.slane %v889, 1
        %v892 = vor.u32 %v887, %v891
        %v894 = vshll.u32 %v656, 16
        %v896 = vrot.slane %v894, 1
        %v897 = vsel %vm657, %v892, %v896
        %vm918 = vcmask 1046528
        %v919 = vrot.slane %v557, 1
        %v920 = vrot.slane %v637, 1
        %v921 = vsel %vm918, %v919, %v920
        %v922 = vrot.slane %v558, 1
        %v923 = vrot.slane %v638, 1
        %v924 = vsel %vm918, %v922, %v923
        %v925 = vrot.slane %v559, 1
        %v926 = vrot.slane %v639, 1
        %v927 = vsel %vm918, %v925, %v926
        %v928 = vrot.slane %v560, 1
        %v929 = vrot.slane %v640, 1
        %v930 = vsel %vm918, %v928, %v929
        %v931 = vrot.slane %v561, 1
        %v932 = vrot.slane %v641, 1
        %v933 = vsel %vm918, %v931, %v932
        %v934 = vrot.slane %v562, 1
        %v935 = vrot.slane %v642, 1
        %v936 = vsel %vm918, %v934, %v935
        %v937 = vrot.slane %v563, 1
        %v938 = vrot.slane %v643, 1
        %v939 = vsel %vm918, %v937, %v938
        %v940 = vrot.slane %v564, 1
        %v941 = vrot.slane %v644, 1
        %v942 = vsel %vm918, %v940, %v941
        %v943 = vrot.slane %v565, 1
        %v944 = vrot.slane %v645, 1
        %v945 = vsel %vm918, %v943, %v944
        %v946 = vrot.slane %v566, 1
        %v947 = vrot.slane %v646, 1
        %v948 = vsel %vm918, %v946, %v947
        %v949 = vrot.slane %v567, 1
        %v950 = vrot.slane %v647, 1
        %v951 = vsel %vm918, %v949, %v950
        %v952 = vrot.slane %v568, 1
        %v953 = vrot.slane %v648, 1
        %v954 = vsel %vm918, %v952, %v953
        %v955 = vrot.slane %v569, 1
        %v956 = vrot.slane %v649, 1
        %v957 = vsel %vm918, %v955, %v956
        %v958 = vrot.slane %v570, 1
        %v959 = vrot.slane %v650, 1
        %v960 = vsel %vm918, %v958, %v959
        %v961 = vrot.slane %v571, 1
        %v962 = vrot.slane %v651, 1
        %v963 = vsel %vm918, %v961, %v962
        %v964 = vrot.slane %v572, 1
        %v965 = vrot.slane %v652, 1
        %v966 = vsel %vm918, %v964, %v965
        %v967 = vrot.slane %v573, 1
        %v968 = vrot.slane %v653, 1
        %v969 = vsel %vm918, %v967, %v968
        %v970 = vrot.slane %v574, 1
        %v971 = vrot.slane %v654, 1
        %v972 = vsel %vm918, %v970, %v971
        %v973 = vrot.slane %v575, 1
        %v974 = vrot.slane %v655, 1
        %v975 = vsel %vm918, %v973, %v974
        %v976 = vrot.slane %v576, 1
        %v977 = vrot.slane %v656, 1
        %v978 = vsel %vm918, %v976, %v977
        %v999 = vld [vmem:[%s2] sm:$0xf]
        %v1000 = vld [vmem:[%s2 + $0x4] sm:$0xf]
        %v1001 = vld [vmem:[%s2 + $0x8] sm:$0xf]
        %v1002 = vld [vmem:[%s2 + $0xc] sm:$0xf]
        %v1003 = vld [vmem:[%s2 + $0x10] sm:$0xf]
        %v1004 = vld [vmem:[%s2 + $0x14] sm:$0xf]
        %v1005 = vld [vmem:[%s2 + $0x18] sm:$0xf]
        %v1006 = vld [vmem:[%s2 + $0x1c] sm:$0xf]
        %v1007 = vld [vmem:[%s2 + $0x20] sm:$0xf]
        %v1008 = vld [vmem:[%s2 + $0x24] sm:$0xf]
        %v1009 = vld [vmem:[%s2 + $0x28] sm:$0xf]
        %v1010 = vld [vmem:[%s2 + $0x2c] sm:$0xf]
        %v1011 = vld [vmem:[%s2 + $0x30] sm:$0xf]
        %v1012 = vld [vmem:[%s2 + $0x34] sm:$0xf]
        %v1013 = vld [vmem:[%s2 + $0x38] sm:$0xf]
        %v1014 = vld [vmem:[%s2 + $0x3c] sm:$0xf]
        %v1015 = vld [vmem:[%s2 + $0x40] sm:$0xf]
        %v1016 = vld [vmem:[%s2 + $0x44] sm:$0xf]
        %v1017 = vld [vmem:[%s2 + $0x48] sm:$0xf]
        %v1018 = vld [vmem:[%s2 + $0x4c] sm:$0xf]
        %v1019 = vld [vmem:[%s2 + $0x50] sm:$0xf]
        %v1020 = vld [vmem:[%s2 + $0x54] sm:$0xf]
        %v1021 = vld [vmem:[%s2 + $0x58] sm:$0xf]
        %v1022 = vld [vmem:[%s2 + $0x5c] sm:$0xf]
        %v1023 = vld [vmem:[%s2 + $0x60] sm:$0xf]
        %v1024 = vld [vmem:[%s2 + $0x64] sm:$0xf]
        %v1025 = vld [vmem:[%s2 + $0x68] sm:$0xf]
        %v1026 = vld [vmem:[%s2 + $0x6c] sm:$0xf]
        %v1027 = vld [vmem:[%s2 + $0x70] sm:$0xf]
        %v1028 = vld [vmem:[%s2 + $0x74] sm:$0xf]
        %v1029 = vld [vmem:[%s2 + $0x78] sm:$0xf]
        %v1030 = vld [vmem:[%s2 + $0x7c] sm:$0xf]
        %v1031 = vld [vmem:[%s2 + $0x80] sm:$0xf]
        %v1032 = vld [vmem:[%s2 + $0x84] sm:$0xf]
        %v1033 = vld [vmem:[%s2 + $0x88] sm:$0xf]
        %v1034 = vld [vmem:[%s2 + $0x8c] sm:$0xf]
        %v1035 = vld [vmem:[%s2 + $0x90] sm:$0xf]
        %v1036 = vld [vmem:[%s2 + $0x94] sm:$0xf]
        %v1037 = vld [vmem:[%s2 + $0x98] sm:$0xf]
        %v1038 = vld [vmem:[%s2 + $0x9c] sm:$0xf]
        %v1039 = vld [vmem:[%s2 + $0xa0] sm:$0xf]
        %v1040 = vld [vmem:[%s2 + $0xa4] sm:$0xf]
        %v1041 = vld [vmem:[%s2 + $0xa8] sm:$0xf]
        %v1042 = vld [vmem:[%s2 + $0xac] sm:$0xf]
        %v1043 = vld [vmem:[%s2 + $0xb0] sm:$0xf]
        %v1044 = vld [vmem:[%s2 + $0xb4] sm:$0xf]
        %v1045 = vld [vmem:[%s2 + $0xb8] sm:$0xf]
        %v1046 = vld [vmem:[%s2 + $0xbc] sm:$0xf]
        %s1047 = scalar_lea.vmem %s2, 192
        %v1048 = vld [vmem:[%s1047] sm:$0xf]
        %v1049 = vld [vmem:[%s1047 + $0x4] sm:$0xf]
        %v1050 = vld [vmem:[%s1047 + $0x8] sm:$0xf]
        %v1051 = vld [vmem:[%s1047 + $0xc] sm:$0xf]
        %v1052 = vld [vmem:[%s1047 + $0x10] sm:$0xf]
        %v1053 = vld [vmem:[%s1047 + $0x14] sm:$0xf]
        %v1054 = vld [vmem:[%s1047 + $0x18] sm:$0xf]
        %v1055 = vld [vmem:[%s1047 + $0x1c] sm:$0xf]
        %v1056 = vld [vmem:[%s1047 + $0x20] sm:$0xf]
        %v1057 = vld [vmem:[%s1047 + $0x24] sm:$0xf]
        %v1058 = vld [vmem:[%s1047 + $0x28] sm:$0xf]
        %v1059 = vld [vmem:[%s1047 + $0x2c] sm:$0xf]
        %v1060 = vld [vmem:[%s1047 + $0x30] sm:$0xf]
        %v1061 = vld [vmem:[%s1047 + $0x34] sm:$0xf]
        %v1062 = vld [vmem:[%s1047 + $0x38] sm:$0xf]
        %v1063 = vld [vmem:[%s1047 + $0x3c] sm:$0xf]
        %v1064 = vld [vmem:[%s1047 + $0x40] sm:$0xf]
        %v1065 = vld [vmem:[%s1047 + $0x44] sm:$0xf]
        %v1066 = vld [vmem:[%s1047 + $0x48] sm:$0xf]
        %v1067 = vld [vmem:[%s1047 + $0x4c] sm:$0xf]
        %v1068 = vld [vmem:[%s1047 + $0x50] sm:$0xf]
        %v1069 = vld [vmem:[%s1047 + $0x54] sm:$0xf]
        %v1070 = vld [vmem:[%s1047 + $0x58] sm:$0xf]
        %v1071 = vld [vmem:[%s1047 + $0x5c] sm:$0xf]
        %v1072 = vld [vmem:[%s1047 + $0x60] sm:$0xf]
        %v1073 = vld [vmem:[%s1047 + $0x64] sm:$0xf]
        %v1074 = vld [vmem:[%s1047 + $0x68] sm:$0xf]
        %v1075 = vld [vmem:[%s1047 + $0x6c] sm:$0xf]
        %v1076 = vld [vmem:[%s1047 + $0x70] sm:$0xf]
        %v1077 = vld [vmem:[%s1047 + $0x74] sm:$0xf]
        %v1078 = vld [vmem:[%s1047 + $0x78] sm:$0xf]
        %v1079 = vld [vmem:[%s1047 + $0x7c] sm:$0xf]
        %v1080 = vld [vmem:[%s1047 + $0x80] sm:$0xf]
        %v1081 = vld [vmem:[%s1047 + $0x84] sm:$0xf]
        %v1082 = vld [vmem:[%s1047 + $0x88] sm:$0xf]
        %v1083 = vld [vmem:[%s1047 + $0x8c] sm:$0xf]
        %v1084 = vld [vmem:[%s1047 + $0x90] sm:$0xf]
        %v1085 = vld [vmem:[%s1047 + $0x94] sm:$0xf]
        %v1086 = vld [vmem:[%s1047 + $0x98] sm:$0xf]
        %v1087 = vld [vmem:[%s1047 + $0x9c] sm:$0xf]
        %v1088 = vld [vmem:[%s1047 + $0xa0] sm:$0xf]
        %v1089 = vld [vmem:[%s1047 + $0xa4] sm:$0xf]
        %v1090 = vld [vmem:[%s1047 + $0xa8] sm:$0xf]
        %v1091 = vld [vmem:[%s1047 + $0xac] sm:$0xf]
        %v1092 = vld [vmem:[%s1047 + $0xb0] sm:$0xf]
        %v1093 = vld [vmem:[%s1047 + $0xb4] sm:$0xf]
        %v1094 = vld [vmem:[%s1047 + $0xb8] sm:$0xf]
        %v1095 = vld [vmem:[%s1047 + $0xbc] sm:$0xf]
        %v1144 = vunpack.c.l.b16 %v1048
        %v1145 = vunpack.c.l.b16 %v1049
        %v1146 = vunpack.c.l.b16 %v1050
        %v1147 = vunpack.c.l.b16 %v1051
        %v1148 = vunpack.c.l.b16 %v1052
        %v1149 = vunpack.c.l.b16 %v1053
        %v1150 = vunpack.c.l.b16 %v1054
        %v1151 = vunpack.c.l.b16 %v1055
        %v1152 = vunpack.c.l.b16 %v1056
        %v1153 = vunpack.c.l.b16 %v1057
        %v1154 = vunpack.c.l.b16 %v1058
        %v1155 = vunpack.c.l.b16 %v1059
        %v1156 = vunpack.c.l.b16 %v1060
        %v1157 = vunpack.c.l.b16 %v1061
        %v1158 = vunpack.c.l.b16 %v1062
        %v1159 = vunpack.c.l.b16 %v1063
        %v1160 = vunpack.c.l.b16 %v1064
        %v1161 = vunpack.c.l.b16 %v1065
        %v1162 = vunpack.c.l.b16 %v1066
        %v1163 = vunpack.c.l.b16 %v1067
        %v1164 = vunpack.c.l.b16 %v1068
        %v1165 = vunpack.c.l.b16 %v1069
        %v1166 = vunpack.c.l.b16 %v1070
        %v1167 = vunpack.c.l.b16 %v1071
        %v1168 = vunpack.c.l.b16 %v1072
        %v1169 = vunpack.c.l.b16 %v1073
        %v1170 = vunpack.c.l.b16 %v1074
        %v1171 = vunpack.c.l.b16 %v1075
        %v1172 = vunpack.c.l.b16 %v1076
        %v1173 = vunpack.c.l.b16 %v1077
        %v1174 = vunpack.c.l.b16 %v1078
        %v1175 = vunpack.c.l.b16 %v1079
        %v1176 = vunpack.c.l.b16 %v1080
        %v1177 = vunpack.c.l.b16 %v1081
        %v1178 = vunpack.c.l.b16 %v1082
        %v1179 = vunpack.c.l.b16 %v1083
        %v1180 = vunpack.c.l.b16 %v1084
        %v1181 = vunpack.c.l.b16 %v1085
        %v1182 = vunpack.c.l.b16 %v1086
        %v1183 = vunpack.c.l.b16 %v1087
        %v1184 = vunpack.c.l.b16 %v1088
        %v1185 = vunpack.c.l.b16 %v1089
        %v1186 = vunpack.c.l.b16 %v1090
        %v1187 = vunpack.c.l.b16 %v1091
        %v1188 = vunpack.c.l.b16 %v1092
        %v1189 = vunpack.c.l.b16 %v1093
        %v1190 = vunpack.c.l.b16 %v1094
        %v1191 = vunpack.c.l.b16 %v1095
        %v1192 = vpack.c.b16 %v1145, %v1144
        %v1193 = vpack.c.b16 %v1147, %v1146
        %v1194 = vpack.c.b16 %v1149, %v1148
        %v1195 = vpack.c.b16 %v1151, %v1150
        %v1196 = vpack.c.b16 %v1153, %v1152
        %v1197 = vpack.c.b16 %v1155, %v1154
        %v1198 = vpack.c.b16 %v1157, %v1156
        %v1199 = vpack.c.b16 %v1159, %v1158
        %v1200 = vpack.c.b16 %v1161, %v1160
        %v1201 = vpack.c.b16 %v1163, %v1162
        %v1202 = vpack.c.b16 %v1165, %v1164
        %v1203 = vpack.c.b16 %v1167, %v1166
        %v1204 = vpack.c.b16 %v1169, %v1168
        %v1205 = vpack.c.b16 %v1171, %v1170
        %v1206 = vpack.c.b16 %v1173, %v1172
        %v1207 = vpack.c.b16 %v1175, %v1174
        %v1208 = vpack.c.b16 %v1177, %v1176
        %v1209 = vpack.c.b16 %v1179, %v1178
        %v1210 = vpack.c.b16 %v1181, %v1180
        %v1211 = vpack.c.b16 %v1183, %v1182
        %v1212 = vpack.c.b16 %v1185, %v1184
        %v1213 = vpack.c.b16 %v1187, %v1186
        %v1214 = vpack.c.b16 %v1189, %v1188
        %v1215 = vpack.c.b16 %v1191, %v1190
        %1240 = vmatprep.subr.bf16.mxu0 0
        %1241 = vmatpush1.bf16.msra.mxu0 %v1199
        %1242 = vmatprep.subr.bf16.mxu0 0
        %1243 = vmatpush1.bf16.msra.mxu0 %v1198
        %1244 = vmatprep.subr.bf16.mxu0 0
        %1245 = vmatpush1.bf16.msra.mxu0 %v1197
        %1246 = vmatprep.subr.bf16.mxu0 0
        %1247 = vmatpush1.bf16.msra.mxu0 %v1196
        %1248 = vmatprep.subr.bf16.mxu0 0
        %1249 = vmatpush1.bf16.msra.mxu0 %v1195
        %1250 = vmatprep.subr.bf16.mxu0 0
        %1251 = vmatpush1.bf16.msra.mxu0 %v1194
        %1252 = vmatprep.subr.bf16.mxu0 0
        %1253 = vmatpush1.bf16.msra.mxu0 %v1193
        %1254 = vmatprep.subr.bf16.mxu0 0
        %1255 = vmatpush1.bf16.msra.mxu0 %v1192
        %1256 = vmatprep.subr.bf16.mxu0 0
        %1257 = vmatpush2.bf16.msra.mxu0 %v1207
        %1258 = vmatprep.subr.bf16.mxu0 0
        %1259 = vmatpush2.bf16.msra.mxu0 %v1206
        %1260 = vmatprep.subr.bf16.mxu0 0
        %1261 = vmatpush2.bf16.msra.mxu0 %v1205
        %1262 = vmatprep.subr.bf16.mxu0 0
        %1263 = vmatpush2.bf16.msra.mxu0 %v1204
        %1264 = vmatprep.subr.bf16.mxu0 0
        %1265 = vmatpush2.bf16.msra.mxu0 %v1203
        %1266 = vmatprep.subr.bf16.mxu0 0
        %1267 = vmatpush2.bf16.msra.mxu0 %v1202
        %1268 = vmatprep.subr.bf16.mxu0 0
        %1269 = vmatpush2.bf16.msra.mxu0 %v1201
        %1270 = vmatprep.subr.bf16.mxu0 0
        %1271 = vmatpush2.bf16.msra.mxu0 %v1200
        %1272 = vmatprep.mubr.bf16.mxu0 %v681
        %1273 = vmatmul.mubr.bf16.gmra.mxu0 %v558
        %v1274 = vpop.f32.mrf.mxu0
        %v1275 = vadd.f32 0.0, %v1274
        %v1276 = vpop.f32.mrf.mxu0
        %v1277 = vpop.f32.mrf.mxu0
        %v1278 = vadd.f32 0.0, %v1277
        %v1279 = vpop.f32.mrf.mxu0
        %1280 = vmatprep.mubr.bf16.mxu0 %v693
        %1281 = vmatmul.mubr.bf16.gmra.mxu0 %v559
        %v1282 = vpop.f32.mrf.mxu0
        %v1283 = vadd.f32 0.0, %v1282
        %v1284 = vpop.f32.mrf.mxu0
        %v1285 = vpop.f32.mrf.mxu0
        %v1286 = vadd.f32 0.0, %v1285
        %v1287 = vpop.f32.mrf.mxu0
        %1288 = vmatprep.mubr.bf16.mxu0 %v705
        %1289 = vmatmul.mubr.bf16.gmra.mxu0 %v560
        %v1290 = vpop.f32.mrf.mxu0
        %v1291 = vadd.f32 0.0, %v1290
        %v1292 = vpop.f32.mrf.mxu0
        %v1293 = vpop.f32.mrf.mxu0
        %v1294 = vadd.f32 0.0, %v1293
        %v1295 = vpop.f32.mrf.mxu0
        %1296 = vmatprep.mubr.bf16.mxu0 %v717
        %1297 = vmatmul.mubr.bf16.gmra.mxu0 %v561
        %v1298 = vpop.f32.mrf.mxu0
        %v1299 = vadd.f32 0.0, %v1298
        %v1300 = vpop.f32.mrf.mxu0
        %v1301 = vpop.f32.mrf.mxu0
        %v1302 = vadd.f32 0.0, %v1301
        %v1303 = vpop.f32.mrf.mxu0
        %1304 = vmatprep.mubr.bf16.mxu0 %v729
        %1305 = vmatmul.mubr.bf16.gmra.mxu0 %v562
        %v1306 = vpop.f32.mrf.mxu0
        %v1307 = vadd.f32 0.0, %v1306
        %v1308 = vpop.f32.mrf.mxu0
        %v1309 = vpop.f32.mrf.mxu0
        %v1310 = vadd.f32 0.0, %v1309
        %v1311 = vpop.f32.mrf.mxu0
        %1312 = vmatprep.mubr.bf16.mxu0 %v741
        %1313 = vmatmul.mubr.bf16.gmra.mxu0 %v563
        %v1314 = vpop.f32.mrf.mxu0
        %v1315 = vadd.f32 0.0, %v1314
        %v1316 = vpop.f32.mrf.mxu0
        %v1317 = vpop.f32.mrf.mxu0
        %v1318 = vadd.f32 0.0, %v1317
        %v1319 = vpop.f32.mrf.mxu0
        %1320 = vmatprep.mubr.bf16.mxu0 %v753
        %1321 = vmatmul.mubr.bf16.gmra.mxu0 %v564
        %v1322 = vpop.f32.mrf.mxu0
        %v1323 = vadd.f32 0.0, %v1322
        %v1324 = vpop.f32.mrf.mxu0
        %v1325 = vpop.f32.mrf.mxu0
        %v1326 = vadd.f32 0.0, %v1325
        %v1327 = vpop.f32.mrf.mxu0
        %1328 = vmatprep.mubr.bf16.mxu0 %v765
        %1329 = vmatmul.mubr.bf16.gmra.mxu0 %v565
        %v1330 = vpop.f32.mrf.mxu0
        %v1331 = vadd.f32 0.0, %v1330
        %v1332 = vpop.f32.mrf.mxu0
        %v1333 = vpop.f32.mrf.mxu0
        %v1334 = vadd.f32 0.0, %v1333
        %v1335 = vpop.f32.mrf.mxu0
        %1336 = vmatprep.mubr.bf16.mxu0 %v777
        %1337 = vmatmul.mubr.bf16.gmra.mxu0 %v566
        %v1338 = vpop.f32.mrf.mxu0
        %v1339 = vadd.f32 0.0, %v1338
        %v1340 = vpop.f32.mrf.mxu0
        %v1341 = vpop.f32.mrf.mxu0
        %v1342 = vadd.f32 0.0, %v1341
        %v1343 = vpop.f32.mrf.mxu0
        %1344 = vmatprep.mubr.bf16.mxu0 %v789
        %1345 = vmatmul.mubr.bf16.gmra.mxu0 %v567
        %v1346 = vpop.f32.mrf.mxu0
        %v1347 = vadd.f32 0.0, %v1346
        %v1348 = vpop.f32.mrf.mxu0
        %v1349 = vpop.f32.mrf.mxu0
        %v1350 = vadd.f32 0.0, %v1349
        %v1351 = vpop.f32.mrf.mxu0
        %1352 = vmatprep.mubr.bf16.mxu0 %v801
        %1353 = vmatmul.mubr.bf16.gmra.mxu0 %v568
        %v1354 = vpop.f32.mrf.mxu0
        %v1355 = vadd.f32 0.0, %v1354
        %v1356 = vpop.f32.mrf.mxu0
        %v1357 = vpop.f32.mrf.mxu0
        %v1358 = vadd.f32 0.0, %v1357
        %v1359 = vpop.f32.mrf.mxu0
        %1360 = vmatprep.mubr.bf16.mxu0 %v813
        %1361 = vmatmul.mubr.bf16.gmra.mxu0 %v569
        %v1362 = vpop.f32.mrf.mxu0
        %v1363 = vadd.f32 0.0, %v1362
        %v1364 = vpop.f32.mrf.mxu0
        %v1365 = vpop.f32.mrf.mxu0
        %v1366 = vadd.f32 0.0, %v1365
        %v1367 = vpop.f32.mrf.mxu0
        %1368 = vmatprep.mubr.bf16.mxu0 %v825
        %1369 = vmatmul.mubr.bf16.gmra.mxu0 %v570
        %v1370 = vpop.f32.mrf.mxu0
        %v1371 = vadd.f32 0.0, %v1370
        %v1372 = vpop.f32.mrf.mxu0
        %v1373 = vpop.f32.mrf.mxu0
        %v1374 = vadd.f32 0.0, %v1373
        %v1375 = vpop.f32.mrf.mxu0
        %1376 = vmatprep.mubr.bf16.mxu0 %v837
        %1377 = vmatmul.mubr.bf16.gmra.mxu0 %v571
        %v1378 = vpop.f32.mrf.mxu0
        %v1379 = vadd.f32 0.0, %v1378
        %v1380 = vpop.f32.mrf.mxu0
        %v1381 = vpop.f32.mrf.mxu0
        %v1382 = vadd.f32 0.0, %v1381
        %v1383 = vpop.f32.mrf.mxu0
        %1384 = vmatprep.mubr.bf16.mxu0 %v849
        %1385 = vmatmul.mubr.bf16.gmra.mxu0 %v572
        %v1386 = vpop.f32.mrf.mxu0
        %v1387 = vadd.f32 0.0, %v1386
        %v1388 = vpop.f32.mrf.mxu0
        %v1389 = vpop.f32.mrf.mxu0
        %v1390 = vadd.f32 0.0, %v1389
        %v1391 = vpop.f32.mrf.mxu0
        %1392 = vmatprep.mubr.bf16.mxu0 %v861
        %1393 = vmatmul.mubr.bf16.gmra.mxu0 %v573
        %v1394 = vpop.f32.mrf.mxu0
        %v1395 = vadd.f32 0.0, %v1394
        %v1396 = vpop.f32.mrf.mxu0
        %v1397 = vpop.f32.mrf.mxu0
        %v1398 = vadd.f32 0.0, %v1397
        %v1399 = vpop.f32.mrf.mxu0
        %1400 = vmatprep.mubr.bf16.mxu0 %v873
        %1401 = vmatmul.mubr.bf16.gmra.mxu0 %v574
        %v1402 = vpop.f32.mrf.mxu0
        %v1403 = vadd.f32 0.0, %v1402
        %v1404 = vpop.f32.mrf.mxu0
        %v1405 = vpop.f32.mrf.mxu0
        %v1406 = vadd.f32 0.0, %v1405
        %v1407 = vpop.f32.mrf.mxu0
        %1408 = vmatprep.mubr.bf16.mxu0 %v885
        %1409 = vmatmul.mubr.bf16.gmra.mxu0 %v575
        %v1410 = vpop.f32.mrf.mxu0
        %v1411 = vadd.f32 0.0, %v1410
        %v1412 = vpop.f32.mrf.mxu0
        %v1413 = vpop.f32.mrf.mxu0
        %v1414 = vadd.f32 0.0, %v1413
        %v1415 = vpop.f32.mrf.mxu0
        %1416 = vdwg.mxu0
        %1417 = vmatprep.subr.bf16.mxu0 0
        %1418 = vmatpush1.bf16.msra.mxu0 %v1215
        %1419 = vmatprep.subr.bf16.mxu0 0
        %1420 = vmatpush1.bf16.msra.mxu0 %v1214
        %1421 = vmatprep.subr.bf16.mxu0 0
        %1422 = vmatpush1.bf16.msra.mxu0 %v1213
        %1423 = vmatprep.subr.bf16.mxu0 0
        %1424 = vmatpush1.bf16.msra.mxu0 %v1212
        %1425 = vmatprep.subr.bf16.mxu0 0
        %1426 = vmatpush1.bf16.msra.mxu0 %v1211
        %1427 = vmatprep.subr.bf16.mxu0 0
        %1428 = vmatpush1.bf16.msra.mxu0 %v1210
        %1429 = vmatprep.subr.bf16.mxu0 0
        %1430 = vmatpush1.bf16.msra.mxu0 %v1209
        %1431 = vmatprep.subr.bf16.mxu0 0
        %1432 = vmatpush1.bf16.msra.mxu0 %v1208
        %1433 = vmatprep.subr.bf16.mxu0 0
        %1434 = vmatpush2.bf16.msra.mxu0 0
        %1435 = vmatprep.subr.bf16.mxu0 0
        %1436 = vmatpush2.bf16.msra.mxu0 0
        %1437 = vmatprep.subr.bf16.mxu0 0
        %1438 = vmatpush2.bf16.msra.mxu0 0
        %1439 = vmatprep.subr.bf16.mxu0 0
        %1440 = vmatpush2.bf16.msra.mxu0 0
        %1441 = vmatprep.subr.bf16.mxu0 0
        %1442 = vmatpush2.bf16.msra.mxu0 0
        %1443 = vmatprep.subr.bf16.mxu0 0
        %1444 = vmatpush2.bf16.msra.mxu0 0
        %1445 = vmatprep.subr.bf16.mxu0 0
        %1446 = vmatpush2.bf16.msra.mxu0 0
        %1447 = vmatprep.subr.bf16.mxu0 0
        %1448 = vmatpush2.bf16.msra.mxu0 0
        %1449 = vmatprep.mubr.bf16.mxu0 0
        %1450 = vmatmul.mubr.bf16.gmra.mxu0 %v924
        %v1451 = vpop.f32.mrf.mxu0
        %v1452 = vadd.f32 %v1275, %v1451
        %v1453 = vpop.f32.mrf.mxu0
        %v1454 = vpop.f32.mrf.mxu0
        %v1455 = vadd.f32 %v1278, %v1454
        %v1456 = vpop.f32.mrf.mxu0
        %1457 = vmatprep.mubr.bf16.mxu0 0
        %1458 = vmatmul.mubr.bf16.gmra.mxu0 %v927
        %v1459 = vpop.f32.mrf.mxu0
        %v1460 = vadd.f32 %v1283, %v1459
        %v1461 = vpop.f32.mrf.mxu0
        %v1462 = vpop.f32.mrf.mxu0
        %v1463 = vadd.f32 %v1286, %v1462
        %v1464 = vpop.f32.mrf.mxu0
        %1465 = vmatprep.mubr.bf16.mxu0 0
        %1466 = vmatmul.mubr.bf16.gmra.mxu0 %v930
        %v1467 = vpop.f32.mrf.mxu0
        %v1468 = vadd.f32 %v1291, %v1467
        %v1469 = vpop.f32.mrf.mxu0
        %v1470 = vpop.f32.mrf.mxu0
        %v1471 = vadd.f32 %v1294, %v1470
        %v1472 = vpop.f32.mrf.mxu0
        %1473 = vmatprep.mubr.bf16.mxu0 0
        %1474 = vmatmul.mubr.bf16.gmra.mxu0 %v933
        %v1475 = vpop.f32.mrf.mxu0
        %v1476 = vadd.f32 %v1299, %v1475
        %v1477 = vpop.f32.mrf.mxu0
        %v1478 = vpop.f32.mrf.mxu0
        %v1479 = vadd.f32 %v1302, %v1478
        %v1480 = vpop.f32.mrf.mxu0
        %1481 = vmatprep.mubr.bf16.mxu0 0
        %1482 = vmatmul.mubr.bf16.gmra.mxu0 %v936
        %v1483 = vpop.f32.mrf.mxu0
        %v1484 = vadd.f32 %v1307, %v1483
        %v1485 = vpop.f32.mrf.mxu0
        %v1486 = vpop.f32.mrf.mxu0
        %v1487 = vadd.f32 %v1310, %v1486
        %v1488 = vpop.f32.mrf.mxu0
        %1489 = vmatprep.mubr.bf16.mxu0 0
        %1490 = vmatmul.mubr.bf16.gmra.mxu0 %v939
        %v1491 = vpop.f32.mrf.mxu0
        %v1492 = vadd.f32 %v1315, %v1491
        %v1493 = vpop.f32.mrf.mxu0
        %v1494 = vpop.f32.mrf.mxu0
        %v1495 = vadd.f32 %v1318, %v1494
        %v1496 = vpop.f32.mrf.mxu0
        %1497 = vmatprep.mubr.bf16.mxu0 0
        %1498 = vmatmul.mubr.bf16.gmra.mxu0 %v942
        %v1499 = vpop.f32.mrf.mxu0
        %v1500 = vadd.f32 %v1323, %v1499
        %v1501 = vpop.f32.mrf.mxu0
        %v1502 = vpop.f32.mrf.mxu0
        %v1503 = vadd.f32 %v1326, %v1502
        %v1504 = vpop.f32.mrf.mxu0
        %1505 = vmatprep.mubr.bf16.mxu0 0
        %1506 = vmatmul.mubr.bf16.gmra.mxu0 %v945
        %v1507 = vpop.f32.mrf.mxu0
        %v1508 = vadd.f32 %v1331, %v1507
        %v1509 = vpop.f32.mrf.mxu0
        %v1510 = vpop.f32.mrf.mxu0
        %v1511 = vadd.f32 %v1334, %v1510
        %v1512 = vpop.f32.mrf.mxu0
        %1513 = vmatprep.mubr.bf16.mxu0 0
        %1514 = vmatmul.mubr.bf16.gmra.mxu0 %v948
        %v1515 = vpop.f32.mrf.mxu0
        %v1516 = vadd.f32 %v1339, %v1515
        %v1517 = vpop.f32.mrf.mxu0
        %v1518 = vpop.f32.mrf.mxu0
        %v1519 = vadd.f32 %v1342, %v1518
        %v1520 = vpop.f32.mrf.mxu0
        %1521 = vmatprep.mubr.bf16.mxu0 0
        %1522 = vmatmul.mubr.bf16.gmra.mxu0 %v951
        %v1523 = vpop.f32.mrf.mxu0
        %v1524 = vadd.f32 %v1347, %v1523
        %v1525 = vpop.f32.mrf.mxu0
        %v1526 = vpop.f32.mrf.mxu0
        %v1527 = vadd.f32 %v1350, %v1526
        %v1528 = vpop.f32.mrf.mxu0
        %1529 = vmatprep.mubr.bf16.mxu0 0
        %1530 = vmatmul.mubr.bf16.gmra.mxu0 %v954
        %v1531 = vpop.f32.mrf.mxu0
        %v1532 = vadd.f32 %v1355, %v1531
        %v1533 = vpop.f32.mrf.mxu0
        %v1534 = vpop.f32.mrf.mxu0
        %v1535 = vadd.f32 %v1358, %v1534
        %v1536 = vpop.f32.mrf.mxu0
        %1537 = vmatprep.mubr.bf16.mxu0 0
        %1538 = vmatmul.mubr.bf16.gmra.mxu0 %v957
        %v1539 = vpop.f32.mrf.mxu0
        %v1540 = vadd.f32 %v1363, %v1539
        %v1541 = vpop.f32.mrf.mxu0
        %v1542 = vpop.f32.mrf.mxu0
        %v1543 = vadd.f32 %v1366, %v1542
        %v1544 = vpop.f32.mrf.mxu0
        %1545 = vmatprep.mubr.bf16.mxu0 0
        %1546 = vmatmul.mubr.bf16.gmra.mxu0 %v960
        %v1547 = vpop.f32.mrf.mxu0
        %v1548 = vadd.f32 %v1371, %v1547
        %v1549 = vpop.f32.mrf.mxu0
        %v1550 = vpop.f32.mrf.mxu0
        %v1551 = vadd.f32 %v1374, %v1550
        %v1552 = vpop.f32.mrf.mxu0
        %1553 = vmatprep.mubr.bf16.mxu0 0
        %1554 = vmatmul.mubr.bf16.gmra.mxu0 %v963
        %v1555 = vpop.f32.mrf.mxu0
        %v1556 = vadd.f32 %v1379, %v1555
        %v1557 = vpop.f32.mrf.mxu0
        %v1558 = vpop.f32.mrf.mxu0
        %v1559 = vadd.f32 %v1382, %v1558
        %v1560 = vpop.f32.mrf.mxu0
        %1561 = vmatprep.mubr.bf16.mxu0 0
        %1562 = vmatmul.mubr.bf16.gmra.mxu0 %v966
        %v1563 = vpop.f32.mrf.mxu0
        %v1564 = vadd.f32 %v1387, %v1563
        %v1565 = vpop.f32.mrf.mxu0
        %v1566 = vpop.f32.mrf.mxu0
        %v1567 = vadd.f32 %v1390, %v1566
        %v1568 = vpop.f32.mrf.mxu0
        %1569 = vmatprep.mubr.bf16.mxu0 0
        %1570 = vmatmul.mubr.bf16.gmra.mxu0 %v969
        %v1571 = vpop.f32.mrf.mxu0
        %v1572 = vadd.f32 %v1395, %v1571
        %v1573 = vpop.f32.mrf.mxu0
        %v1574 = vpop.f32.mrf.mxu0
        %v1575 = vadd.f32 %v1398, %v1574
        %v1576 = vpop.f32.mrf.mxu0
        %1577 = vmatprep.mubr.bf16.mxu0 0
        %1578 = vmatmul.mubr.bf16.gmra.mxu0 %v972
        %v1579 = vpop.f32.mrf.mxu0
        %v1580 = vadd.f32 %v1403, %v1579
        %v1581 = vpop.f32.mrf.mxu0
        %v1582 = vpop.f32.mrf.mxu0
        %v1583 = vadd.f32 %v1406, %v1582
        %v1584 = vpop.f32.mrf.mxu0
        %1585 = vmatprep.mubr.bf16.mxu0 0
        %1586 = vmatmul.mubr.bf16.gmra.mxu0 %v975
        %v1587 = vpop.f32.mrf.mxu0
        %v1588 = vadd.f32 %v1411, %v1587
        %v1589 = vpop.f32.mrf.mxu0
        %v1590 = vpop.f32.mrf.mxu0
        %v1591 = vadd.f32 %v1414, %v1590
        %v1592 = vpop.f32.mrf.mxu0
        %1593 = vdwg.mxu0
        %v1642 = vunpack.c.l.b16 %v999
        %v1643 = vunpack.c.l.b16 %v1000
        %v1644 = vunpack.c.l.b16 %v1001
        %v1645 = vunpack.c.l.b16 %v1002
        %v1646 = vunpack.c.l.b16 %v1003
        %v1647 = vunpack.c.l.b16 %v1004
        %v1648 = vunpack.c.l.b16 %v1005
        %v1649 = vunpack.c.l.b16 %v1006
        %v1650 = vunpack.c.l.b16 %v1007
        %v1651 = vunpack.c.l.b16 %v1008
        %v1652 = vunpack.c.l.b16 %v1009
        %v1653 = vunpack.c.l.b16 %v1010
        %v1654 = vunpack.c.l.b16 %v1011
        %v1655 = vunpack.c.l.b16 %v1012
        %v1656 = vunpack.c.l.b16 %v1013
        %v1657 = vunpack.c.l.b16 %v1014
        %v1658 = vunpack.c.l.b16 %v1015
        %v1659 = vunpack.c.l.b16 %v1016
        %v1660 = vunpack.c.l.b16 %v1017
        %v1661 = vunpack.c.l.b16 %v1018
        %v1662 = vunpack.c.l.b16 %v1019
        %v1663 = vunpack.c.l.b16 %v1020
        %v1664 = vunpack.c.l.b16 %v1021
        %v1665 = vunpack.c.l.b16 %v1022
        %v1666 = vunpack.c.l.b16 %v1023
        %v1667 = vunpack.c.l.b16 %v1024
        %v1668 = vunpack.c.l.b16 %v1025
        %v1669 = vunpack.c.l.b16 %v1026
        %v1670 = vunpack.c.l.b16 %v1027
        %v1671 = vunpack.c.l.b16 %v1028
        %v1672 = vunpack.c.l.b16 %v1029
        %v1673 = vunpack.c.l.b16 %v1030
        %v1674 = vunpack.c.l.b16 %v1031
        %v1675 = vunpack.c.l.b16 %v1032
        %v1676 = vunpack.c.l.b16 %v1033
        %v1677 = vunpack.c.l.b16 %v1034
        %v1678 = vunpack.c.l.b16 %v1035
        %v1679 = vunpack.c.l.b16 %v1036
        %v1680 = vunpack.c.l.b16 %v1037
        %v1681 = vunpack.c.l.b16 %v1038
        %v1682 = vunpack.c.l.b16 %v1039
        %v1683 = vunpack.c.l.b16 %v1040
        %v1684 = vunpack.c.l.b16 %v1041
        %v1685 = vunpack.c.l.b16 %v1042
        %v1686 = vunpack.c.l.b16 %v1043
        %v1687 = vunpack.c.l.b16 %v1044
        %v1688 = vunpack.c.l.b16 %v1045
        %v1689 = vunpack.c.l.b16 %v1046
        %v1690 = vpack.c.b16 %v1643, %v1642
        %v1691 = vpack.c.b16 %v1645, %v1644
        %v1692 = vpack.c.b16 %v1647, %v1646
        %v1693 = vpack.c.b16 %v1649, %v1648
        %v1694 = vpack.c.b16 %v1651, %v1650
        %v1695 = vpack.c.b16 %v1653, %v1652
        %v1696 = vpack.c.b16 %v1655, %v1654
        %v1697 = vpack.c.b16 %v1657, %v1656
        %v1698 = vpack.c.b16 %v1659, %v1658
        %v1699 = vpack.c.b16 %v1661, %v1660
        %v1700 = vpack.c.b16 %v1663, %v1662
        %v1701 = vpack.c.b16 %v1665, %v1664
        %v1702 = vpack.c.b16 %v1667, %v1666
        %v1703 = vpack.c.b16 %v1669, %v1668
        %v1704 = vpack.c.b16 %v1671, %v1670
        %v1705 = vpack.c.b16 %v1673, %v1672
        %v1706 = vpack.c.b16 %v1675, %v1674
        %v1707 = vpack.c.b16 %v1677, %v1676
        %v1708 = vpack.c.b16 %v1679, %v1678
        %v1709 = vpack.c.b16 %v1681, %v1680
        %v1710 = vpack.c.b16 %v1683, %v1682
        %v1711 = vpack.c.b16 %v1685, %v1684
        %v1712 = vpack.c.b16 %v1687, %v1686
        %v1713 = vpack.c.b16 %v1689, %v1688
        %1738 = vmatprep.subr.bf16.mxu0 0
        %1739 = vmatpush1.bf16.msra.mxu0 %v1697
        %1740 = vmatprep.subr.bf16.mxu0 0
        %1741 = vmatpush1.bf16.msra.mxu0 %v1696
        %1742 = vmatprep.subr.bf16.mxu0 0
        %1743 = vmatpush1.bf16.msra.mxu0 %v1695
        %1744 = vmatprep.subr.bf16.mxu0 0
        %1745 = vmatpush1.bf16.msra.mxu0 %v1694
        %1746 = vmatprep.subr.bf16.mxu0 0
        %1747 = vmatpush1.bf16.msra.mxu0 %v1693
        %1748 = vmatprep.subr.bf16.mxu0 0
        %1749 = vmatpush1.bf16.msra.mxu0 %v1692
        %1750 = vmatprep.subr.bf16.mxu0 0
        %1751 = vmatpush1.bf16.msra.mxu0 %v1691
        %1752 = vmatprep.subr.bf16.mxu0 0
        %1753 = vmatpush1.bf16.msra.mxu0 %v1690
        %1754 = vmatprep.subr.bf16.mxu0 0
        %1755 = vmatpush2.bf16.msra.mxu0 %v1705
        %1756 = vmatprep.subr.bf16.mxu0 0
        %1757 = vmatpush2.bf16.msra.mxu0 %v1704
        %1758 = vmatprep.subr.bf16.mxu0 0
        %1759 = vmatpush2.bf16.msra.mxu0 %v1703
        %1760 = vmatprep.subr.bf16.mxu0 0
        %1761 = vmatpush2.bf16.msra.mxu0 %v1702
        %1762 = vmatprep.subr.bf16.mxu0 0
        %1763 = vmatpush2.bf16.msra.mxu0 %v1701
        %1764 = vmatprep.subr.bf16.mxu0 0
        %1765 = vmatpush2.bf16.msra.mxu0 %v1700
        %1766 = vmatprep.subr.bf16.mxu0 0
        %1767 = vmatpush2.bf16.msra.mxu0 %v1699
        %1768 = vmatprep.subr.bf16.mxu0 0
        %1769 = vmatpush2.bf16.msra.mxu0 %v1698
        %1770 = vmatprep.mubr.bf16.mxu0 %v669
        %1771 = vmatmul.mubr.bf16.gmra.mxu0 %v557
        %v1772 = vpop.f32.mrf.mxu0
        %v1773 = vadd.f32 %v1452, %v1772
        %v1774 = vpop.f32.mrf.mxu0
        %v1775 = vpop.f32.mrf.mxu0
        %v1776 = vadd.f32 %v1455, %v1775
        %v1777 = vpop.f32.mrf.mxu0
        %1778 = vmatprep.mubr.bf16.mxu0 %v681
        %1779 = vmatmul.mubr.bf16.gmra.mxu0 %v558
        %v1780 = vpop.f32.mrf.mxu0
        %v1781 = vadd.f32 %v1460, %v1780
        %v1782 = vpop.f32.mrf.mxu0
        %v1783 = vpop.f32.mrf.mxu0
        %v1784 = vadd.f32 %v1463, %v1783
        %v1785 = vpop.f32.mrf.mxu0
        %1786 = vmatprep.mubr.bf16.mxu0 %v693
        %1787 = vmatmul.mubr.bf16.gmra.mxu0 %v559
        %v1788 = vpop.f32.mrf.mxu0
        %v1789 = vadd.f32 %v1468, %v1788
        %v1790 = vpop.f32.mrf.mxu0
        %v1791 = vpop.f32.mrf.mxu0
        %v1792 = vadd.f32 %v1471, %v1791
        %v1793 = vpop.f32.mrf.mxu0
        %1794 = vmatprep.mubr.bf16.mxu0 %v705
        %1795 = vmatmul.mubr.bf16.gmra.mxu0 %v560
        %v1796 = vpop.f32.mrf.mxu0
        %v1797 = vadd.f32 %v1476, %v1796
        %v1798 = vpop.f32.mrf.mxu0
        %v1799 = vpop.f32.mrf.mxu0
        %v1800 = vadd.f32 %v1479, %v1799
        %v1801 = vpop.f32.mrf.mxu0
        %1802 = vmatprep.mubr.bf16.mxu0 %v717
        %1803 = vmatmul.mubr.bf16.gmra.mxu0 %v561
        %v1804 = vpop.f32.mrf.mxu0
        %v1805 = vadd.f32 %v1484, %v1804
        %v1806 = vpop.f32.mrf.mxu0
        %v1807 = vpop.f32.mrf.mxu0
        %v1808 = vadd.f32 %v1487, %v1807
        %v1809 = vpop.f32.mrf.mxu0
        %1810 = vmatprep.mubr.bf16.mxu0 %v729
        %1811 = vmatmul.mubr.bf16.gmra.mxu0 %v562
        %v1812 = vpop.f32.mrf.mxu0
        %v1813 = vadd.f32 %v1492, %v1812
        %v1814 = vpop.f32.mrf.mxu0
        %v1815 = vpop.f32.mrf.mxu0
        %v1816 = vadd.f32 %v1495, %v1815
        %v1817 = vpop.f32.mrf.mxu0
        %1818 = vmatprep.mubr.bf16.mxu0 %v741
        %1819 = vmatmul.mubr.bf16.gmra.mxu0 %v563
        %v1820 = vpop.f32.mrf.mxu0
        %v1821 = vadd.f32 %v1500, %v1820
        %v1822 = vpop.f32.mrf.mxu0
        %v1823 = vpop.f32.mrf.mxu0
        %v1824 = vadd.f32 %v1503, %v1823
        %v1825 = vpop.f32.mrf.mxu0
        %1826 = vmatprep.mubr.bf16.mxu0 %v753
        %1827 = vmatmul.mubr.bf16.gmra.mxu0 %v564
        %v1828 = vpop.f32.mrf.mxu0
        %v1829 = vadd.f32 %v1508, %v1828
        %v1830 = vpop.f32.mrf.mxu0
        %v1831 = vpop.f32.mrf.mxu0
        %v1832 = vadd.f32 %v1511, %v1831
        %v1833 = vpop.f32.mrf.mxu0
        %1834 = vmatprep.mubr.bf16.mxu0 %v765
        %1835 = vmatmul.mubr.bf16.gmra.mxu0 %v565
        %v1836 = vpop.f32.mrf.mxu0
        %v1837 = vadd.f32 %v1516, %v1836
        %v1838 = vpop.f32.mrf.mxu0
        %v1839 = vpop.f32.mrf.mxu0
        %v1840 = vadd.f32 %v1519, %v1839
        %v1841 = vpop.f32.mrf.mxu0
        %1842 = vmatprep.mubr.bf16.mxu0 %v777
        %1843 = vmatmul.mubr.bf16.gmra.mxu0 %v566
        %v1844 = vpop.f32.mrf.mxu0
        %v1845 = vadd.f32 %v1524, %v1844
        %v1846 = vpop.f32.mrf.mxu0
        %v1847 = vpop.f32.mrf.mxu0
        %v1848 = vadd.f32 %v1527, %v1847
        %v1849 = vpop.f32.mrf.mxu0
        %1850 = vmatprep.mubr.bf16.mxu0 %v789
        %1851 = vmatmul.mubr.bf16.gmra.mxu0 %v567
        %v1852 = vpop.f32.mrf.mxu0
        %v1853 = vadd.f32 %v1532, %v1852
        %v1854 = vpop.f32.mrf.mxu0
        %v1855 = vpop.f32.mrf.mxu0
        %v1856 = vadd.f32 %v1535, %v1855
        %v1857 = vpop.f32.mrf.mxu0
        %1858 = vmatprep.mubr.bf16.mxu0 %v801
        %1859 = vmatmul.mubr.bf16.gmra.mxu0 %v568
        %v1860 = vpop.f32.mrf.mxu0
        %v1861 = vadd.f32 %v1540, %v1860
        %v1862 = vpop.f32.mrf.mxu0
        %v1863 = vpop.f32.mrf.mxu0
        %v1864 = vadd.f32 %v1543, %v1863
        %v1865 = vpop.f32.mrf.mxu0
        %1866 = vmatprep.mubr.bf16.mxu0 %v813
        %1867 = vmatmul.mubr.bf16.gmra.mxu0 %v569
        %v1868 = vpop.f32.mrf.mxu0
        %v1869 = vadd.f32 %v1548, %v1868
        %v1870 = vpop.f32.mrf.mxu0
        %v1871 = vpop.f32.mrf.mxu0
        %v1872 = vadd.f32 %v1551, %v1871
        %v1873 = vpop.f32.mrf.mxu0
        %1874 = vmatprep.mubr.bf16.mxu0 %v825
        %1875 = vmatmul.mubr.bf16.gmra.mxu0 %v570
        %v1876 = vpop.f32.mrf.mxu0
        %v1877 = vadd.f32 %v1556, %v1876
        %v1878 = vpop.f32.mrf.mxu0
        %v1879 = vpop.f32.mrf.mxu0
        %v1880 = vadd.f32 %v1559, %v1879
        %v1881 = vpop.f32.mrf.mxu0
        %1882 = vmatprep.mubr.bf16.mxu0 %v837
        %1883 = vmatmul.mubr.bf16.gmra.mxu0 %v571
        %v1884 = vpop.f32.mrf.mxu0
        %v1885 = vadd.f32 %v1564, %v1884
        %v1886 = vpop.f32.mrf.mxu0
        %v1887 = vpop.f32.mrf.mxu0
        %v1888 = vadd.f32 %v1567, %v1887
        %v1889 = vpop.f32.mrf.mxu0
        %1890 = vmatprep.mubr.bf16.mxu0 %v849
        %1891 = vmatmul.mubr.bf16.gmra.mxu0 %v572
        %v1892 = vpop.f32.mrf.mxu0
        %v1893 = vadd.f32 %v1572, %v1892
        %v1894 = vpop.f32.mrf.mxu0
        %v1895 = vpop.f32.mrf.mxu0
        %v1896 = vadd.f32 %v1575, %v1895
        %v1897 = vpop.f32.mrf.mxu0
        %1898 = vmatprep.mubr.bf16.mxu0 %v861
        %1899 = vmatmul.mubr.bf16.gmra.mxu0 %v573
        %v1900 = vpop.f32.mrf.mxu0
        %v1901 = vadd.f32 %v1580, %v1900
        %v1902 = vpop.f32.mrf.mxu0
        %v1903 = vpop.f32.mrf.mxu0
        %v1904 = vadd.f32 %v1583, %v1903
        %v1905 = vpop.f32.mrf.mxu0
        %1906 = vmatprep.mubr.bf16.mxu0 %v873
        %1907 = vmatmul.mubr.bf16.gmra.mxu0 %v574
        %v1908 = vpop.f32.mrf.mxu0
        %v1909 = vadd.f32 %v1588, %v1908
        %v1910 = vpop.f32.mrf.mxu0
        %v1911 = vpop.f32.mrf.mxu0
        %v1912 = vadd.f32 %v1591, %v1911
        %v1913 = vpop.f32.mrf.mxu0
        %1914 = vdwg.mxu0
        %1915 = vmatprep.subr.bf16.mxu0 0
        %1916 = vmatpush1.bf16.msra.mxu0 %v1713
        %1917 = vmatprep.subr.bf16.mxu0 0
        %1918 = vmatpush1.bf16.msra.mxu0 %v1712
        %1919 = vmatprep.subr.bf16.mxu0 0
        %1920 = vmatpush1.bf16.msra.mxu0 %v1711
        %1921 = vmatprep.subr.bf16.mxu0 0
        %1922 = vmatpush1.bf16.msra.mxu0 %v1710
        %1923 = vmatprep.subr.bf16.mxu0 0
        %1924 = vmatpush1.bf16.msra.mxu0 %v1709
        %1925 = vmatprep.subr.bf16.mxu0 0
        %1926 = vmatpush1.bf16.msra.mxu0 %v1708
        %1927 = vmatprep.subr.bf16.mxu0 0
        %1928 = vmatpush1.bf16.msra.mxu0 %v1707
        %1929 = vmatprep.subr.bf16.mxu0 0
        %1930 = vmatpush1.bf16.msra.mxu0 %v1706
        %1931 = vmatprep.subr.bf16.mxu0 0
        %1932 = vmatpush2.bf16.msra.mxu0 0
        %1933 = vmatprep.subr.bf16.mxu0 0
        %1934 = vmatpush2.bf16.msra.mxu0 0
        %1935 = vmatprep.subr.bf16.mxu0 0
        %1936 = vmatpush2.bf16.msra.mxu0 0
        %1937 = vmatprep.subr.bf16.mxu0 0
        %1938 = vmatpush2.bf16.msra.mxu0 0
        %1939 = vmatprep.subr.bf16.mxu0 0
        %1940 = vmatpush2.bf16.msra.mxu0 0
        %1941 = vmatprep.subr.bf16.mxu0 0
        %1942 = vmatpush2.bf16.msra.mxu0 0
        %1943 = vmatprep.subr.bf16.mxu0 0
        %1944 = vmatpush2.bf16.msra.mxu0 0
        %1945 = vmatprep.subr.bf16.mxu0 0
        %1946 = vmatpush2.bf16.msra.mxu0 0
        %1947 = vmatprep.mubr.bf16.mxu0 0
        %1948 = vmatmul.mubr.bf16.gmra.mxu0 %v921
        %v1949 = vpop.f32.mrf.mxu0
        %v1950 = vadd.f32 %v1773, %v1949
        %v1951 = vpop.f32.mrf.mxu0
        %v1952 = vpop.f32.mrf.mxu0
        %v1953 = vadd.f32 %v1776, %v1952
        %v1954 = vpop.f32.mrf.mxu0
        %1955 = vmatprep.mubr.bf16.mxu0 0
        %1956 = vmatmul.mubr.bf16.gmra.mxu0 %v924
        %v1957 = vpop.f32.mrf.mxu0
        %v1958 = vadd.f32 %v1781, %v1957
        %v1959 = vpop.f32.mrf.mxu0
        %v1960 = vpop.f32.mrf.mxu0
        %v1961 = vadd.f32 %v1784, %v1960
        %v1962 = vpop.f32.mrf.mxu0
        %1963 = vmatprep.mubr.bf16.mxu0 0
        %1964 = vmatmul.mubr.bf16.gmra.mxu0 %v927
        %v1965 = vpop.f32.mrf.mxu0
        %v1966 = vadd.f32 %v1789, %v1965
        %v1967 = vpop.f32.mrf.mxu0
        %v1968 = vpop.f32.mrf.mxu0
        %v1969 = vadd.f32 %v1792, %v1968
        %v1970 = vpop.f32.mrf.mxu0
        %1971 = vmatprep.mubr.bf16.mxu0 0
        %1972 = vmatmul.mubr.bf16.gmra.mxu0 %v930
        %v1973 = vpop.f32.mrf.mxu0
        %v1974 = vadd.f32 %v1797, %v1973
        %v1975 = vpop.f32.mrf.mxu0
        %v1976 = vpop.f32.mrf.mxu0
        %v1977 = vadd.f32 %v1800, %v1976
        %v1978 = vpop.f32.mrf.mxu0
        %1979 = vmatprep.mubr.bf16.mxu0 0
        %1980 = vmatmul.mubr.bf16.gmra.mxu0 %v933
        %v1981 = vpop.f32.mrf.mxu0
        %v1982 = vadd.f32 %v1805, %v1981
        %v1983 = vpop.f32.mrf.mxu0
        %v1984 = vpop.f32.mrf.mxu0
        %v1985 = vadd.f32 %v1808, %v1984
        %v1986 = vpop.f32.mrf.mxu0
        %1987 = vmatprep.mubr.bf16.mxu0 0
        %1988 = vmatmul.mubr.bf16.gmra.mxu0 %v936
        %v1989 = vpop.f32.mrf.mxu0
        %v1990 = vadd.f32 %v1813, %v1989
        %v1991 = vpop.f32.mrf.mxu0
        %v1992 = vpop.f32.mrf.mxu0
        %v1993 = vadd.f32 %v1816, %v1992
        %v1994 = vpop.f32.mrf.mxu0
        %1995 = vmatprep.mubr.bf16.mxu0 0
        %1996 = vmatmul.mubr.bf16.gmra.mxu0 %v939
        %v1997 = vpop.f32.mrf.mxu0
        %v1998 = vadd.f32 %v1821, %v1997
        %v1999 = vpop.f32.mrf.mxu0
        %v2000 = vpop.f32.mrf.mxu0
        %v2001 = vadd.f32 %v1824, %v2000
        %v2002 = vpop.f32.mrf.mxu0
        %2003 = vmatprep.mubr.bf16.mxu0 0
        %2004 = vmatmul.mubr.bf16.gmra.mxu0 %v942
        %v2005 = vpop.f32.mrf.mxu0
        %v2006 = vadd.f32 %v1829, %v2005
        %v2007 = vpop.f32.mrf.mxu0
        %v2008 = vpop.f32.mrf.mxu0
        %v2009 = vadd.f32 %v1832, %v2008
        %v2010 = vpop.f32.mrf.mxu0
        %2011 = vmatprep.mubr.bf16.mxu0 0
        %2012 = vmatmul.mubr.bf16.gmra.mxu0 %v945
        %v2013 = vpop.f32.mrf.mxu0
        %v2014 = vadd.f32 %v1837, %v2013
        %v2015 = vpop.f32.mrf.mxu0
        %v2016 = vpop.f32.mrf.mxu0
        %v2017 = vadd.f32 %v1840, %v2016
        %v2018 = vpop.f32.mrf.mxu0
        %2019 = vmatprep.mubr.bf16.mxu0 0
        %2020 = vmatmul.mubr.bf16.gmra.mxu0 %v948
        %v2021 = vpop.f32.mrf.mxu0
        %v2022 = vadd.f32 %v1845, %v2021
        %v2023 = vpop.f32.mrf.mxu0
        %v2024 = vpop.f32.mrf.mxu0
        %v2025 = vadd.f32 %v1848, %v2024
        %v2026 = vpop.f32.mrf.mxu0
        %2027 = vmatprep.mubr.bf16.mxu0 0
        %2028 = vmatmul.mubr.bf16.gmra.mxu0 %v951
        %v2029 = vpop.f32.mrf.mxu0
        %v2030 = vadd.f32 %v1853, %v2029
        %v2031 = vpop.f32.mrf.mxu0
        %v2032 = vpop.f32.mrf.mxu0
        %v2033 = vadd.f32 %v1856, %v2032
        %v2034 = vpop.f32.mrf.mxu0
        %2035 = vmatprep.mubr.bf16.mxu0 0
        %2036 = vmatmul.mubr.bf16.gmra.mxu0 %v954
        %v2037 = vpop.f32.mrf.mxu0
        %v2038 = vadd.f32 %v1861, %v2037
        %v2039 = vpop.f32.mrf.mxu0
        %v2040 = vpop.f32.mrf.mxu0
        %v2041 = vadd.f32 %v1864, %v2040
        %v2042 = vpop.f32.mrf.mxu0
        %2043 = vmatprep.mubr.bf16.mxu0 0
        %2044 = vmatmul.mubr.bf16.gmra.mxu0 %v957
        %v2045 = vpop.f32.mrf.mxu0
        %v2046 = vadd.f32 %v1869, %v2045
        %v2047 = vpop.f32.mrf.mxu0
        %v2048 = vpop.f32.mrf.mxu0
        %v2049 = vadd.f32 %v1872, %v2048
        %v2050 = vpop.f32.mrf.mxu0
        %2051 = vmatprep.mubr.bf16.mxu0 0
        %2052 = vmatmul.mubr.bf16.gmra.mxu0 %v960
        %v2053 = vpop.f32.mrf.mxu0
        %v2054 = vadd.f32 %v1877, %v2053
        %v2055 = vpop.f32.mrf.mxu0
        %v2056 = vpop.f32.mrf.mxu0
        %v2057 = vadd.f32 %v1880, %v2056
        %v2058 = vpop.f32.mrf.mxu0
        %2059 = vmatprep.mubr.bf16.mxu0 0
        %2060 = vmatmul.mubr.bf16.gmra.mxu0 %v963
        %v2061 = vpop.f32.mrf.mxu0
        %v2062 = vadd.f32 %v1885, %v2061
        %v2063 = vpop.f32.mrf.mxu0
        %v2064 = vpop.f32.mrf.mxu0
        %v2065 = vadd.f32 %v1888, %v2064
        %v2066 = vpop.f32.mrf.mxu0
        %2067 = vmatprep.mubr.bf16.mxu0 0
        %2068 = vmatmul.mubr.bf16.gmra.mxu0 %v966
        %v2069 = vpop.f32.mrf.mxu0
        %v2070 = vadd.f32 %v1893, %v2069
        %v2071 = vpop.f32.mrf.mxu0
        %v2072 = vpop.f32.mrf.mxu0
        %v2073 = vadd.f32 %v1896, %v2072
        %v2074 = vpop.f32.mrf.mxu0
        %2075 = vmatprep.mubr.bf16.mxu0 0
        %2076 = vmatmul.mubr.bf16.gmra.mxu0 %v969
        %v2077 = vpop.f32.mrf.mxu0
        %v2078 = vadd.f32 %v1901, %v2077
        %v2079 = vpop.f32.mrf.mxu0
        %v2080 = vpop.f32.mrf.mxu0
        %v2081 = vadd.f32 %v1904, %v2080
        %v2082 = vpop.f32.mrf.mxu0
        %2083 = vmatprep.mubr.bf16.mxu0 0
        %2084 = vmatmul.mubr.bf16.gmra.mxu0 %v972
        %v2085 = vpop.f32.mrf.mxu0
        %v2086 = vadd.f32 %v1909, %v2085
        %v2087 = vpop.f32.mrf.mxu0
        %v2088 = vpop.f32.mrf.mxu0
        %v2089 = vadd.f32 %v1912, %v2088
        %v2090 = vpop.f32.mrf.mxu0
        %2091 = vdwg.mxu0
        %s2092 = scalar_lea.vmem %s2, 384
        %v2093 = vld [vmem:[%s2092] sm:$0xf]
        %v2094 = vld [vmem:[%s2092 + $0x4] sm:$0xf]
        %v2095 = vld [vmem:[%s2092 + $0x8] sm:$0xf]
        %v2096 = vld [vmem:[%s2092 + $0xc] sm:$0xf]
        %v2097 = vld [vmem:[%s2092 + $0x10] sm:$0xf]
        %v2098 = vld [vmem:[%s2092 + $0x14] sm:$0xf]
        %v2099 = vld [vmem:[%s2092 + $0x18] sm:$0xf]
        %v2100 = vld [vmem:[%s2092 + $0x1c] sm:$0xf]
        %v2101 = vld [vmem:[%s2092 + $0x20] sm:$0xf]
        %v2102 = vld [vmem:[%s2092 + $0x24] sm:$0xf]
        %v2103 = vld [vmem:[%s2092 + $0x28] sm:$0xf]
        %v2104 = vld [vmem:[%s2092 + $0x2c] sm:$0xf]
        %v2105 = vld [vmem:[%s2092 + $0x30] sm:$0xf]
        %v2106 = vld [vmem:[%s2092 + $0x34] sm:$0xf]
        %v2107 = vld [vmem:[%s2092 + $0x38] sm:$0xf]
        %v2108 = vld [vmem:[%s2092 + $0x3c] sm:$0xf]
        %v2109 = vld [vmem:[%s2092 + $0x40] sm:$0xf]
        %v2110 = vld [vmem:[%s2092 + $0x44] sm:$0xf]
        %v2111 = vld [vmem:[%s2092 + $0x48] sm:$0xf]
        %v2112 = vld [vmem:[%s2092 + $0x4c] sm:$0xf]
        %v2113 = vld [vmem:[%s2092 + $0x50] sm:$0xf]
        %v2114 = vld [vmem:[%s2092 + $0x54] sm:$0xf]
        %v2115 = vld [vmem:[%s2092 + $0x58] sm:$0xf]
        %v2116 = vld [vmem:[%s2092 + $0x5c] sm:$0xf]
        %v2117 = vld [vmem:[%s2092 + $0x60] sm:$0xf]
        %v2118 = vld [vmem:[%s2092 + $0x64] sm:$0xf]
        %v2119 = vld [vmem:[%s2092 + $0x68] sm:$0xf]
        %v2120 = vld [vmem:[%s2092 + $0x6c] sm:$0xf]
        %v2121 = vld [vmem:[%s2092 + $0x70] sm:$0xf]
        %v2122 = vld [vmem:[%s2092 + $0x74] sm:$0xf]
        %v2123 = vld [vmem:[%s2092 + $0x78] sm:$0xf]
        %v2124 = vld [vmem:[%s2092 + $0x7c] sm:$0xf]
        %v2125 = vld [vmem:[%s2092 + $0x80] sm:$0xf]
        %v2126 = vld [vmem:[%s2092 + $0x84] sm:$0xf]
        %v2127 = vld [vmem:[%s2092 + $0x88] sm:$0xf]
        %v2128 = vld [vmem:[%s2092 + $0x8c] sm:$0xf]
        %v2129 = vld [vmem:[%s2092 + $0x90] sm:$0xf]
        %v2130 = vld [vmem:[%s2092 + $0x94] sm:$0xf]
        %v2131 = vld [vmem:[%s2092 + $0x98] sm:$0xf]
        %v2132 = vld [vmem:[%s2092 + $0x9c] sm:$0xf]
        %v2133 = vld [vmem:[%s2092 + $0xa0] sm:$0xf]
        %v2134 = vld [vmem:[%s2092 + $0xa4] sm:$0xf]
        %v2135 = vld [vmem:[%s2092 + $0xa8] sm:$0xf]
        %v2136 = vld [vmem:[%s2092 + $0xac] sm:$0xf]
        %v2137 = vld [vmem:[%s2092 + $0xb0] sm:$0xf]
        %v2138 = vld [vmem:[%s2092 + $0xb4] sm:$0xf]
        %v2139 = vld [vmem:[%s2092 + $0xb8] sm:$0xf]
        %v2140 = vld [vmem:[%s2092 + $0xbc] sm:$0xf]
        %v2189 = vunpack.c.l.b16 %v2093
        %v2190 = vunpack.c.l.b16 %v2094
        %v2191 = vunpack.c.l.b16 %v2095
        %v2192 = vunpack.c.l.b16 %v2096
        %v2193 = vunpack.c.l.b16 %v2097
        %v2194 = vunpack.c.l.b16 %v2098
        %v2195 = vunpack.c.l.b16 %v2099
        %v2196 = vunpack.c.l.b16 %v2100
        %v2197 = vunpack.c.l.b16 %v2101
        %v2198 = vunpack.c.l.b16 %v2102
        %v2199 = vunpack.c.l.b16 %v2103
        %v2200 = vunpack.c.l.b16 %v2104
        %v2201 = vunpack.c.l.b16 %v2105
        %v2202 = vunpack.c.l.b16 %v2106
        %v2203 = vunpack.c.l.b16 %v2107
        %v2204 = vunpack.c.l.b16 %v2108
        %v2205 = vunpack.c.l.b16 %v2109
        %v2206 = vunpack.c.l.b16 %v2110
        %v2207 = vunpack.c.l.b16 %v2111
        %v2208 = vunpack.c.l.b16 %v2112
        %v2209 = vunpack.c.l.b16 %v2113
        %v2210 = vunpack.c.l.b16 %v2114
        %v2211 = vunpack.c.l.b16 %v2115
        %v2212 = vunpack.c.l.b16 %v2116
        %v2213 = vunpack.c.l.b16 %v2117
        %v2214 = vunpack.c.l.b16 %v2118
        %v2215 = vunpack.c.l.b16 %v2119
        %v2216 = vunpack.c.l.b16 %v2120
        %v2217 = vunpack.c.l.b16 %v2121
        %v2218 = vunpack.c.l.b16 %v2122
        %v2219 = vunpack.c.l.b16 %v2123
        %v2220 = vunpack.c.l.b16 %v2124
        %v2221 = vunpack.c.l.b16 %v2125
        %v2222 = vunpack.c.l.b16 %v2126
        %v2223 = vunpack.c.l.b16 %v2127
        %v2224 = vunpack.c.l.b16 %v2128
        %v2225 = vunpack.c.l.b16 %v2129
        %v2226 = vunpack.c.l.b16 %v2130
        %v2227 = vunpack.c.l.b16 %v2131
        %v2228 = vunpack.c.l.b16 %v2132
        %v2229 = vunpack.c.l.b16 %v2133
        %v2230 = vunpack.c.l.b16 %v2134
        %v2231 = vunpack.c.l.b16 %v2135
        %v2232 = vunpack.c.l.b16 %v2136
        %v2233 = vunpack.c.l.b16 %v2137
        %v2234 = vunpack.c.l.b16 %v2138
        %v2235 = vunpack.c.l.b16 %v2139
        %v2236 = vunpack.c.l.b16 %v2140
        %v2237 = vpack.c.b16 %v2190, %v2189
        %v2238 = vpack.c.b16 %v2192, %v2191
        %v2239 = vpack.c.b16 %v2194, %v2193
        %v2240 = vpack.c.b16 %v2196, %v2195
        %v2241 = vpack.c.b16 %v2198, %v2197
        %v2242 = vpack.c.b16 %v2200, %v2199
        %v2243 = vpack.c.b16 %v2202, %v2201
        %v2244 = vpack.c.b16 %v2204, %v2203
        %v2245 = vpack.c.b16 %v2206, %v2205
        %v2246 = vpack.c.b16 %v2208, %v2207
        %v2247 = vpack.c.b16 %v2210, %v2209
        %v2248 = vpack.c.b16 %v2212, %v2211
        %v2249 = vpack.c.b16 %v2214, %v2213
        %v2250 = vpack.c.b16 %v2216, %v2215
        %v2251 = vpack.c.b16 %v2218, %v2217
        %v2252 = vpack.c.b16 %v2220, %v2219
        %v2253 = vpack.c.b16 %v2222, %v2221
        %v2254 = vpack.c.b16 %v2224, %v2223
        %v2255 = vpack.c.b16 %v2226, %v2225
        %v2256 = vpack.c.b16 %v2228, %v2227
        %v2257 = vpack.c.b16 %v2230, %v2229
        %v2258 = vpack.c.b16 %v2232, %v2231
        %v2259 = vpack.c.b16 %v2234, %v2233
        %v2260 = vpack.c.b16 %v2236, %v2235
        %2285 = vmatprep.subr.bf16.mxu0 0
        %2286 = vmatpush1.bf16.msra.mxu0 %v2244
        %2287 = vmatprep.subr.bf16.mxu0 0
        %2288 = vmatpush1.bf16.msra.mxu0 %v2243
        %2289 = vmatprep.subr.bf16.mxu0 0
        %2290 = vmatpush1.bf16.msra.mxu0 %v2242
        %2291 = vmatprep.subr.bf16.mxu0 0
        %2292 = vmatpush1.bf16.msra.mxu0 %v2241
        %2293 = vmatprep.subr.bf16.mxu0 0
        %2294 = vmatpush1.bf16.msra.mxu0 %v2240
        %2295 = vmatprep.subr.bf16.mxu0 0
        %2296 = vmatpush1.bf16.msra.mxu0 %v2239
        %2297 = vmatprep.subr.bf16.mxu0 0
        %2298 = vmatpush1.bf16.msra.mxu0 %v2238
        %2299 = vmatprep.subr.bf16.mxu0 0
        %2300 = vmatpush1.bf16.msra.mxu0 %v2237
        %2301 = vmatprep.subr.bf16.mxu0 0
        %2302 = vmatpush2.bf16.msra.mxu0 %v2252
        %2303 = vmatprep.subr.bf16.mxu0 0
        %2304 = vmatpush2.bf16.msra.mxu0 %v2251
        %2305 = vmatprep.subr.bf16.mxu0 0
        %2306 = vmatpush2.bf16.msra.mxu0 %v2250
        %2307 = vmatprep.subr.bf16.mxu0 0
        %2308 = vmatpush2.bf16.msra.mxu0 %v2249
        %2309 = vmatprep.subr.bf16.mxu0 0
        %2310 = vmatpush2.bf16.msra.mxu0 %v2248
        %2311 = vmatprep.subr.bf16.mxu0 0
        %2312 = vmatpush2.bf16.msra.mxu0 %v2247
        %2313 = vmatprep.subr.bf16.mxu0 0
        %2314 = vmatpush2.bf16.msra.mxu0 %v2246
        %2315 = vmatprep.subr.bf16.mxu0 0
        %2316 = vmatpush2.bf16.msra.mxu0 %v2245
        %2317 = vmatprep.mubr.bf16.mxu0 %v693
        %2318 = vmatmul.mubr.bf16.gmra.mxu0 %v559
        %v2319 = vpop.f32.mrf.mxu0
        %v2320 = vadd.f32 0.0, %v2319
        %v2321 = vpop.f32.mrf.mxu0
        %v2322 = vpop.f32.mrf.mxu0
        %v2323 = vadd.f32 0.0, %v2322
        %v2324 = vpop.f32.mrf.mxu0
        %2325 = vmatprep.mubr.bf16.mxu0 %v705
        %2326 = vmatmul.mubr.bf16.gmra.mxu0 %v560
        %v2327 = vpop.f32.mrf.mxu0
        %v2328 = vadd.f32 0.0, %v2327
        %v2329 = vpop.f32.mrf.mxu0
        %v2330 = vpop.f32.mrf.mxu0
        %v2331 = vadd.f32 0.0, %v2330
        %v2332 = vpop.f32.mrf.mxu0
        %2333 = vmatprep.mubr.bf16.mxu0 %v717
        %2334 = vmatmul.mubr.bf16.gmra.mxu0 %v561
        %v2335 = vpop.f32.mrf.mxu0
        %v2336 = vadd.f32 0.0, %v2335
        %v2337 = vpop.f32.mrf.mxu0
        %v2338 = vpop.f32.mrf.mxu0
        %v2339 = vadd.f32 0.0, %v2338
        %v2340 = vpop.f32.mrf.mxu0
        %2341 = vmatprep.mubr.bf16.mxu0 %v729
        %2342 = vmatmul.mubr.bf16.gmra.mxu0 %v562
        %v2343 = vpop.f32.mrf.mxu0
        %v2344 = vadd.f32 0.0, %v2343
        %v2345 = vpop.f32.mrf.mxu0
        %v2346 = vpop.f32.mrf.mxu0
        %v2347 = vadd.f32 0.0, %v2346
        %v2348 = vpop.f32.mrf.mxu0
        %2349 = vmatprep.mubr.bf16.mxu0 %v741
        %2350 = vmatmul.mubr.bf16.gmra.mxu0 %v563
        %v2351 = vpop.f32.mrf.mxu0
        %v2352 = vadd.f32 0.0, %v2351
        %v2353 = vpop.f32.mrf.mxu0
        %v2354 = vpop.f32.mrf.mxu0
        %v2355 = vadd.f32 0.0, %v2354
        %v2356 = vpop.f32.mrf.mxu0
        %2357 = vmatprep.mubr.bf16.mxu0 %v753
        %2358 = vmatmul.mubr.bf16.gmra.mxu0 %v564
        %v2359 = vpop.f32.mrf.mxu0
        %v2360 = vadd.f32 0.0, %v2359
        %v2361 = vpop.f32.mrf.mxu0
        %v2362 = vpop.f32.mrf.mxu0
        %v2363 = vadd.f32 0.0, %v2362
        %v2364 = vpop.f32.mrf.mxu0
        %2365 = vmatprep.mubr.bf16.mxu0 %v765
        %2366 = vmatmul.mubr.bf16.gmra.mxu0 %v565
        %v2367 = vpop.f32.mrf.mxu0
        %v2368 = vadd.f32 0.0, %v2367
        %v2369 = vpop.f32.mrf.mxu0
        %v2370 = vpop.f32.mrf.mxu0
        %v2371 = vadd.f32 0.0, %v2370
        %v2372 = vpop.f32.mrf.mxu0
        %2373 = vmatprep.mubr.bf16.mxu0 %v777
        %2374 = vmatmul.mubr.bf16.gmra.mxu0 %v566
        %v2375 = vpop.f32.mrf.mxu0
        %v2376 = vadd.f32 0.0, %v2375
        %v2377 = vpop.f32.mrf.mxu0
        %v2378 = vpop.f32.mrf.mxu0
        %v2379 = vadd.f32 0.0, %v2378
        %v2380 = vpop.f32.mrf.mxu0
        %2381 = vmatprep.mubr.bf16.mxu0 %v789
        %2382 = vmatmul.mubr.bf16.gmra.mxu0 %v567
        %v2383 = vpop.f32.mrf.mxu0
        %v2384 = vadd.f32 0.0, %v2383
        %v2385 = vpop.f32.mrf.mxu0
        %v2386 = vpop.f32.mrf.mxu0
        %v2387 = vadd.f32 0.0, %v2386
        %v2388 = vpop.f32.mrf.mxu0
        %2389 = vmatprep.mubr.bf16.mxu0 %v801
        %2390 = vmatmul.mubr.bf16.gmra.mxu0 %v568
        %v2391 = vpop.f32.mrf.mxu0
        %v2392 = vadd.f32 0.0, %v2391
        %v2393 = vpop.f32.mrf.mxu0
        %v2394 = vpop.f32.mrf.mxu0
        %v2395 = vadd.f32 0.0, %v2394
        %v2396 = vpop.f32.mrf.mxu0
        %2397 = vmatprep.mubr.bf16.mxu0 %v813
        %2398 = vmatmul.mubr.bf16.gmra.mxu0 %v569
        %v2399 = vpop.f32.mrf.mxu0
        %v2400 = vadd.f32 0.0, %v2399
        %v2401 = vpop.f32.mrf.mxu0
        %v2402 = vpop.f32.mrf.mxu0
        %v2403 = vadd.f32 0.0, %v2402
        %v2404 = vpop.f32.mrf.mxu0
        %2405 = vmatprep.mubr.bf16.mxu0 %v825
        %2406 = vmatmul.mubr.bf16.gmra.mxu0 %v570
        %v2407 = vpop.f32.mrf.mxu0
        %v2408 = vadd.f32 0.0, %v2407
        %v2409 = vpop.f32.mrf.mxu0
        %v2410 = vpop.f32.mrf.mxu0
        %v2411 = vadd.f32 0.0, %v2410
        %v2412 = vpop.f32.mrf.mxu0
        %2413 = vmatprep.mubr.bf16.mxu0 %v837
        %2414 = vmatmul.mubr.bf16.gmra.mxu0 %v571
        %v2415 = vpop.f32.mrf.mxu0
        %v2416 = vadd.f32 0.0, %v2415
        %v2417 = vpop.f32.mrf.mxu0
        %v2418 = vpop.f32.mrf.mxu0
        %v2419 = vadd.f32 0.0, %v2418
        %v2420 = vpop.f32.mrf.mxu0
        %2421 = vmatprep.mubr.bf16.mxu0 %v849
        %2422 = vmatmul.mubr.bf16.gmra.mxu0 %v572
        %v2423 = vpop.f32.mrf.mxu0
        %v2424 = vadd.f32 0.0, %v2423
        %v2425 = vpop.f32.mrf.mxu0
        %v2426 = vpop.f32.mrf.mxu0
        %v2427 = vadd.f32 0.0, %v2426
        %v2428 = vpop.f32.mrf.mxu0
        %2429 = vmatprep.mubr.bf16.mxu0 %v861
        %2430 = vmatmul.mubr.bf16.gmra.mxu0 %v573
        %v2431 = vpop.f32.mrf.mxu0
        %v2432 = vadd.f32 0.0, %v2431
        %v2433 = vpop.f32.mrf.mxu0
        %v2434 = vpop.f32.mrf.mxu0
        %v2435 = vadd.f32 0.0, %v2434
        %v2436 = vpop.f32.mrf.mxu0
        %2437 = vmatprep.mubr.bf16.mxu0 %v873
        %2438 = vmatmul.mubr.bf16.gmra.mxu0 %v574
        %v2439 = vpop.f32.mrf.mxu0
        %v2440 = vadd.f32 0.0, %v2439
        %v2441 = vpop.f32.mrf.mxu0
        %v2442 = vpop.f32.mrf.mxu0
        %v2443 = vadd.f32 0.0, %v2442
        %v2444 = vpop.f32.mrf.mxu0
        %2445 = vmatprep.mubr.bf16.mxu0 %v885
        %2446 = vmatmul.mubr.bf16.gmra.mxu0 %v575
        %v2447 = vpop.f32.mrf.mxu0
        %v2448 = vadd.f32 0.0, %v2447
        %v2449 = vpop.f32.mrf.mxu0
        %v2450 = vpop.f32.mrf.mxu0
        %v2451 = vadd.f32 0.0, %v2450
        %v2452 = vpop.f32.mrf.mxu0
        %2453 = vmatprep.mubr.bf16.mxu0 %v897
        %2454 = vmatmul.mubr.bf16.gmra.mxu0 %v576
        %v2455 = vpop.f32.mrf.mxu0
        %v2456 = vadd.f32 0.0, %v2455
        %v2457 = vpop.f32.mrf.mxu0
        %v2458 = vpop.f32.mrf.mxu0
        %v2459 = vadd.f32 0.0, %v2458
        %v2460 = vpop.f32.mrf.mxu0
        %2461 = vdwg.mxu0
        %2462 = vmatprep.subr.bf16.mxu0 0
        %2463 = vmatpush1.bf16.msra.mxu0 %v2260
        %2464 = vmatprep.subr.bf16.mxu0 0
        %2465 = vmatpush1.bf16.msra.mxu0 %v2259
        %2466 = vmatprep.subr.bf16.mxu0 0
        %2467 = vmatpush1.bf16.msra.mxu0 %v2258
        %2468 = vmatprep.subr.bf16.mxu0 0
        %2469 = vmatpush1.bf16.msra.mxu0 %v2257
        %2470 = vmatprep.subr.bf16.mxu0 0
        %2471 = vmatpush1.bf16.msra.mxu0 %v2256
        %2472 = vmatprep.subr.bf16.mxu0 0
        %2473 = vmatpush1.bf16.msra.mxu0 %v2255
        %2474 = vmatprep.subr.bf16.mxu0 0
        %2475 = vmatpush1.bf16.msra.mxu0 %v2254
        %2476 = vmatprep.subr.bf16.mxu0 0
        %2477 = vmatpush1.bf16.msra.mxu0 %v2253
        %2478 = vmatprep.subr.bf16.mxu0 0
        %2479 = vmatpush2.bf16.msra.mxu0 0
        %2480 = vmatprep.subr.bf16.mxu0 0
        %2481 = vmatpush2.bf16.msra.mxu0 0
        %2482 = vmatprep.subr.bf16.mxu0 0
        %2483 = vmatpush2.bf16.msra.mxu0 0
        %2484 = vmatprep.subr.bf16.mxu0 0
        %2485 = vmatpush2.bf16.msra.mxu0 0
        %2486 = vmatprep.subr.bf16.mxu0 0
        %2487 = vmatpush2.bf16.msra.mxu0 0
        %2488 = vmatprep.subr.bf16.mxu0 0
        %2489 = vmatpush2.bf16.msra.mxu0 0
        %2490 = vmatprep.subr.bf16.mxu0 0
        %2491 = vmatpush2.bf16.msra.mxu0 0
        %2492 = vmatprep.subr.bf16.mxu0 0
        %2493 = vmatpush2.bf16.msra.mxu0 0
        %2494 = vmatprep.mubr.bf16.mxu0 0
        %2495 = vmatmul.mubr.bf16.gmra.mxu0 %v927
        %v2496 = vpop.f32.mrf.mxu0
        %v2497 = vadd.f32 %v2320, %v2496
        %v2498 = vpop.f32.mrf.mxu0
        %v2499 = vpop.f32.mrf.mxu0
        %v2500 = vadd.f32 %v2323, %v2499
        %v2501 = vpop.f32.mrf.mxu0
        %2502 = vmatprep.mubr.bf16.mxu0 0
        %2503 = vmatmul.mubr.bf16.gmra.mxu0 %v930
        %v2504 = vpop.f32.mrf.mxu0
        %v2505 = vadd.f32 %v2328, %v2504
        %v2506 = vpop.f32.mrf.mxu0
        %v2507 = vpop.f32.mrf.mxu0
        %v2508 = vadd.f32 %v2331, %v2507
        %v2509 = vpop.f32.mrf.mxu0
        %2510 = vmatprep.mubr.bf16.mxu0 0
        %2511 = vmatmul.mubr.bf16.gmra.mxu0 %v933
        %v2512 = vpop.f32.mrf.mxu0
        %v2513 = vadd.f32 %v2336, %v2512
        %v2514 = vpop.f32.mrf.mxu0
        %v2515 = vpop.f32.mrf.mxu0
        %v2516 = vadd.f32 %v2339, %v2515
        %v2517 = vpop.f32.mrf.mxu0
        %2518 = vmatprep.mubr.bf16.mxu0 0
        %2519 = vmatmul.mubr.bf16.gmra.mxu0 %v936
        %v2520 = vpop.f32.mrf.mxu0
        %v2521 = vadd.f32 %v2344, %v2520
        %v2522 = vpop.f32.mrf.mxu0
        %v2523 = vpop.f32.mrf.mxu0
        %v2524 = vadd.f32 %v2347, %v2523
        %v2525 = vpop.f32.mrf.mxu0
        %2526 = vmatprep.mubr.bf16.mxu0 0
        %2527 = vmatmul.mubr.bf16.gmra.mxu0 %v939
        %v2528 = vpop.f32.mrf.mxu0
        %v2529 = vadd.f32 %v2352, %v2528
        %v2530 = vpop.f32.mrf.mxu0
        %v2531 = vpop.f32.mrf.mxu0
        %v2532 = vadd.f32 %v2355, %v2531
        %v2533 = vpop.f32.mrf.mxu0
        %2534 = vmatprep.mubr.bf16.mxu0 0
        %2535 = vmatmul.mubr.bf16.gmra.mxu0 %v942
        %v2536 = vpop.f32.mrf.mxu0
        %v2537 = vadd.f32 %v2360, %v2536
        %v2538 = vpop.f32.mrf.mxu0
        %v2539 = vpop.f32.mrf.mxu0
        %v2540 = vadd.f32 %v2363, %v2539
        %v2541 = vpop.f32.mrf.mxu0
        %2542 = vmatprep.mubr.bf16.mxu0 0
        %2543 = vmatmul.mubr.bf16.gmra.mxu0 %v945
        %v2544 = vpop.f32.mrf.mxu0
        %v2545 = vadd.f32 %v2368, %v2544
        %v2546 = vpop.f32.mrf.mxu0
        %v2547 = vpop.f32.mrf.mxu0
        %v2548 = vadd.f32 %v2371, %v2547
        %v2549 = vpop.f32.mrf.mxu0
        %2550 = vmatprep.mubr.bf16.mxu0 0
        %2551 = vmatmul.mubr.bf16.gmra.mxu0 %v948
        %v2552 = vpop.f32.mrf.mxu0
        %v2553 = vadd.f32 %v2376, %v2552
        %v2554 = vpop.f32.mrf.mxu0
        %v2555 = vpop.f32.mrf.mxu0
        %v2556 = vadd.f32 %v2379, %v2555
        %v2557 = vpop.f32.mrf.mxu0
        %2558 = vmatprep.mubr.bf16.mxu0 0
        %2559 = vmatmul.mubr.bf16.gmra.mxu0 %v951
        %v2560 = vpop.f32.mrf.mxu0
        %v2561 = vadd.f32 %v2384, %v2560
        %v2562 = vpop.f32.mrf.mxu0
        %v2563 = vpop.f32.mrf.mxu0
        %v2564 = vadd.f32 %v2387, %v2563
        %v2565 = vpop.f32.mrf.mxu0
        %2566 = vmatprep.mubr.bf16.mxu0 0
        %2567 = vmatmul.mubr.bf16.gmra.mxu0 %v954
        %v2568 = vpop.f32.mrf.mxu0
        %v2569 = vadd.f32 %v2392, %v2568
        %v2570 = vpop.f32.mrf.mxu0
        %v2571 = vpop.f32.mrf.mxu0
        %v2572 = vadd.f32 %v2395, %v2571
        %v2573 = vpop.f32.mrf.mxu0
        %2574 = vmatprep.mubr.bf16.mxu0 0
        %2575 = vmatmul.mubr.bf16.gmra.mxu0 %v957
        %v2576 = vpop.f32.mrf.mxu0
        %v2577 = vadd.f32 %v2400, %v2576
        %v2578 = vpop.f32.mrf.mxu0
        %v2579 = vpop.f32.mrf.mxu0
        %v2580 = vadd.f32 %v2403, %v2579
        %v2581 = vpop.f32.mrf.mxu0
        %2582 = vmatprep.mubr.bf16.mxu0 0
        %2583 = vmatmul.mubr.bf16.gmra.mxu0 %v960
        %v2584 = vpop.f32.mrf.mxu0
        %v2585 = vadd.f32 %v2408, %v2584
        %v2586 = vpop.f32.mrf.mxu0
        %v2587 = vpop.f32.mrf.mxu0
        %v2588 = vadd.f32 %v2411, %v2587
        %v2589 = vpop.f32.mrf.mxu0
        %2590 = vmatprep.mubr.bf16.mxu0 0
        %2591 = vmatmul.mubr.bf16.gmra.mxu0 %v963
        %v2592 = vpop.f32.mrf.mxu0
        %v2593 = vadd.f32 %v2416, %v2592
        %v2594 = vpop.f32.mrf.mxu0
        %v2595 = vpop.f32.mrf.mxu0
        %v2596 = vadd.f32 %v2419, %v2595
        %v2597 = vpop.f32.mrf.mxu0
        %2598 = vmatprep.mubr.bf16.mxu0 0
        %2599 = vmatmul.mubr.bf16.gmra.mxu0 %v966
        %v2600 = vpop.f32.mrf.mxu0
        %v2601 = vadd.f32 %v2424, %v2600
        %v2602 = vpop.f32.mrf.mxu0
        %v2603 = vpop.f32.mrf.mxu0
        %v2604 = vadd.f32 %v2427, %v2603
        %v2605 = vpop.f32.mrf.mxu0
        %2606 = vmatprep.mubr.bf16.mxu0 0
        %2607 = vmatmul.mubr.bf16.gmra.mxu0 %v969
        %v2608 = vpop.f32.mrf.mxu0
        %v2609 = vadd.f32 %v2432, %v2608
        %v2610 = vpop.f32.mrf.mxu0
        %v2611 = vpop.f32.mrf.mxu0
        %v2612 = vadd.f32 %v2435, %v2611
        %v2613 = vpop.f32.mrf.mxu0
        %2614 = vmatprep.mubr.bf16.mxu0 0
        %2615 = vmatmul.mubr.bf16.gmra.mxu0 %v972
        %v2616 = vpop.f32.mrf.mxu0
        %v2617 = vadd.f32 %v2440, %v2616
        %v2618 = vpop.f32.mrf.mxu0
        %v2619 = vpop.f32.mrf.mxu0
        %v2620 = vadd.f32 %v2443, %v2619
        %v2621 = vpop.f32.mrf.mxu0
        %2622 = vmatprep.mubr.bf16.mxu0 0
        %2623 = vmatmul.mubr.bf16.gmra.mxu0 %v975
        %v2624 = vpop.f32.mrf.mxu0
        %v2625 = vadd.f32 %v2448, %v2624
        %v2626 = vpop.f32.mrf.mxu0
        %v2627 = vpop.f32.mrf.mxu0
        %v2628 = vadd.f32 %v2451, %v2627
        %v2629 = vpop.f32.mrf.mxu0
        %2630 = vmatprep.mubr.bf16.mxu0 0
        %2631 = vmatmul.mubr.bf16.gmra.mxu0 %v978
        %v2632 = vpop.f32.mrf.mxu0
        %v2633 = vadd.f32 %v2456, %v2632
        %v2634 = vpop.f32.mrf.mxu0
        %v2635 = vpop.f32.mrf.mxu0
        %v2636 = vadd.f32 %v2459, %v2635
        %v2637 = vpop.f32.mrf.mxu0
        %2638 = vdwg.mxu0
        %v2639 = vadd.f32 %v1950, %v2497
        %v2640 = vadd.f32 %v1953, %v2500
        %v2641 = vadd.f32 %v1958, %v2505
        %v2642 = vadd.f32 %v1961, %v2508
        %v2643 = vadd.f32 %v1966, %v2513
        %v2644 = vadd.f32 %v1969, %v2516
        %v2645 = vadd.f32 %v1974, %v2521
        %v2646 = vadd.f32 %v1977, %v2524
        %v2647 = vadd.f32 %v1982, %v2529
        %v2648 = vadd.f32 %v1985, %v2532
        %v2649 = vadd.f32 %v1990, %v2537
        %v2650 = vadd.f32 %v1993, %v2540
        %v2651 = vadd.f32 %v1998, %v2545
        %v2652 = vadd.f32 %v2001, %v2548
        %v2653 = vadd.f32 %v2006, %v2553
        %v2654 = vadd.f32 %v2009, %v2556
        %v2655 = vadd.f32 %v2014, %v2561
        %v2656 = vadd.f32 %v2017, %v2564
        %v2657 = vadd.f32 %v2022, %v2569
        %v2658 = vadd.f32 %v2025, %v2572
        %v2659 = vadd.f32 %v2030, %v2577
        %v2660 = vadd.f32 %v2033, %v2580
        %v2661 = vadd.f32 %v2038, %v2585
        %v2662 = vadd.f32 %v2041, %v2588
        %v2663 = vadd.f32 %v2046, %v2593
        %v2664 = vadd.f32 %v2049, %v2596
        %v2665 = vadd.f32 %v2054, %v2601
        %v2666 = vadd.f32 %v2057, %v2604
        %v2667 = vadd.f32 %v2062, %v2609
        %v2668 = vadd.f32 %v2065, %v2612
        %v2669 = vadd.f32 %v2070, %v2617
        %v2670 = vadd.f32 %v2073, %v2620
        %v2671 = vadd.f32 %v2078, %v2625
        %v2672 = vadd.f32 %v2081, %v2628
        %v2673 = vadd.f32 %v2086, %v2633
        %v2674 = vadd.f32 %v2089, %v2636
        %v2675 = vld [vmem:[%s3] sm:$0x1]
        %v2677 = vlaneseq
        %v2678 = vshrl.u32 %v2677, 7
        %v2679 = vsub.s32 0, %v2678
        %v2680 = vrot.slane %v2675, %v2679
        %v2682 = vmul.f32 %v2639, %v2680
        %v2683 = vmul.f32 %v2640, %v2680
        %v2684 = vmul.f32 %v2641, %v2680
        %v2685 = vmul.f32 %v2642, %v2680
        %v2686 = vmul.f32 %v2643, %v2680
        %v2687 = vmul.f32 %v2644, %v2680
        %v2688 = vmul.f32 %v2645, %v2680
        %v2689 = vmul.f32 %v2646, %v2680
        %v2690 = vmul.f32 %v2647, %v2680
        %v2691 = vmul.f32 %v2648, %v2680
        %v2692 = vmul.f32 %v2649, %v2680
        %v2693 = vmul.f32 %v2650, %v2680
        %v2694 = vmul.f32 %v2651, %v2680
        %v2695 = vmul.f32 %v2652, %v2680
        %v2696 = vmul.f32 %v2653, %v2680
        %v2697 = vmul.f32 %v2654, %v2680
        %v2698 = vmul.f32 %v2655, %v2680
        %v2699 = vmul.f32 %v2656, %v2680
        %v2700 = vmul.f32 %v2657, %v2680
        %v2701 = vmul.f32 %v2658, %v2680
        %v2702 = vmul.f32 %v2659, %v2680
        %v2703 = vmul.f32 %v2660, %v2680
        %v2704 = vmul.f32 %v2661, %v2680
        %v2705 = vmul.f32 %v2662, %v2680
        %v2706 = vmul.f32 %v2663, %v2680
        %v2707 = vmul.f32 %v2664, %v2680
        %v2708 = vmul.f32 %v2665, %v2680
        %v2709 = vmul.f32 %v2666, %v2680
        %v2710 = vmul.f32 %v2667, %v2680
        %v2711 = vmul.f32 %v2668, %v2680
        %v2712 = vmul.f32 %v2669, %v2680
        %v2713 = vmul.f32 %v2670, %v2680
        %v2714 = vmul.f32 %v2671, %v2680
        %v2715 = vmul.f32 %v2672, %v2680
        %v2716 = vmul.f32 %v2673, %v2680
        %v2717 = vmul.f32 %v2674, %v2680
        %v2718 = vld [vmem:[%s4] sm:$0x1]
        %v2720 = vlaneseq
        %v2721 = vshrl.u32 %v2720, 7
        %v2722 = vsub.s32 0, %v2721
        %v2723 = vrot.slane %v2718, %v2722
        %v2725 = vadd.f32 %v2682, %v2723
        %v2726 = vadd.f32 %v2683, %v2723
        %v2727 = vadd.f32 %v2684, %v2723
        %v2728 = vadd.f32 %v2685, %v2723
        %v2729 = vadd.f32 %v2686, %v2723
        %v2730 = vadd.f32 %v2687, %v2723
        %v2731 = vadd.f32 %v2688, %v2723
        %v2732 = vadd.f32 %v2689, %v2723
        %v2733 = vadd.f32 %v2690, %v2723
        %v2734 = vadd.f32 %v2691, %v2723
        %v2735 = vadd.f32 %v2692, %v2723
        %v2736 = vadd.f32 %v2693, %v2723
        %v2737 = vadd.f32 %v2694, %v2723
        %v2738 = vadd.f32 %v2695, %v2723
        %v2739 = vadd.f32 %v2696, %v2723
        %v2740 = vadd.f32 %v2697, %v2723
        %v2741 = vadd.f32 %v2698, %v2723
        %v2742 = vadd.f32 %v2699, %v2723
        %v2743 = vadd.f32 %v2700, %v2723
        %v2744 = vadd.f32 %v2701, %v2723
        %v2745 = vadd.f32 %v2702, %v2723
        %v2746 = vadd.f32 %v2703, %v2723
        %v2747 = vadd.f32 %v2704, %v2723
        %v2748 = vadd.f32 %v2705, %v2723
        %v2749 = vadd.f32 %v2706, %v2723
        %v2750 = vadd.f32 %v2707, %v2723
        %v2751 = vadd.f32 %v2708, %v2723
        %v2752 = vadd.f32 %v2709, %v2723
        %v2753 = vadd.f32 %v2710, %v2723
        %v2754 = vadd.f32 %v2711, %v2723
        %v2755 = vadd.f32 %v2712, %v2723
        %v2756 = vadd.f32 %v2713, %v2723
        %v2757 = vadd.f32 %v2714, %v2723
        %v2758 = vadd.f32 %v2715, %v2723
        %v2759 = vadd.f32 %v2716, %v2723
        %v2760 = vadd.f32 %v2717, %v2723
        %v2761 = vmax.f32 %v2725, 0.0
        %v2762 = vmax.f32 %v2726, 0.0
        %v2763 = vmax.f32 %v2727, 0.0
        %v2764 = vmax.f32 %v2728, 0.0
        %v2765 = vmax.f32 %v2729, 0.0
        %v2766 = vmax.f32 %v2730, 0.0
        %v2767 = vmax.f32 %v2731, 0.0
        %v2768 = vmax.f32 %v2732, 0.0
        %v2769 = vmax.f32 %v2733, 0.0
        %v2770 = vmax.f32 %v2734, 0.0
        %v2771 = vmax.f32 %v2735, 0.0
        %v2772 = vmax.f32 %v2736, 0.0
        %v2773 = vmax.f32 %v2737, 0.0
        %v2774 = vmax.f32 %v2738, 0.0
        %v2775 = vmax.f32 %v2739, 0.0
        %v2776 = vmax.f32 %v2740, 0.0
        %v2777 = vmax.f32 %v2741, 0.0
        %v2778 = vmax.f32 %v2742, 0.0
        %v2779 = vmax.f32 %v2743, 0.0
        %v2780 = vmax.f32 %v2744, 0.0
        %v2781 = vmax.f32 %v2745, 0.0
        %v2782 = vmax.f32 %v2746, 0.0
        %v2783 = vmax.f32 %v2747, 0.0
        %v2784 = vmax.f32 %v2748, 0.0
        %v2785 = vmax.f32 %v2749, 0.0
        %v2786 = vmax.f32 %v2750, 0.0
        %v2787 = vmax.f32 %v2751, 0.0
        %v2788 = vmax.f32 %v2752, 0.0
        %v2789 = vmax.f32 %v2753, 0.0
        %v2790 = vmax.f32 %v2754, 0.0
        %v2791 = vmax.f32 %v2755, 0.0
        %v2792 = vmax.f32 %v2756, 0.0
        %v2793 = vmax.f32 %v2757, 0.0
        %v2794 = vmax.f32 %v2758, 0.0
        %v2795 = vmax.f32 %v2759, 0.0
        %v2796 = vmax.f32 %v2760, 0.0
        %v2797 = vlaneseq
        %v2798 = vshrl.u32 %v2797, 7
        %v2799 = vadd.s32 %v2798, 8
        %v2800 = vadd.s32 %v2798, 16
        %v2801 = vadd.s32 %v2798, 24
        %v2802 = vadd.s32 %v2798, 32
        %v2803 = vadd.s32 %v2798, 40
        %v2804 = vadd.s32 %v2798, 48
        %v2805 = vadd.s32 %v2798, 56
        %v2806 = vadd.s32 %v2798, 64
        %v2807 = vadd.s32 %v2798, 72
        %v2808 = vadd.s32 %v2798, 80
        %v2809 = vadd.s32 %v2798, 88
        %v2810 = vadd.s32 %v2798, 96
        %v2811 = vadd.s32 %v2798, 104
        %v2812 = vadd.s32 %v2798, 112
        %v2813 = vadd.s32 %v2798, 120
        %v2814 = vadd.s32 %v2798, 128
        %v2815 = vadd.s32 %v2798, 136
        %v2816 = vadd.s32 %v2798, 144
        %v2817 = vadd.s32 %v2798, 152
        %v2818 = vadd.s32 %v2798, 160
        %v2819 = vadd.s32 %v2798, 168
        %v2820 = vadd.s32 %v2798, 176
        %v2821 = vadd.s32 %v2798, 184
        %v2822 = vadd.s32 %v2798, 192
        %v2823 = vadd.s32 %v2798, 200
        %v2824 = vadd.s32 %v2798, 208
        %v2825 = vadd.s32 %v2798, 216
        %v2826 = vadd.s32 %v2798, 224
        %v2827 = vadd.s32 %v2798, 232
        %v2828 = vadd.s32 %v2798, 240
        %v2829 = vadd.s32 %v2798, 248
        %v2830 = vadd.s32 %v2798, 256
        %v2831 = vadd.s32 %v2798, 264
        %v2832 = vadd.s32 %v2798, 272
        %v2833 = vadd.s32 %v2798, 280
        %s2834 = smul.u32 %s27, 16
        %s2835 = ssub.s32 1, %s2834
        %s2836 = smul.u32 %s2835, 16
        %s2837 = ssub.s32 17, %s2834
        %s2838 = smul.u32 %s2837, 16
        %v2839 = vstv %s2836
        %vm2840 = vcmp.ge.s32.totalorder %v2798, %v2839
        %vm2841 = vcmp.ge.s32.totalorder %v2799, %v2839
        %vm2842 = vcmp.ge.s32.totalorder %v2800, %v2839
        %vm2843 = vcmp.ge.s32.totalorder %v2801, %v2839
        %vm2844 = vcmp.ge.s32.totalorder %v2802, %v2839
        %vm2845 = vcmp.ge.s32.totalorder %v2803, %v2839
        %vm2846 = vcmp.ge.s32.totalorder %v2804, %v2839
        %vm2847 = vcmp.ge.s32.totalorder %v2805, %v2839
        %vm2848 = vcmp.ge.s32.totalorder %v2806, %v2839
        %vm2849 = vcmp.ge.s32.totalorder %v2807, %v2839
        %vm2850 = vcmp.ge.s32.totalorder %v2808, %v2839
        %vm2851 = vcmp.ge.s32.totalorder %v2809, %v2839
        %vm2852 = vcmp.ge.s32.totalorder %v2810, %v2839
        %vm2853 = vcmp.ge.s32.totalorder %v2811, %v2839
        %vm2854 = vcmp.ge.s32.totalorder %v2812, %v2839
        %vm2855 = vcmp.ge.s32.totalorder %v2813, %v2839
        %vm2856 = vcmp.ge.s32.totalorder %v2814, %v2839
        %vm2857 = vcmp.ge.s32.totalorder %v2815, %v2839
        %vm2858 = vcmp.ge.s32.totalorder %v2816, %v2839
        %vm2859 = vcmp.ge.s32.totalorder %v2817, %v2839
        %vm2860 = vcmp.ge.s32.totalorder %v2818, %v2839
        %vm2861 = vcmp.ge.s32.totalorder %v2819, %v2839
        %vm2862 = vcmp.ge.s32.totalorder %v2820, %v2839
        %vm2863 = vcmp.ge.s32.totalorder %v2821, %v2839
        %vm2864 = vcmp.ge.s32.totalorder %v2822, %v2839
        %vm2865 = vcmp.ge.s32.totalorder %v2823, %v2839
        %vm2866 = vcmp.ge.s32.totalorder %v2824, %v2839
        %vm2867 = vcmp.ge.s32.totalorder %v2825, %v2839
        %vm2868 = vcmp.ge.s32.totalorder %v2826, %v2839
        %vm2869 = vcmp.ge.s32.totalorder %v2827, %v2839
        %vm2870 = vcmp.ge.s32.totalorder %v2828, %v2839
        %vm2871 = vcmp.ge.s32.totalorder %v2829, %v2839
        %vm2872 = vcmp.ge.s32.totalorder %v2830, %v2839
        %vm2873 = vcmp.ge.s32.totalorder %v2831, %v2839
        %vm2874 = vcmp.ge.s32.totalorder %v2832, %v2839
        %vm2875 = vcmp.ge.s32.totalorder %v2833, %v2839
        %v2876 = vstv %s2838
        %vm2877 = vcmp.lt.s32.totalorder %v2798, %v2876
        %vm2878 = vcmp.lt.s32.totalorder %v2799, %v2876
        %vm2879 = vcmp.lt.s32.totalorder %v2800, %v2876
        %vm2880 = vcmp.lt.s32.totalorder %v2801, %v2876
        %vm2881 = vcmp.lt.s32.totalorder %v2802, %v2876
        %vm2882 = vcmp.lt.s32.totalorder %v2803, %v2876
        %vm2883 = vcmp.lt.s32.totalorder %v2804, %v2876
        %vm2884 = vcmp.lt.s32.totalorder %v2805, %v2876
        %vm2885 = vcmp.lt.s32.totalorder %v2806, %v2876
        %vm2886 = vcmp.lt.s32.totalorder %v2807, %v2876
        %vm2887 = vcmp.lt.s32.totalorder %v2808, %v2876
        %vm2888 = vcmp.lt.s32.totalorder %v2809, %v2876
        %vm2889 = vcmp.lt.s32.totalorder %v2810, %v2876
        %vm2890 = vcmp.lt.s32.totalorder %v2811, %v2876
        %vm2891 = vcmp.lt.s32.totalorder %v2812, %v2876
        %vm2892 = vcmp.lt.s32.totalorder %v2813, %v2876
        %vm2893 = vcmp.lt.s32.totalorder %v2814, %v2876
        %vm2894 = vcmp.lt.s32.totalorder %v2815, %v2876
        %vm2895 = vcmp.lt.s32.totalorder %v2816, %v2876
        %vm2896 = vcmp.lt.s32.totalorder %v2817, %v2876
        %vm2897 = vcmp.lt.s32.totalorder %v2818, %v2876
        %vm2898 = vcmp.lt.s32.totalorder %v2819, %v2876
        %vm2899 = vcmp.lt.s32.totalorder %v2820, %v2876
        %vm2900 = vcmp.lt.s32.totalorder %v2821, %v2876
        %vm2901 = vcmp.lt.s32.totalorder %v2822, %v2876
        %vm2902 = vcmp.lt.s32.totalorder %v2823, %v2876
        %vm2903 = vcmp.lt.s32.totalorder %v2824, %v2876
        %vm2904 = vcmp.lt.s32.totalorder %v2825, %v2876
        %vm2905 = vcmp.lt.s32.totalorder %v2826, %v2876
        %vm2906 = vcmp.lt.s32.totalorder %v2827, %v2876
        %vm2907 = vcmp.lt.s32.totalorder %v2828, %v2876
        %vm2908 = vcmp.lt.s32.totalorder %v2829, %v2876
        %vm2909 = vcmp.lt.s32.totalorder %v2830, %v2876
        %vm2910 = vcmp.lt.s32.totalorder %v2831, %v2876
        %vm2911 = vcmp.lt.s32.totalorder %v2832, %v2876
        %vm2912 = vcmp.lt.s32.totalorder %v2833, %v2876
        %vm2913 = vmand %vm2840, %vm2877
        %vm2914 = vmand %vm2841, %vm2878
        %vm2915 = vmand %vm2842, %vm2879
        %vm2916 = vmand %vm2843, %vm2880
        %vm2917 = vmand %vm2844, %vm2881
        %vm2918 = vmand %vm2845, %vm2882
        %vm2919 = vmand %vm2846, %vm2883
        %vm2920 = vmand %vm2847, %vm2884
        %vm2921 = vmand %vm2848, %vm2885
        %vm2922 = vmand %vm2849, %vm2886
        %vm2923 = vmand %vm2850, %vm2887
        %vm2924 = vmand %vm2851, %vm2888
        %vm2925 = vmand %vm2852, %vm2889
        %vm2926 = vmand %vm2853, %vm2890
        %vm2927 = vmand %vm2854, %vm2891
        %vm2928 = vmand %vm2855, %vm2892
        %vm2929 = vmand %vm2856, %vm2893
        %vm2930 = vmand %vm2857, %vm2894
        %vm2931 = vmand %vm2858, %vm2895
        %vm2932 = vmand %vm2859, %vm2896
        %vm2933 = vmand %vm2860, %vm2897
        %vm2934 = vmand %vm2861, %vm2898
        %vm2935 = vmand %vm2862, %vm2899
        %vm2936 = vmand %vm2863, %vm2900
        %vm2937 = vmand %vm2864, %vm2901
        %vm2938 = vmand %vm2865, %vm2902
        %vm2939 = vmand %vm2866, %vm2903
        %vm2940 = vmand %vm2867, %vm2904
        %vm2941 = vmand %vm2868, %vm2905
        %vm2942 = vmand %vm2869, %vm2906
        %vm2943 = vmand %vm2870, %vm2907
        %vm2944 = vmand %vm2871, %vm2908
        %vm2945 = vmand %vm2872, %vm2909
        %vm2946 = vmand %vm2873, %vm2910
        %vm2947 = vmand %vm2874, %vm2911
        %vm2948 = vmand %vm2875, %vm2912
        %v2949 = vsel %vm2913, 1, 0
        %v2950 = vsel %vm2914, 1, 0
        %v2951 = vsel %vm2915, 1, 0
        %v2952 = vsel %vm2916, 1, 0
        %v2953 = vsel %vm2917, 1, 0
        %v2954 = vsel %vm2918, 1, 0
        %v2955 = vsel %vm2919, 1, 0
        %v2956 = vsel %vm2920, 1, 0
        %v2957 = vsel %vm2921, 1, 0
        %v2958 = vsel %vm2922, 1, 0
        %v2959 = vsel %vm2923, 1, 0
        %v2960 = vsel %vm2924, 1, 0
        %v2961 = vsel %vm2925, 1, 0
        %v2962 = vsel %vm2926, 1, 0
        %v2963 = vsel %vm2927, 1, 0
        %v2964 = vsel %vm2928, 1, 0
        %v2965 = vsel %vm2929, 1, 0
        %v2966 = vsel %vm2930, 1, 0
        %v2967 = vsel %vm2931, 1, 0
        %v2968 = vsel %vm2932, 1, 0
        %v2969 = vsel %vm2933, 1, 0
        %v2970 = vsel %vm2934, 1, 0
        %v2971 = vsel %vm2935, 1, 0
        %v2972 = vsel %vm2936, 1, 0
        %v2973 = vsel %vm2937, 1, 0
        %v2974 = vsel %vm2938, 1, 0
        %v2975 = vsel %vm2939, 1, 0
        %v2976 = vsel %vm2940, 1, 0
        %v2977 = vsel %vm2941, 1, 0
        %v2978 = vsel %vm2942, 1, 0
        %v2979 = vsel %vm2943, 1, 0
        %v2980 = vsel %vm2944, 1, 0
        %v2981 = vsel %vm2945, 1, 0
        %v2982 = vsel %vm2946, 1, 0
        %v2983 = vsel %vm2947, 1, 0
        %v2984 = vsel %vm2948, 1, 0
        %v2985 = vcvt.s32.f32 %v2949
        %v2986 = vcvt.s32.f32 %v2950
        %v2987 = vcvt.s32.f32 %v2951
        %v2988 = vcvt.s32.f32 %v2952
        %v2989 = vcvt.s32.f32 %v2953
        %v2990 = vcvt.s32.f32 %v2954
        %v2991 = vcvt.s32.f32 %v2955
        %v2992 = vcvt.s32.f32 %v2956
        %v2993 = vcvt.s32.f32 %v2957
        %v2994 = vcvt.s32.f32 %v2958
        %v2995 = vcvt.s32.f32 %v2959
        %v2996 = vcvt.s32.f32 %v2960
        %v2997 = vcvt.s32.f32 %v2961
        %v2998 = vcvt.s32.f32 %v2962
        %v2999 = vcvt.s32.f32 %v2963
        %v3000 = vcvt.s32.f32 %v2964
        %v3001 = vcvt.s32.f32 %v2965
        %v3002 = vcvt.s32.f32 %v2966
        %v3003 = vcvt.s32.f32 %v2967
        %v3004 = vcvt.s32.f32 %v2968
        %v3005 = vcvt.s32.f32 %v2969
        %v3006 = vcvt.s32.f32 %v2970
        %v3007 = vcvt.s32.f32 %v2971
        %v3008 = vcvt.s32.f32 %v2972
        %v3009 = vcvt.s32.f32 %v2973
        %v3010 = vcvt.s32.f32 %v2974
        %v3011 = vcvt.s32.f32 %v2975
        %v3012 = vcvt.s32.f32 %v2976
        %v3013 = vcvt.s32.f32 %v2977
        %v3014 = vcvt.s32.f32 %v2978
        %v3015 = vcvt.s32.f32 %v2979
        %v3016 = vcvt.s32.f32 %v2980
        %v3017 = vcvt.s32.f32 %v2981
        %v3018 = vcvt.s32.f32 %v2982
        %v3019 = vcvt.s32.f32 %v2983
        %v3020 = vcvt.s32.f32 %v2984
        %v3021 = vmul.f32 %v2761, %v2985
        %v3022 = vmul.f32 %v2762, %v2986
        %v3023 = vmul.f32 %v2763, %v2987
        %v3024 = vmul.f32 %v2764, %v2988
        %v3025 = vmul.f32 %v2765, %v2989
        %v3026 = vmul.f32 %v2766, %v2990
        %v3027 = vmul.f32 %v2767, %v2991
        %v3028 = vmul.f32 %v2768, %v2992
        %v3029 = vmul.f32 %v2769, %v2993
        %v3030 = vmul.f32 %v2770, %v2994
        %v3031 = vmul.f32 %v2771, %v2995
        %v3032 = vmul.f32 %v2772, %v2996
        %v3033 = vmul.f32 %v2773, %v2997
        %v3034 = vmul.f32 %v2774, %v2998
        %v3035 = vmul.f32 %v2775, %v2999
        %v3036 = vmul.f32 %v2776, %v3000
        %v3037 = vmul.f32 %v2777, %v3001
        %v3038 = vmul.f32 %v2778, %v3002
        %v3039 = vmul.f32 %v2779, %v3003
        %v3040 = vmul.f32 %v2780, %v3004
        %v3041 = vmul.f32 %v2781, %v3005
        %v3042 = vmul.f32 %v2782, %v3006
        %v3043 = vmul.f32 %v2783, %v3007
        %v3044 = vmul.f32 %v2784, %v3008
        %v3045 = vmul.f32 %v2785, %v3009
        %v3046 = vmul.f32 %v2786, %v3010
        %v3047 = vmul.f32 %v2787, %v3011
        %v3048 = vmul.f32 %v2788, %v3012
        %v3049 = vmul.f32 %v2789, %v3013
        %v3050 = vmul.f32 %v2790, %v3014
        %v3051 = vmul.f32 %v2791, %v3015
        %v3052 = vmul.f32 %v2792, %v3016
        %v3053 = vmul.f32 %v2793, %v3017
        %v3054 = vmul.f32 %v2794, %v3018
        %v3055 = vmul.f32 %v2795, %v3019
        %v3056 = vmul.f32 %v2796, %v3020
        %v3057 = vpack.c.bf16 %v3022, %v3021
        %v3058 = vpack.c.bf16 %v3024, %v3023
        %v3059 = vpack.c.bf16 %v3026, %v3025
        %v3060 = vpack.c.bf16 %v3028, %v3027
        %v3061 = vpack.c.bf16 %v3030, %v3029
        %v3062 = vpack.c.bf16 %v3032, %v3031
        %v3063 = vpack.c.bf16 %v3034, %v3033
        %v3064 = vpack.c.bf16 %v3036, %v3035
        %v3065 = vpack.c.bf16 %v3038, %v3037
        %v3066 = vpack.c.bf16 %v3040, %v3039
        %v3067 = vpack.c.bf16 %v3042, %v3041
        %v3068 = vpack.c.bf16 %v3044, %v3043
        %v3069 = vpack.c.bf16 %v3046, %v3045
        %v3070 = vpack.c.bf16 %v3048, %v3047
        %v3071 = vpack.c.bf16 %v3050, %v3049
        %v3072 = vpack.c.bf16 %v3052, %v3051
        %v3073 = vpack.c.bf16 %v3054, %v3053
        %v3074 = vpack.c.bf16 %v3056, %v3055
        %v3076 = vshrl.u32 %v3057, 16
        %v3078 = vrot.slane %v3076, 7
        %v3079 = vshll.u32 %v3057, 16
        %v3081 = vor.u32 %v3078, %v3079
        %v3083 = vshrl.u32 %v3058, 16
        %v3085 = vrot.slane %v3083, 7
        %v3086 = vshll.u32 %v3058, 16
        %v3088 = vor.u32 %v3085, %v3086
        %v3090 = vshrl.u32 %v3059, 16
        %v3092 = vrot.slane %v3090, 7
        %v3093 = vshll.u32 %v3059, 16
        %v3095 = vor.u32 %v3092, %v3093
        %v3097 = vshrl.u32 %v3060, 16
        %v3099 = vrot.slane %v3097, 7
        %v3100 = vshll.u32 %v3060, 16
        %v3102 = vor.u32 %v3099, %v3100
        %v3104 = vshrl.u32 %v3061, 16
        %v3106 = vrot.slane %v3104, 7
        %v3107 = vshll.u32 %v3061, 16
        %v3109 = vor.u32 %v3106, %v3107
        %v3111 = vshrl.u32 %v3062, 16
        %v3113 = vrot.slane %v3111, 7
        %v3114 = vshll.u32 %v3062, 16
        %v3116 = vor.u32 %v3113, %v3114
        %v3118 = vshrl.u32 %v3063, 16
        %v3120 = vrot.slane %v3118, 7
        %v3121 = vshll.u32 %v3063, 16
        %v3123 = vor.u32 %v3120, %v3121
        %v3125 = vshrl.u32 %v3064, 16
        %v3127 = vrot.slane %v3125, 7
        %v3128 = vshll.u32 %v3064, 16
        %v3130 = vor.u32 %v3127, %v3128
        %v3132 = vshrl.u32 %v3065, 16
        %v3134 = vrot.slane %v3132, 7
        %v3135 = vshll.u32 %v3065, 16
        %v3137 = vor.u32 %v3134, %v3135
        %v3139 = vshrl.u32 %v3066, 16
        %v3141 = vrot.slane %v3139, 7
        %v3142 = vshll.u32 %v3066, 16
        %v3144 = vor.u32 %v3141, %v3142
        %v3146 = vshrl.u32 %v3067, 16
        %v3148 = vrot.slane %v3146, 7
        %v3149 = vshll.u32 %v3067, 16
        %v3151 = vor.u32 %v3148, %v3149
        %v3153 = vshrl.u32 %v3068, 16
        %v3155 = vrot.slane %v3153, 7
        %v3156 = vshll.u32 %v3068, 16
        %v3158 = vor.u32 %v3155, %v3156
        %v3160 = vshrl.u32 %v3069, 16
        %v3162 = vrot.slane %v3160, 7
        %v3163 = vshll.u32 %v3069, 16
        %v3165 = vor.u32 %v3162, %v3163
        %v3167 = vshrl.u32 %v3070, 16
        %v3169 = vrot.slane %v3167, 7
        %v3170 = vshll.u32 %v3070, 16
        %v3172 = vor.u32 %v3169, %v3170
        %v3174 = vshrl.u32 %v3071, 16
        %v3176 = vrot.slane %v3174, 7
        %v3177 = vshll.u32 %v3071, 16
        %v3179 = vor.u32 %v3176, %v3177
        %v3181 = vshrl.u32 %v3072, 16
        %v3183 = vrot.slane %v3181, 7
        %v3184 = vshll.u32 %v3072, 16
        %v3186 = vor.u32 %v3183, %v3184
        %v3188 = vshrl.u32 %v3073, 16
        %v3190 = vrot.slane %v3188, 7
        %v3191 = vshll.u32 %v3073, 16
        %v3193 = vor.u32 %v3190, %v3191
        %v3195 = vshrl.u32 %v3074, 16
        %v3197 = vrot.slane %v3195, 7
        %v3198 = vshll.u32 %v3074, 16
        %v3200 = vor.u32 %v3197, %v3198
        %vm3219 = vcmask 1040384
        %vm3220 = vsmask.f32 256
        %vm3221 = vmand %vm3219, %vm3220
        %v3222 = vsel %vm3221, 0, %v3081
        %v3223 = vsel %vm3221, 0, %v3088
        %v3224 = vsel %vm3221, 0, %v3095
        %v3225 = vsel %vm3221, 0, %v3102
        %v3226 = vsel %vm3221, 0, %v3109
        %v3227 = vsel %vm3221, 0, %v3116
        %v3228 = vsel %vm3221, 0, %v3123
        %v3229 = vsel %vm3221, 0, %v3130
        %v3230 = vsel %vm3221, 0, %v3137
        %v3231 = vsel %vm3221, 0, %v3144
        %v3232 = vsel %vm3221, 0, %v3151
        %v3233 = vsel %vm3221, 0, %v3158
        %v3234 = vsel %vm3221, 0, %v3165
        %v3235 = vsel %vm3221, 0, %v3172
        %v3236 = vsel %vm3221, 0, %v3179
        %v3237 = vsel %vm3221, 0, %v3186
        %v3238 = vsel %vm3221, 0, %v3193
        %v3239 = vsel %vm3221, 0, %v3200
        %v3240 = vrot.slane %v3079, 1
        %v3241 = vor.u32 %v3076, %v3240
        %v3242 = vrot.slane %v3086, 1
        %v3243 = vor.u32 %v3083, %v3242
        %v3244 = vrot.slane %v3093, 1
        %v3245 = vor.u32 %v3090, %v3244
        %v3246 = vrot.slane %v3100, 1
        %v3247 = vor.u32 %v3097, %v3246
        %v3248 = vrot.slane %v3107, 1
        %v3249 = vor.u32 %v3104, %v3248
        %v3250 = vrot.slane %v3114, 1
        %v3251 = vor.u32 %v3111, %v3250
        %v3252 = vrot.slane %v3121, 1
        %v3253 = vor.u32 %v3118, %v3252
        %v3254 = vrot.slane %v3128, 1
        %v3255 = vor.u32 %v3125, %v3254
        %v3256 = vrot.slane %v3135, 1
        %v3257 = vor.u32 %v3132, %v3256
        %v3258 = vrot.slane %v3142, 1
        %v3259 = vor.u32 %v3139, %v3258
        %v3260 = vrot.slane %v3149, 1
        %v3261 = vor.u32 %v3146, %v3260
        %v3262 = vrot.slane %v3156, 1
        %v3263 = vor.u32 %v3153, %v3262
        %v3264 = vrot.slane %v3163, 1
        %v3265 = vor.u32 %v3160, %v3264
        %v3266 = vrot.slane %v3170, 1
        %v3267 = vor.u32 %v3167, %v3266
        %v3268 = vrot.slane %v3177, 1
        %v3269 = vor.u32 %v3174, %v3268
        %v3270 = vrot.slane %v3184, 1
        %v3271 = vor.u32 %v3181, %v3270
        %v3272 = vrot.slane %v3191, 1
        %v3273 = vor.u32 %v3188, %v3272
        %v3274 = vrot.slane %v3198, 1
        %v3275 = vor.u32 %v3195, %v3274
        %vm3294 = vcmask 1047552
        %vm3295 = vmand %vm3294, %vm657
        %v3296 = vsel %vm3295, %v3241, 0
        %v3297 = vsel %vm3295, %v3243, 0
        %v3298 = vsel %vm3295, %v3245, 0
        %v3299 = vsel %vm3295, %v3247, 0
        %v3300 = vsel %vm3295, %v3249, 0
        %v3301 = vsel %vm3295, %v3251, 0
        %v3302 = vsel %vm3295, %v3253, 0
        %v3303 = vsel %vm3295, %v3255, 0
        %v3304 = vsel %vm3295, %v3257, 0
        %v3305 = vsel %vm3295, %v3259, 0
        %v3306 = vsel %vm3295, %v3261, 0
        %v3307 = vsel %vm3295, %v3263, 0
        %v3308 = vsel %vm3295, %v3265, 0
        %v3309 = vsel %vm3295, %v3267, 0
        %v3310 = vsel %vm3295, %v3269, 0
        %v3311 = vsel %vm3295, %v3271, 0
        %v3312 = vsel %vm3295, %v3273, 0
        %v3313 = vsel %vm3295, %v3275, 0
        %v3314 = vld [vmem:[%s5] sm:$0xf]
        %v3315 = vld [vmem:[%s5 + $0x4] sm:$0xf]
        %v3316 = vld [vmem:[%s5 + $0x8] sm:$0xf]
        %v3317 = vld [vmem:[%s5 + $0xc] sm:$0xf]
        %v3318 = vld [vmem:[%s5 + $0x10] sm:$0xf]
        %v3319 = vld [vmem:[%s5 + $0x14] sm:$0xf]
        %v3320 = vld [vmem:[%s5 + $0x18] sm:$0xf]
        %v3321 = vld [vmem:[%s5 + $0x1c] sm:$0xf]
        %v3322 = vld [vmem:[%s5 + $0x20] sm:$0xf]
        %v3323 = vld [vmem:[%s5 + $0x24] sm:$0xf]
        %v3324 = vld [vmem:[%s5 + $0x28] sm:$0xf]
        %v3325 = vld [vmem:[%s5 + $0x2c] sm:$0xf]
        %v3326 = vld [vmem:[%s5 + $0x30] sm:$0xf]
        %v3327 = vld [vmem:[%s5 + $0x34] sm:$0xf]
        %v3328 = vld [vmem:[%s5 + $0x38] sm:$0xf]
        %v3329 = vld [vmem:[%s5 + $0x3c] sm:$0xf]
        %v3330 = vld [vmem:[%s5 + $0x40] sm:$0xf]
        %v3331 = vld [vmem:[%s5 + $0x44] sm:$0xf]
        %v3332 = vld [vmem:[%s5 + $0x48] sm:$0xf]
        %v3333 = vld [vmem:[%s5 + $0x4c] sm:$0xf]
        %v3334 = vld [vmem:[%s5 + $0x50] sm:$0xf]
        %v3335 = vld [vmem:[%s5 + $0x54] sm:$0xf]
        %v3336 = vld [vmem:[%s5 + $0x58] sm:$0xf]
        %v3337 = vld [vmem:[%s5 + $0x5c] sm:$0xf]
        %v3338 = vld [vmem:[%s5 + $0x60] sm:$0xf]
        %v3339 = vld [vmem:[%s5 + $0x64] sm:$0xf]
        %v3340 = vld [vmem:[%s5 + $0x68] sm:$0xf]
        %v3341 = vld [vmem:[%s5 + $0x6c] sm:$0xf]
        %v3342 = vld [vmem:[%s5 + $0x70] sm:$0xf]
        %v3343 = vld [vmem:[%s5 + $0x74] sm:$0xf]
        %v3344 = vld [vmem:[%s5 + $0x78] sm:$0xf]
        %v3345 = vld [vmem:[%s5 + $0x7c] sm:$0xf]
        %v3346 = vld [vmem:[%s5 + $0x80] sm:$0xf]
        %v3347 = vld [vmem:[%s5 + $0x84] sm:$0xf]
        %v3348 = vld [vmem:[%s5 + $0x88] sm:$0xf]
        %v3349 = vld [vmem:[%s5 + $0x8c] sm:$0xf]
        %v3350 = vld [vmem:[%s5 + $0x90] sm:$0xf]
        %v3351 = vld [vmem:[%s5 + $0x94] sm:$0xf]
        %v3352 = vld [vmem:[%s5 + $0x98] sm:$0xf]
        %v3353 = vld [vmem:[%s5 + $0x9c] sm:$0xf]
        %v3354 = vld [vmem:[%s5 + $0xa0] sm:$0xf]
        %v3355 = vld [vmem:[%s5 + $0xa4] sm:$0xf]
        %v3356 = vld [vmem:[%s5 + $0xa8] sm:$0xf]
        %v3357 = vld [vmem:[%s5 + $0xac] sm:$0xf]
        %v3358 = vld [vmem:[%s5 + $0xb0] sm:$0xf]
        %v3359 = vld [vmem:[%s5 + $0xb4] sm:$0xf]
        %v3360 = vld [vmem:[%s5 + $0xb8] sm:$0xf]
        %v3361 = vld [vmem:[%s5 + $0xbc] sm:$0xf]
        %s3362 = scalar_lea.vmem %s5, 192
        %v3363 = vld [vmem:[%s3362] sm:$0xf]
        %v3364 = vld [vmem:[%s3362 + $0x4] sm:$0xf]
        %v3365 = vld [vmem:[%s3362 + $0x8] sm:$0xf]
        %v3366 = vld [vmem:[%s3362 + $0xc] sm:$0xf]
        %v3367 = vld [vmem:[%s3362 + $0x10] sm:$0xf]
        %v3368 = vld [vmem:[%s3362 + $0x14] sm:$0xf]
        %v3369 = vld [vmem:[%s3362 + $0x18] sm:$0xf]
        %v3370 = vld [vmem:[%s3362 + $0x1c] sm:$0xf]
        %v3371 = vld [vmem:[%s3362 + $0x20] sm:$0xf]
        %v3372 = vld [vmem:[%s3362 + $0x24] sm:$0xf]
        %v3373 = vld [vmem:[%s3362 + $0x28] sm:$0xf]
        %v3374 = vld [vmem:[%s3362 + $0x2c] sm:$0xf]
        %v3375 = vld [vmem:[%s3362 + $0x30] sm:$0xf]
        %v3376 = vld [vmem:[%s3362 + $0x34] sm:$0xf]
        %v3377 = vld [vmem:[%s3362 + $0x38] sm:$0xf]
        %v3378 = vld [vmem:[%s3362 + $0x3c] sm:$0xf]
        %v3379 = vld [vmem:[%s3362 + $0x40] sm:$0xf]
        %v3380 = vld [vmem:[%s3362 + $0x44] sm:$0xf]
        %v3381 = vld [vmem:[%s3362 + $0x48] sm:$0xf]
        %v3382 = vld [vmem:[%s3362 + $0x4c] sm:$0xf]
        %v3383 = vld [vmem:[%s3362 + $0x50] sm:$0xf]
        %v3384 = vld [vmem:[%s3362 + $0x54] sm:$0xf]
        %v3385 = vld [vmem:[%s3362 + $0x58] sm:$0xf]
        %v3386 = vld [vmem:[%s3362 + $0x5c] sm:$0xf]
        %v3387 = vld [vmem:[%s3362 + $0x60] sm:$0xf]
        %v3388 = vld [vmem:[%s3362 + $0x64] sm:$0xf]
        %v3389 = vld [vmem:[%s3362 + $0x68] sm:$0xf]
        %v3390 = vld [vmem:[%s3362 + $0x6c] sm:$0xf]
        %v3391 = vld [vmem:[%s3362 + $0x70] sm:$0xf]
        %v3392 = vld [vmem:[%s3362 + $0x74] sm:$0xf]
        %v3393 = vld [vmem:[%s3362 + $0x78] sm:$0xf]
        %v3394 = vld [vmem:[%s3362 + $0x7c] sm:$0xf]
        %v3395 = vld [vmem:[%s3362 + $0x80] sm:$0xf]
        %v3396 = vld [vmem:[%s3362 + $0x84] sm:$0xf]
        %v3397 = vld [vmem:[%s3362 + $0x88] sm:$0xf]
        %v3398 = vld [vmem:[%s3362 + $0x8c] sm:$0xf]
        %v3399 = vld [vmem:[%s3362 + $0x90] sm:$0xf]
        %v3400 = vld [vmem:[%s3362 + $0x94] sm:$0xf]
        %v3401 = vld [vmem:[%s3362 + $0x98] sm:$0xf]
        %v3402 = vld [vmem:[%s3362 + $0x9c] sm:$0xf]
        %v3403 = vld [vmem:[%s3362 + $0xa0] sm:$0xf]
        %v3404 = vld [vmem:[%s3362 + $0xa4] sm:$0xf]
        %v3405 = vld [vmem:[%s3362 + $0xa8] sm:$0xf]
        %v3406 = vld [vmem:[%s3362 + $0xac] sm:$0xf]
        %v3407 = vld [vmem:[%s3362 + $0xb0] sm:$0xf]
        %v3408 = vld [vmem:[%s3362 + $0xb4] sm:$0xf]
        %v3409 = vld [vmem:[%s3362 + $0xb8] sm:$0xf]
        %v3410 = vld [vmem:[%s3362 + $0xbc] sm:$0xf]
        %v3459 = vunpack.c.l.b16 %v3363
        %v3460 = vunpack.c.l.b16 %v3364
        %v3461 = vunpack.c.l.b16 %v3365
        %v3462 = vunpack.c.l.b16 %v3366
        %v3463 = vunpack.c.l.b16 %v3367
        %v3464 = vunpack.c.l.b16 %v3368
        %v3465 = vunpack.c.l.b16 %v3369
        %v3466 = vunpack.c.l.b16 %v3370
        %v3467 = vunpack.c.l.b16 %v3371
        %v3468 = vunpack.c.l.b16 %v3372
        %v3469 = vunpack.c.l.b16 %v3373
        %v3470 = vunpack.c.l.b16 %v3374
        %v3471 = vunpack.c.l.b16 %v3375
        %v3472 = vunpack.c.l.b16 %v3376
        %v3473 = vunpack.c.l.b16 %v3377
        %v3474 = vunpack.c.l.b16 %v3378
        %v3475 = vunpack.c.l.b16 %v3379
        %v3476 = vunpack.c.l.b16 %v3380
        %v3477 = vunpack.c.l.b16 %v3381
        %v3478 = vunpack.c.l.b16 %v3382
        %v3479 = vunpack.c.l.b16 %v3383
        %v3480 = vunpack.c.l.b16 %v3384
        %v3481 = vunpack.c.l.b16 %v3385
        %v3482 = vunpack.c.l.b16 %v3386
        %v3483 = vunpack.c.l.b16 %v3387
        %v3484 = vunpack.c.l.b16 %v3388
        %v3485 = vunpack.c.l.b16 %v3389
        %v3486 = vunpack.c.l.b16 %v3390
        %v3487 = vunpack.c.l.b16 %v3391
        %v3488 = vunpack.c.l.b16 %v3392
        %v3489 = vunpack.c.l.b16 %v3393
        %v3490 = vunpack.c.l.b16 %v3394
        %v3491 = vunpack.c.l.b16 %v3395
        %v3492 = vunpack.c.l.b16 %v3396
        %v3493 = vunpack.c.l.b16 %v3397
        %v3494 = vunpack.c.l.b16 %v3398
        %v3495 = vunpack.c.l.b16 %v3399
        %v3496 = vunpack.c.l.b16 %v3400
        %v3497 = vunpack.c.l.b16 %v3401
        %v3498 = vunpack.c.l.b16 %v3402
        %v3499 = vunpack.c.l.b16 %v3403
        %v3500 = vunpack.c.l.b16 %v3404
        %v3501 = vunpack.c.l.b16 %v3405
        %v3502 = vunpack.c.l.b16 %v3406
        %v3503 = vunpack.c.l.b16 %v3407
        %v3504 = vunpack.c.l.b16 %v3408
        %v3505 = vunpack.c.l.b16 %v3409
        %v3506 = vunpack.c.l.b16 %v3410
        %v3507 = vpack.c.b16 %v3460, %v3459
        %v3508 = vpack.c.b16 %v3462, %v3461
        %v3509 = vpack.c.b16 %v3464, %v3463
        %v3510 = vpack.c.b16 %v3466, %v3465
        %v3511 = vpack.c.b16 %v3468, %v3467
        %v3512 = vpack.c.b16 %v3470, %v3469
        %v3513 = vpack.c.b16 %v3472, %v3471
        %v3514 = vpack.c.b16 %v3474, %v3473
        %v3515 = vpack.c.b16 %v3476, %v3475
        %v3516 = vpack.c.b16 %v3478, %v3477
        %v3517 = vpack.c.b16 %v3480, %v3479
        %v3518 = vpack.c.b16 %v3482, %v3481
        %v3519 = vpack.c.b16 %v3484, %v3483
        %v3520 = vpack.c.b16 %v3486, %v3485
        %v3521 = vpack.c.b16 %v3488, %v3487
        %v3522 = vpack.c.b16 %v3490, %v3489
        %v3523 = vpack.c.b16 %v3492, %v3491
        %v3524 = vpack.c.b16 %v3494, %v3493
        %v3525 = vpack.c.b16 %v3496, %v3495
        %v3526 = vpack.c.b16 %v3498, %v3497
        %v3527 = vpack.c.b16 %v3500, %v3499
        %v3528 = vpack.c.b16 %v3502, %v3501
        %v3529 = vpack.c.b16 %v3504, %v3503
        %v3530 = vpack.c.b16 %v3506, %v3505
        %3555 = vmatprep.subr.bf16.mxu0 0
        %3556 = vmatpush1.bf16.msra.mxu0 %v3514
        %3557 = vmatprep.subr.bf16.mxu0 0
        %3558 = vmatpush1.bf16.msra.mxu0 %v3513
        %3559 = vmatprep.subr.bf16.mxu0 0
        %3560 = vmatpush1.bf16.msra.mxu0 %v3512
        %3561 = vmatprep.subr.bf16.mxu0 0
        %3562 = vmatpush1.bf16.msra.mxu0 %v3511
        %3563 = vmatprep.subr.bf16.mxu0 0
        %3564 = vmatpush1.bf16.msra.mxu0 %v3510
        %3565 = vmatprep.subr.bf16.mxu0 0
        %3566 = vmatpush1.bf16.msra.mxu0 %v3509
        %3567 = vmatprep.subr.bf16.mxu0 0
        %3568 = vmatpush1.bf16.msra.mxu0 %v3508
        %3569 = vmatprep.subr.bf16.mxu0 0
        %3570 = vmatpush1.bf16.msra.mxu0 %v3507
        %3571 = vmatprep.subr.bf16.mxu0 0
        %3572 = vmatpush2.bf16.msra.mxu0 %v3522
        %3573 = vmatprep.subr.bf16.mxu0 0
        %3574 = vmatpush2.bf16.msra.mxu0 %v3521
        %3575 = vmatprep.subr.bf16.mxu0 0
        %3576 = vmatpush2.bf16.msra.mxu0 %v3520
        %3577 = vmatprep.subr.bf16.mxu0 0
        %3578 = vmatpush2.bf16.msra.mxu0 %v3519
        %3579 = vmatprep.subr.bf16.mxu0 0
        %3580 = vmatpush2.bf16.msra.mxu0 %v3518
        %3581 = vmatprep.subr.bf16.mxu0 0
        %3582 = vmatpush2.bf16.msra.mxu0 %v3517
        %3583 = vmatprep.subr.bf16.mxu0 0
        %3584 = vmatpush2.bf16.msra.mxu0 %v3516
        %3585 = vmatprep.subr.bf16.mxu0 0
        %3586 = vmatpush2.bf16.msra.mxu0 %v3515
        %3587 = vmatprep.mubr.bf16.mxu0 %v3058
        %3588 = vmatmul.mubr.bf16.gmra.mxu0 %v3223
        %v3589 = vpop.f32.mrf.mxu0
        %v3590 = vadd.f32 0.0, %v3589
        %v3591 = vpop.f32.mrf.mxu0
        %v3592 = vpop.f32.mrf.mxu0
        %v3593 = vadd.f32 0.0, %v3592
        %v3594 = vpop.f32.mrf.mxu0
        %3595 = vmatprep.mubr.bf16.mxu0 %v3059
        %3596 = vmatmul.mubr.bf16.gmra.mxu0 %v3224
        %v3597 = vpop.f32.mrf.mxu0
        %v3598 = vadd.f32 0.0, %v3597
        %v3599 = vpop.f32.mrf.mxu0
        %v3600 = vpop.f32.mrf.mxu0
        %v3601 = vadd.f32 0.0, %v3600
        %v3602 = vpop.f32.mrf.mxu0
        %3603 = vmatprep.mubr.bf16.mxu0 %v3060
        %3604 = vmatmul.mubr.bf16.gmra.mxu0 %v3225
        %v3605 = vpop.f32.mrf.mxu0
        %v3606 = vadd.f32 0.0, %v3605
        %v3607 = vpop.f32.mrf.mxu0
        %v3608 = vpop.f32.mrf.mxu0
        %v3609 = vadd.f32 0.0, %v3608
        %v3610 = vpop.f32.mrf.mxu0
        %3611 = vmatprep.mubr.bf16.mxu0 %v3061
        %3612 = vmatmul.mubr.bf16.gmra.mxu0 %v3226
        %v3613 = vpop.f32.mrf.mxu0
        %v3614 = vadd.f32 0.0, %v3613
        %v3615 = vpop.f32.mrf.mxu0
        %v3616 = vpop.f32.mrf.mxu0
        %v3617 = vadd.f32 0.0, %v3616
        %v3618 = vpop.f32.mrf.mxu0
        %3619 = vmatprep.mubr.bf16.mxu0 %v3062
        %3620 = vmatmul.mubr.bf16.gmra.mxu0 %v3227
        %v3621 = vpop.f32.mrf.mxu0
        %v3622 = vadd.f32 0.0, %v3621
        %v3623 = vpop.f32.mrf.mxu0
        %v3624 = vpop.f32.mrf.mxu0
        %v3625 = vadd.f32 0.0, %v3624
        %v3626 = vpop.f32.mrf.mxu0
        %3627 = vmatprep.mubr.bf16.mxu0 %v3063
        %3628 = vmatmul.mubr.bf16.gmra.mxu0 %v3228
        %v3629 = vpop.f32.mrf.mxu0
        %v3630 = vadd.f32 0.0, %v3629
        %v3631 = vpop.f32.mrf.mxu0
        %v3632 = vpop.f32.mrf.mxu0
        %v3633 = vadd.f32 0.0, %v3632
        %v3634 = vpop.f32.mrf.mxu0
        %3635 = vmatprep.mubr.bf16.mxu0 %v3064
        %3636 = vmatmul.mubr.bf16.gmra.mxu0 %v3229
        %v3637 = vpop.f32.mrf.mxu0
        %v3638 = vadd.f32 0.0, %v3637
        %v3639 = vpop.f32.mrf.mxu0
        %v3640 = vpop.f32.mrf.mxu0
        %v3641 = vadd.f32 0.0, %v3640
        %v3642 = vpop.f32.mrf.mxu0
        %3643 = vmatprep.mubr.bf16.mxu0 %v3065
        %3644 = vmatmul.mubr.bf16.gmra.mxu0 %v3230
        %v3645 = vpop.f32.mrf.mxu0
        %v3646 = vadd.f32 0.0, %v3645
        %v3647 = vpop.f32.mrf.mxu0
        %v3648 = vpop.f32.mrf.mxu0
        %v3649 = vadd.f32 0.0, %v3648
        %v3650 = vpop.f32.mrf.mxu0
        %3651 = vmatprep.mubr.bf16.mxu0 %v3066
        %3652 = vmatmul.mubr.bf16.gmra.mxu0 %v3231
        %v3653 = vpop.f32.mrf.mxu0
        %v3654 = vadd.f32 0.0, %v3653
        %v3655 = vpop.f32.mrf.mxu0
        %v3656 = vpop.f32.mrf.mxu0
        %v3657 = vadd.f32 0.0, %v3656
        %v3658 = vpop.f32.mrf.mxu0
        %3659 = vmatprep.mubr.bf16.mxu0 %v3067
        %3660 = vmatmul.mubr.bf16.gmra.mxu0 %v3232
        %v3661 = vpop.f32.mrf.mxu0
        %v3662 = vadd.f32 0.0, %v3661
        %v3663 = vpop.f32.mrf.mxu0
        %v3664 = vpop.f32.mrf.mxu0
        %v3665 = vadd.f32 0.0, %v3664
        %v3666 = vpop.f32.mrf.mxu0
        %3667 = vmatprep.mubr.bf16.mxu0 %v3068
        %3668 = vmatmul.mubr.bf16.gmra.mxu0 %v3233
        %v3669 = vpop.f32.mrf.mxu0
        %v3670 = vadd.f32 0.0, %v3669
        %v3671 = vpop.f32.mrf.mxu0
        %v3672 = vpop.f32.mrf.mxu0
        %v3673 = vadd.f32 0.0, %v3672
        %v3674 = vpop.f32.mrf.mxu0
        %3675 = vmatprep.mubr.bf16.mxu0 %v3069
        %3676 = vmatmul.mubr.bf16.gmra.mxu0 %v3234
        %v3677 = vpop.f32.mrf.mxu0
        %v3678 = vadd.f32 0.0, %v3677
        %v3679 = vpop.f32.mrf.mxu0
        %v3680 = vpop.f32.mrf.mxu0
        %v3681 = vadd.f32 0.0, %v3680
        %v3682 = vpop.f32.mrf.mxu0
        %3683 = vmatprep.mubr.bf16.mxu0 %v3070
        %3684 = vmatmul.mubr.bf16.gmra.mxu0 %v3235
        %v3685 = vpop.f32.mrf.mxu0
        %v3686 = vadd.f32 0.0, %v3685
        %v3687 = vpop.f32.mrf.mxu0
        %v3688 = vpop.f32.mrf.mxu0
        %v3689 = vadd.f32 0.0, %v3688
        %v3690 = vpop.f32.mrf.mxu0
        %3691 = vmatprep.mubr.bf16.mxu0 %v3071
        %3692 = vmatmul.mubr.bf16.gmra.mxu0 %v3236
        %v3693 = vpop.f32.mrf.mxu0
        %v3694 = vadd.f32 0.0, %v3693
        %v3695 = vpop.f32.mrf.mxu0
        %v3696 = vpop.f32.mrf.mxu0
        %v3697 = vadd.f32 0.0, %v3696
        %v3698 = vpop.f32.mrf.mxu0
        %3699 = vmatprep.mubr.bf16.mxu0 %v3072
        %3700 = vmatmul.mubr.bf16.gmra.mxu0 %v3237
        %v3701 = vpop.f32.mrf.mxu0
        %v3702 = vadd.f32 0.0, %v3701
        %v3703 = vpop.f32.mrf.mxu0
        %v3704 = vpop.f32.mrf.mxu0
        %v3705 = vadd.f32 0.0, %v3704
        %v3706 = vpop.f32.mrf.mxu0
        %3707 = vmatprep.mubr.bf16.mxu0 %v3073
        %3708 = vmatmul.mubr.bf16.gmra.mxu0 %v3238
        %v3709 = vpop.f32.mrf.mxu0
        %v3710 = vadd.f32 0.0, %v3709
        %v3711 = vpop.f32.mrf.mxu0
        %v3712 = vpop.f32.mrf.mxu0
        %v3713 = vadd.f32 0.0, %v3712
        %v3714 = vpop.f32.mrf.mxu0
        %3715 = vdwg.mxu0
        %3716 = vmatprep.subr.bf16.mxu0 0
        %3717 = vmatpush1.bf16.msra.mxu0 %v3530
        %3718 = vmatprep.subr.bf16.mxu0 0
        %3719 = vmatpush1.bf16.msra.mxu0 %v3529
        %3720 = vmatprep.subr.bf16.mxu0 0
        %3721 = vmatpush1.bf16.msra.mxu0 %v3528
        %3722 = vmatprep.subr.bf16.mxu0 0
        %3723 = vmatpush1.bf16.msra.mxu0 %v3527
        %3724 = vmatprep.subr.bf16.mxu0 0
        %3725 = vmatpush1.bf16.msra.mxu0 %v3526
        %3726 = vmatprep.subr.bf16.mxu0 0
        %3727 = vmatpush1.bf16.msra.mxu0 %v3525
        %3728 = vmatprep.subr.bf16.mxu0 0
        %3729 = vmatpush1.bf16.msra.mxu0 %v3524
        %3730 = vmatprep.subr.bf16.mxu0 0
        %3731 = vmatpush1.bf16.msra.mxu0 %v3523
        %3732 = vmatprep.subr.bf16.mxu0 0
        %3733 = vmatpush2.bf16.msra.mxu0 0
        %3734 = vmatprep.subr.bf16.mxu0 0
        %3735 = vmatpush2.bf16.msra.mxu0 0
        %3736 = vmatprep.subr.bf16.mxu0 0
        %3737 = vmatpush2.bf16.msra.mxu0 0
        %3738 = vmatprep.subr.bf16.mxu0 0
        %3739 = vmatpush2.bf16.msra.mxu0 0
        %3740 = vmatprep.subr.bf16.mxu0 0
        %3741 = vmatpush2.bf16.msra.mxu0 0
        %3742 = vmatprep.subr.bf16.mxu0 0
        %3743 = vmatpush2.bf16.msra.mxu0 0
        %3744 = vmatprep.subr.bf16.mxu0 0
        %3745 = vmatpush2.bf16.msra.mxu0 0
        %3746 = vmatprep.subr.bf16.mxu0 0
        %3747 = vmatpush2.bf16.msra.mxu0 0
        %3748 = vmatprep.mubr.bf16.mxu0 0
        %3749 = vmatmul.mubr.bf16.gmra.mxu0 %v3297
        %v3750 = vpop.f32.mrf.mxu0
        %v3751 = vadd.f32 %v3590, %v3750
        %v3752 = vpop.f32.mrf.mxu0
        %v3753 = vpop.f32.mrf.mxu0
        %v3754 = vadd.f32 %v3593, %v3753
        %v3755 = vpop.f32.mrf.mxu0
        %3756 = vmatprep.mubr.bf16.mxu0 0
        %3757 = vmatmul.mubr.bf16.gmra.mxu0 %v3298
        %v3758 = vpop.f32.mrf.mxu0
        %v3759 = vadd.f32 %v3598, %v3758
        %v3760 = vpop.f32.mrf.mxu0
        %v3761 = vpop.f32.mrf.mxu0
        %v3762 = vadd.f32 %v3601, %v3761
        %v3763 = vpop.f32.mrf.mxu0
        %3764 = vmatprep.mubr.bf16.mxu0 0
        %3765 = vmatmul.mubr.bf16.gmra.mxu0 %v3299
        %v3766 = vpop.f32.mrf.mxu0
        %v3767 = vadd.f32 %v3606, %v3766
        %v3768 = vpop.f32.mrf.mxu0
        %v3769 = vpop.f32.mrf.mxu0
        %v3770 = vadd.f32 %v3609, %v3769
        %v3771 = vpop.f32.mrf.mxu0
        %3772 = vmatprep.mubr.bf16.mxu0 0
        %3773 = vmatmul.mubr.bf16.gmra.mxu0 %v3300
        %v3774 = vpop.f32.mrf.mxu0
        %v3775 = vadd.f32 %v3614, %v3774
        %v3776 = vpop.f32.mrf.mxu0
        %v3777 = vpop.f32.mrf.mxu0
        %v3778 = vadd.f32 %v3617, %v3777
        %v3779 = vpop.f32.mrf.mxu0
        %3780 = vmatprep.mubr.bf16.mxu0 0
        %3781 = vmatmul.mubr.bf16.gmra.mxu0 %v3301
        %v3782 = vpop.f32.mrf.mxu0
        %v3783 = vadd.f32 %v3622, %v3782
        %v3784 = vpop.f32.mrf.mxu0
        %v3785 = vpop.f32.mrf.mxu0
        %v3786 = vadd.f32 %v3625, %v3785
        %v3787 = vpop.f32.mrf.mxu0
        %3788 = vmatprep.mubr.bf16.mxu0 0
        %3789 = vmatmul.mubr.bf16.gmra.mxu0 %v3302
        %v3790 = vpop.f32.mrf.mxu0
        %v3791 = vadd.f32 %v3630, %v3790
        %v3792 = vpop.f32.mrf.mxu0
        %v3793 = vpop.f32.mrf.mxu0
        %v3794 = vadd.f32 %v3633, %v3793
        %v3795 = vpop.f32.mrf.mxu0
        %3796 = vmatprep.mubr.bf16.mxu0 0
        %3797 = vmatmul.mubr.bf16.gmra.mxu0 %v3303
        %v3798 = vpop.f32.mrf.mxu0
        %v3799 = vadd.f32 %v3638, %v3798
        %v3800 = vpop.f32.mrf.mxu0
        %v3801 = vpop.f32.mrf.mxu0
        %v3802 = vadd.f32 %v3641, %v3801
        %v3803 = vpop.f32.mrf.mxu0
        %3804 = vmatprep.mubr.bf16.mxu0 0
        %3805 = vmatmul.mubr.bf16.gmra.mxu0 %v3304
        %v3806 = vpop.f32.mrf.mxu0
        %v3807 = vadd.f32 %v3646, %v3806
        %v3808 = vpop.f32.mrf.mxu0
        %v3809 = vpop.f32.mrf.mxu0
        %v3810 = vadd.f32 %v3649, %v3809
        %v3811 = vpop.f32.mrf.mxu0
        %3812 = vmatprep.mubr.bf16.mxu0 0
        %3813 = vmatmul.mubr.bf16.gmra.mxu0 %v3305
        %v3814 = vpop.f32.mrf.mxu0
        %v3815 = vadd.f32 %v3654, %v3814
        %v3816 = vpop.f32.mrf.mxu0
        %v3817 = vpop.f32.mrf.mxu0
        %v3818 = vadd.f32 %v3657, %v3817
        %v3819 = vpop.f32.mrf.mxu0
        %3820 = vmatprep.mubr.bf16.mxu0 0
        %3821 = vmatmul.mubr.bf16.gmra.mxu0 %v3306
        %v3822 = vpop.f32.mrf.mxu0
        %v3823 = vadd.f32 %v3662, %v3822
        %v3824 = vpop.f32.mrf.mxu0
        %v3825 = vpop.f32.mrf.mxu0
        %v3826 = vadd.f32 %v3665, %v3825
        %v3827 = vpop.f32.mrf.mxu0
        %3828 = vmatprep.mubr.bf16.mxu0 0
        %3829 = vmatmul.mubr.bf16.gmra.mxu0 %v3307
        %v3830 = vpop.f32.mrf.mxu0
        %v3831 = vadd.f32 %v3670, %v3830
        %v3832 = vpop.f32.mrf.mxu0
        %v3833 = vpop.f32.mrf.mxu0
        %v3834 = vadd.f32 %v3673, %v3833
        %v3835 = vpop.f32.mrf.mxu0
        %3836 = vmatprep.mubr.bf16.mxu0 0
        %3837 = vmatmul.mubr.bf16.gmra.mxu0 %v3308
        %v3838 = vpop.f32.mrf.mxu0
        %v3839 = vadd.f32 %v3678, %v3838
        %v3840 = vpop.f32.mrf.mxu0
        %v3841 = vpop.f32.mrf.mxu0
        %v3842 = vadd.f32 %v3681, %v3841
        %v3843 = vpop.f32.mrf.mxu0
        %3844 = vmatprep.mubr.bf16.mxu0 0
        %3845 = vmatmul.mubr.bf16.gmra.mxu0 %v3309
        %v3846 = vpop.f32.mrf.mxu0
        %v3847 = vadd.f32 %v3686, %v3846
        %v3848 = vpop.f32.mrf.mxu0
        %v3849 = vpop.f32.mrf.mxu0
        %v3850 = vadd.f32 %v3689, %v3849
        %v3851 = vpop.f32.mrf.mxu0
        %3852 = vmatprep.mubr.bf16.mxu0 0
        %3853 = vmatmul.mubr.bf16.gmra.mxu0 %v3310
        %v3854 = vpop.f32.mrf.mxu0
        %v3855 = vadd.f32 %v3694, %v3854
        %v3856 = vpop.f32.mrf.mxu0
        %v3857 = vpop.f32.mrf.mxu0
        %v3858 = vadd.f32 %v3697, %v3857
        %v3859 = vpop.f32.mrf.mxu0
        %3860 = vmatprep.mubr.bf16.mxu0 0
        %3861 = vmatmul.mubr.bf16.gmra.mxu0 %v3311
        %v3862 = vpop.f32.mrf.mxu0
        %v3863 = vadd.f32 %v3702, %v3862
        %v3864 = vpop.f32.mrf.mxu0
        %v3865 = vpop.f32.mrf.mxu0
        %v3866 = vadd.f32 %v3705, %v3865
        %v3867 = vpop.f32.mrf.mxu0
        %3868 = vmatprep.mubr.bf16.mxu0 0
        %3869 = vmatmul.mubr.bf16.gmra.mxu0 %v3312
        %v3870 = vpop.f32.mrf.mxu0
        %v3871 = vadd.f32 %v3710, %v3870
        %v3872 = vpop.f32.mrf.mxu0
        %v3873 = vpop.f32.mrf.mxu0
        %v3874 = vadd.f32 %v3713, %v3873
        %v3875 = vpop.f32.mrf.mxu0
        %3876 = vdwg.mxu0
        %v3925 = vunpack.c.l.b16 %v3314
        %v3926 = vunpack.c.l.b16 %v3315
        %v3927 = vunpack.c.l.b16 %v3316
        %v3928 = vunpack.c.l.b16 %v3317
        %v3929 = vunpack.c.l.b16 %v3318
        %v3930 = vunpack.c.l.b16 %v3319
        %v3931 = vunpack.c.l.b16 %v3320
        %v3932 = vunpack.c.l.b16 %v3321
        %v3933 = vunpack.c.l.b16 %v3322
        %v3934 = vunpack.c.l.b16 %v3323
        %v3935 = vunpack.c.l.b16 %v3324
        %v3936 = vunpack.c.l.b16 %v3325
        %v3937 = vunpack.c.l.b16 %v3326
        %v3938 = vunpack.c.l.b16 %v3327
        %v3939 = vunpack.c.l.b16 %v3328
        %v3940 = vunpack.c.l.b16 %v3329
        %v3941 = vunpack.c.l.b16 %v3330
        %v3942 = vunpack.c.l.b16 %v3331
        %v3943 = vunpack.c.l.b16 %v3332
        %v3944 = vunpack.c.l.b16 %v3333
        %v3945 = vunpack.c.l.b16 %v3334
        %v3946 = vunpack.c.l.b16 %v3335
        %v3947 = vunpack.c.l.b16 %v3336
        %v3948 = vunpack.c.l.b16 %v3337
        %v3949 = vunpack.c.l.b16 %v3338
        %v3950 = vunpack.c.l.b16 %v3339
        %v3951 = vunpack.c.l.b16 %v3340
        %v3952 = vunpack.c.l.b16 %v3341
        %v3953 = vunpack.c.l.b16 %v3342
        %v3954 = vunpack.c.l.b16 %v3343
        %v3955 = vunpack.c.l.b16 %v3344
        %v3956 = vunpack.c.l.b16 %v3345
        %v3957 = vunpack.c.l.b16 %v3346
        %v3958 = vunpack.c.l.b16 %v3347
        %v3959 = vunpack.c.l.b16 %v3348
        %v3960 = vunpack.c.l.b16 %v3349
        %v3961 = vunpack.c.l.b16 %v3350
        %v3962 = vunpack.c.l.b16 %v3351
        %v3963 = vunpack.c.l.b16 %v3352
        %v3964 = vunpack.c.l.b16 %v3353
        %v3965 = vunpack.c.l.b16 %v3354
        %v3966 = vunpack.c.l.b16 %v3355
        %v3967 = vunpack.c.l.b16 %v3356
        %v3968 = vunpack.c.l.b16 %v3357
        %v3969 = vunpack.c.l.b16 %v3358
        %v3970 = vunpack.c.l.b16 %v3359
        %v3971 = vunpack.c.l.b16 %v3360
        %v3972 = vunpack.c.l.b16 %v3361
        %v3973 = vpack.c.b16 %v3926, %v3925
        %v3974 = vpack.c.b16 %v3928, %v3927
        %v3975 = vpack.c.b16 %v3930, %v3929
        %v3976 = vpack.c.b16 %v3932, %v3931
        %v3977 = vpack.c.b16 %v3934, %v3933
        %v3978 = vpack.c.b16 %v3936, %v3935
        %v3979 = vpack.c.b16 %v3938, %v3937
        %v3980 = vpack.c.b16 %v3940, %v3939
        %v3981 = vpack.c.b16 %v3942, %v3941
        %v3982 = vpack.c.b16 %v3944, %v3943
        %v3983 = vpack.c.b16 %v3946, %v3945
        %v3984 = vpack.c.b16 %v3948, %v3947
        %v3985 = vpack.c.b16 %v3950, %v3949
        %v3986 = vpack.c.b16 %v3952, %v3951
        %v3987 = vpack.c.b16 %v3954, %v3953
        %v3988 = vpack.c.b16 %v3956, %v3955
        %v3989 = vpack.c.b16 %v3958, %v3957
        %v3990 = vpack.c.b16 %v3960, %v3959
        %v3991 = vpack.c.b16 %v3962, %v3961
        %v3992 = vpack.c.b16 %v3964, %v3963
        %v3993 = vpack.c.b16 %v3966, %v3965
        %v3994 = vpack.c.b16 %v3968, %v3967
        %v3995 = vpack.c.b16 %v3970, %v3969
        %v3996 = vpack.c.b16 %v3972, %v3971
        %4021 = vmatprep.subr.bf16.mxu0 0
        %4022 = vmatpush1.bf16.msra.mxu0 %v3980
        %4023 = vmatprep.subr.bf16.mxu0 0
        %4024 = vmatpush1.bf16.msra.mxu0 %v3979
        %4025 = vmatprep.subr.bf16.mxu0 0
        %4026 = vmatpush1.bf16.msra.mxu0 %v3978
        %4027 = vmatprep.subr.bf16.mxu0 0
        %4028 = vmatpush1.bf16.msra.mxu0 %v3977
        %4029 = vmatprep.subr.bf16.mxu0 0
        %4030 = vmatpush1.bf16.msra.mxu0 %v3976
        %4031 = vmatprep.subr.bf16.mxu0 0
        %4032 = vmatpush1.bf16.msra.mxu0 %v3975
        %4033 = vmatprep.subr.bf16.mxu0 0
        %4034 = vmatpush1.bf16.msra.mxu0 %v3974
        %4035 = vmatprep.subr.bf16.mxu0 0
        %4036 = vmatpush1.bf16.msra.mxu0 %v3973
        %4037 = vmatprep.subr.bf16.mxu0 0
        %4038 = vmatpush2.bf16.msra.mxu0 %v3988
        %4039 = vmatprep.subr.bf16.mxu0 0
        %4040 = vmatpush2.bf16.msra.mxu0 %v3987
        %4041 = vmatprep.subr.bf16.mxu0 0
        %4042 = vmatpush2.bf16.msra.mxu0 %v3986
        %4043 = vmatprep.subr.bf16.mxu0 0
        %4044 = vmatpush2.bf16.msra.mxu0 %v3985
        %4045 = vmatprep.subr.bf16.mxu0 0
        %4046 = vmatpush2.bf16.msra.mxu0 %v3984
        %4047 = vmatprep.subr.bf16.mxu0 0
        %4048 = vmatpush2.bf16.msra.mxu0 %v3983
        %4049 = vmatprep.subr.bf16.mxu0 0
        %4050 = vmatpush2.bf16.msra.mxu0 %v3982
        %4051 = vmatprep.subr.bf16.mxu0 0
        %4052 = vmatpush2.bf16.msra.mxu0 %v3981
        %4053 = vmatprep.mubr.bf16.mxu0 %v3057
        %4054 = vmatmul.mubr.bf16.gmra.mxu0 %v3222
        %v4055 = vpop.f32.mrf.mxu0
        %v4056 = vadd.f32 %v3751, %v4055
        %v4057 = vpop.f32.mrf.mxu0
        %v4058 = vpop.f32.mrf.mxu0
        %v4059 = vadd.f32 %v3754, %v4058
        %v4060 = vpop.f32.mrf.mxu0
        %4061 = vmatprep.mubr.bf16.mxu0 %v3058
        %4062 = vmatmul.mubr.bf16.gmra.mxu0 %v3223
        %v4063 = vpop.f32.mrf.mxu0
        %v4064 = vadd.f32 %v3759, %v4063
        %v4065 = vpop.f32.mrf.mxu0
        %v4066 = vpop.f32.mrf.mxu0
        %v4067 = vadd.f32 %v3762, %v4066
        %v4068 = vpop.f32.mrf.mxu0
        %4069 = vmatprep.mubr.bf16.mxu0 %v3059
        %4070 = vmatmul.mubr.bf16.gmra.mxu0 %v3224
        %v4071 = vpop.f32.mrf.mxu0
        %v4072 = vadd.f32 %v3767, %v4071
        %v4073 = vpop.f32.mrf.mxu0
        %v4074 = vpop.f32.mrf.mxu0
        %v4075 = vadd.f32 %v3770, %v4074
        %v4076 = vpop.f32.mrf.mxu0
        %4077 = vmatprep.mubr.bf16.mxu0 %v3060
        %4078 = vmatmul.mubr.bf16.gmra.mxu0 %v3225
        %v4079 = vpop.f32.mrf.mxu0
        %v4080 = vadd.f32 %v3775, %v4079
        %v4081 = vpop.f32.mrf.mxu0
        %v4082 = vpop.f32.mrf.mxu0
        %v4083 = vadd.f32 %v3778, %v4082
        %v4084 = vpop.f32.mrf.mxu0
        %4085 = vmatprep.mubr.bf16.mxu0 %v3061
        %4086 = vmatmul.mubr.bf16.gmra.mxu0 %v3226
        %v4087 = vpop.f32.mrf.mxu0
        %v4088 = vadd.f32 %v3783, %v4087
        %v4089 = vpop.f32.mrf.mxu0
        %v4090 = vpop.f32.mrf.mxu0
        %v4091 = vadd.f32 %v3786, %v4090
        %v4092 = vpop.f32.mrf.mxu0
        %4093 = vmatprep.mubr.bf16.mxu0 %v3062
        %4094 = vmatmul.mubr.bf16.gmra.mxu0 %v3227
        %v4095 = vpop.f32.mrf.mxu0
        %v4096 = vadd.f32 %v3791, %v4095
        %v4097 = vpop.f32.mrf.mxu0
        %v4098 = vpop.f32.mrf.mxu0
        %v4099 = vadd.f32 %v3794, %v4098
        %v4100 = vpop.f32.mrf.mxu0
        %4101 = vmatprep.mubr.bf16.mxu0 %v3063
        %4102 = vmatmul.mubr.bf16.gmra.mxu0 %v3228
        %v4103 = vpop.f32.mrf.mxu0
        %v4104 = vadd.f32 %v3799, %v4103
        %v4105 = vpop.f32.mrf.mxu0
        %v4106 = vpop.f32.mrf.mxu0
        %v4107 = vadd.f32 %v3802, %v4106
        %v4108 = vpop.f32.mrf.mxu0
        %4109 = vmatprep.mubr.bf16.mxu0 %v3064
        %4110 = vmatmul.mubr.bf16.gmra.mxu0 %v3229
        %v4111 = vpop.f32.mrf.mxu0
        %v4112 = vadd.f32 %v3807, %v4111
        %v4113 = vpop.f32.mrf.mxu0
        %v4114 = vpop.f32.mrf.mxu0
        %v4115 = vadd.f32 %v3810, %v4114
        %v4116 = vpop.f32.mrf.mxu0
        %4117 = vmatprep.mubr.bf16.mxu0 %v3065
        %4118 = vmatmul.mubr.bf16.gmra.mxu0 %v3230
        %v4119 = vpop.f32.mrf.mxu0
        %v4120 = vadd.f32 %v3815, %v4119
        %v4121 = vpop.f32.mrf.mxu0
        %v4122 = vpop.f32.mrf.mxu0
        %v4123 = vadd.f32 %v3818, %v4122
        %v4124 = vpop.f32.mrf.mxu0
        %4125 = vmatprep.mubr.bf16.mxu0 %v3066
        %4126 = vmatmul.mubr.bf16.gmra.mxu0 %v3231
        %v4127 = vpop.f32.mrf.mxu0
        %v4128 = vadd.f32 %v3823, %v4127
        %v4129 = vpop.f32.mrf.mxu0
        %v4130 = vpop.f32.mrf.mxu0
        %v4131 = vadd.f32 %v3826, %v4130
        %v4132 = vpop.f32.mrf.mxu0
        %4133 = vmatprep.mubr.bf16.mxu0 %v3067
        %4134 = vmatmul.mubr.bf16.gmra.mxu0 %v3232
        %v4135 = vpop.f32.mrf.mxu0
        %v4136 = vadd.f32 %v3831, %v4135
        %v4137 = vpop.f32.mrf.mxu0
        %v4138 = vpop.f32.mrf.mxu0
        %v4139 = vadd.f32 %v3834, %v4138
        %v4140 = vpop.f32.mrf.mxu0
        %4141 = vmatprep.mubr.bf16.mxu0 %v3068
        %4142 = vmatmul.mubr.bf16.gmra.mxu0 %v3233
        %v4143 = vpop.f32.mrf.mxu0
        %v4144 = vadd.f32 %v3839, %v4143
        %v4145 = vpop.f32.mrf.mxu0
        %v4146 = vpop.f32.mrf.mxu0
        %v4147 = vadd.f32 %v3842, %v4146
        %v4148 = vpop.f32.mrf.mxu0
        %4149 = vmatprep.mubr.bf16.mxu0 %v3069
        %4150 = vmatmul.mubr.bf16.gmra.mxu0 %v3234
        %v4151 = vpop.f32.mrf.mxu0
        %v4152 = vadd.f32 %v3847, %v4151
        %v4153 = vpop.f32.mrf.mxu0
        %v4154 = vpop.f32.mrf.mxu0
        %v4155 = vadd.f32 %v3850, %v4154
        %v4156 = vpop.f32.mrf.mxu0
        %4157 = vmatprep.mubr.bf16.mxu0 %v3070
        %4158 = vmatmul.mubr.bf16.gmra.mxu0 %v3235
        %v4159 = vpop.f32.mrf.mxu0
        %v4160 = vadd.f32 %v3855, %v4159
        %v4161 = vpop.f32.mrf.mxu0
        %v4162 = vpop.f32.mrf.mxu0
        %v4163 = vadd.f32 %v3858, %v4162
        %v4164 = vpop.f32.mrf.mxu0
        %4165 = vmatprep.mubr.bf16.mxu0 %v3071
        %4166 = vmatmul.mubr.bf16.gmra.mxu0 %v3236
        %v4167 = vpop.f32.mrf.mxu0
        %v4168 = vadd.f32 %v3863, %v4167
        %v4169 = vpop.f32.mrf.mxu0
        %v4170 = vpop.f32.mrf.mxu0
        %v4171 = vadd.f32 %v3866, %v4170
        %v4172 = vpop.f32.mrf.mxu0
        %4173 = vmatprep.mubr.bf16.mxu0 %v3072
        %4174 = vmatmul.mubr.bf16.gmra.mxu0 %v3237
        %v4175 = vpop.f32.mrf.mxu0
        %v4176 = vadd.f32 %v3871, %v4175
        %v4177 = vpop.f32.mrf.mxu0
        %v4178 = vpop.f32.mrf.mxu0
        %v4179 = vadd.f32 %v3874, %v4178
        %v4180 = vpop.f32.mrf.mxu0
        %4181 = vdwg.mxu0
        %4182 = vmatprep.subr.bf16.mxu0 0
        %4183 = vmatpush1.bf16.msra.mxu0 %v3996
        %4184 = vmatprep.subr.bf16.mxu0 0
        %4185 = vmatpush1.bf16.msra.mxu0 %v3995
        %4186 = vmatprep.subr.bf16.mxu0 0
        %4187 = vmatpush1.bf16.msra.mxu0 %v3994
        %4188 = vmatprep.subr.bf16.mxu0 0
        %4189 = vmatpush1.bf16.msra.mxu0 %v3993
        %4190 = vmatprep.subr.bf16.mxu0 0
        %4191 = vmatpush1.bf16.msra.mxu0 %v3992
        %4192 = vmatprep.subr.bf16.mxu0 0
        %4193 = vmatpush1.bf16.msra.mxu0 %v3991
        %4194 = vmatprep.subr.bf16.mxu0 0
        %4195 = vmatpush1.bf16.msra.mxu0 %v3990
        %4196 = vmatprep.subr.bf16.mxu0 0
        %4197 = vmatpush1.bf16.msra.mxu0 %v3989
        %4198 = vmatprep.subr.bf16.mxu0 0
        %4199 = vmatpush2.bf16.msra.mxu0 0
        %4200 = vmatprep.subr.bf16.mxu0 0
        %4201 = vmatpush2.bf16.msra.mxu0 0
        %4202 = vmatprep.subr.bf16.mxu0 0
        %4203 = vmatpush2.bf16.msra.mxu0 0
        %4204 = vmatprep.subr.bf16.mxu0 0
        %4205 = vmatpush2.bf16.msra.mxu0 0
        %4206 = vmatprep.subr.bf16.mxu0 0
        %4207 = vmatpush2.bf16.msra.mxu0 0
        %4208 = vmatprep.subr.bf16.mxu0 0
        %4209 = vmatpush2.bf16.msra.mxu0 0
        %4210 = vmatprep.subr.bf16.mxu0 0
        %4211 = vmatpush2.bf16.msra.mxu0 0
        %4212 = vmatprep.subr.bf16.mxu0 0
        %4213 = vmatpush2.bf16.msra.mxu0 0
        %4214 = vmatprep.mubr.bf16.mxu0 0
        %4215 = vmatmul.mubr.bf16.gmra.mxu0 %v3296
        %v4216 = vpop.f32.mrf.mxu0
        %v4217 = vadd.f32 %v4056, %v4216
        %v4218 = vpop.f32.mrf.mxu0
        %v4219 = vpop.f32.mrf.mxu0
        %v4220 = vadd.f32 %v4059, %v4219
        %v4221 = vpop.f32.mrf.mxu0
        %4222 = vmatprep.mubr.bf16.mxu0 0
        %4223 = vmatmul.mubr.bf16.gmra.mxu0 %v3297
        %v4224 = vpop.f32.mrf.mxu0
        %v4225 = vadd.f32 %v4064, %v4224
        %v4226 = vpop.f32.mrf.mxu0
        %v4227 = vpop.f32.mrf.mxu0
        %v4228 = vadd.f32 %v4067, %v4227
        %v4229 = vpop.f32.mrf.mxu0
        %4230 = vmatprep.mubr.bf16.mxu0 0
        %4231 = vmatmul.mubr.bf16.gmra.mxu0 %v3298
        %v4232 = vpop.f32.mrf.mxu0
        %v4233 = vadd.f32 %v4072, %v4232
        %v4234 = vpop.f32.mrf.mxu0
        %v4235 = vpop.f32.mrf.mxu0
        %v4236 = vadd.f32 %v4075, %v4235
        %v4237 = vpop.f32.mrf.mxu0
        %4238 = vmatprep.mubr.bf16.mxu0 0
        %4239 = vmatmul.mubr.bf16.gmra.mxu0 %v3299
        %v4240 = vpop.f32.mrf.mxu0
        %v4241 = vadd.f32 %v4080, %v4240
        %v4242 = vpop.f32.mrf.mxu0
        %v4243 = vpop.f32.mrf.mxu0
        %v4244 = vadd.f32 %v4083, %v4243
        %v4245 = vpop.f32.mrf.mxu0
        %4246 = vmatprep.mubr.bf16.mxu0 0
        %4247 = vmatmul.mubr.bf16.gmra.mxu0 %v3300
        %v4248 = vpop.f32.mrf.mxu0
        %v4249 = vadd.f32 %v4088, %v4248
        %v4250 = vpop.f32.mrf.mxu0
        %v4251 = vpop.f32.mrf.mxu0
        %v4252 = vadd.f32 %v4091, %v4251
        %v4253 = vpop.f32.mrf.mxu0
        %4254 = vmatprep.mubr.bf16.mxu0 0
        %4255 = vmatmul.mubr.bf16.gmra.mxu0 %v3301
        %v4256 = vpop.f32.mrf.mxu0
        %v4257 = vadd.f32 %v4096, %v4256
        %v4258 = vpop.f32.mrf.mxu0
        %v4259 = vpop.f32.mrf.mxu0
        %v4260 = vadd.f32 %v4099, %v4259
        %v4261 = vpop.f32.mrf.mxu0
        %4262 = vmatprep.mubr.bf16.mxu0 0
        %4263 = vmatmul.mubr.bf16.gmra.mxu0 %v3302
        %v4264 = vpop.f32.mrf.mxu0
        %v4265 = vadd.f32 %v4104, %v4264
        %v4266 = vpop.f32.mrf.mxu0
        %v4267 = vpop.f32.mrf.mxu0
        %v4268 = vadd.f32 %v4107, %v4267
        %v4269 = vpop.f32.mrf.mxu0
        %4270 = vmatprep.mubr.bf16.mxu0 0
        %4271 = vmatmul.mubr.bf16.gmra.mxu0 %v3303
        %v4272 = vpop.f32.mrf.mxu0
        %v4273 = vadd.f32 %v4112, %v4272
        %v4274 = vpop.f32.mrf.mxu0
        %v4275 = vpop.f32.mrf.mxu0
        %v4276 = vadd.f32 %v4115, %v4275
        %v4277 = vpop.f32.mrf.mxu0
        %4278 = vmatprep.mubr.bf16.mxu0 0
        %4279 = vmatmul.mubr.bf16.gmra.mxu0 %v3304
        %v4280 = vpop.f32.mrf.mxu0
        %v4281 = vadd.f32 %v4120, %v4280
        %v4282 = vpop.f32.mrf.mxu0
        %v4283 = vpop.f32.mrf.mxu0
        %v4284 = vadd.f32 %v4123, %v4283
        %v4285 = vpop.f32.mrf.mxu0
        %4286 = vmatprep.mubr.bf16.mxu0 0
        %4287 = vmatmul.mubr.bf16.gmra.mxu0 %v3305
        %v4288 = vpop.f32.mrf.mxu0
        %v4289 = vadd.f32 %v4128, %v4288
        %v4290 = vpop.f32.mrf.mxu0
        %v4291 = vpop.f32.mrf.mxu0
        %v4292 = vadd.f32 %v4131, %v4291
        %v4293 = vpop.f32.mrf.mxu0
        %4294 = vmatprep.mubr.bf16.mxu0 0
        %4295 = vmatmul.mubr.bf16.gmra.mxu0 %v3306
        %v4296 = vpop.f32.mrf.mxu0
        %v4297 = vadd.f32 %v4136, %v4296
        %v4298 = vpop.f32.mrf.mxu0
        %v4299 = vpop.f32.mrf.mxu0
        %v4300 = vadd.f32 %v4139, %v4299
        %v4301 = vpop.f32.mrf.mxu0
        %4302 = vmatprep.mubr.bf16.mxu0 0
        %4303 = vmatmul.mubr.bf16.gmra.mxu0 %v3307
        %v4304 = vpop.f32.mrf.mxu0
        %v4305 = vadd.f32 %v4144, %v4304
        %v4306 = vpop.f32.mrf.mxu0
        %v4307 = vpop.f32.mrf.mxu0
        %v4308 = vadd.f32 %v4147, %v4307
        %v4309 = vpop.f32.mrf.mxu0
        %4310 = vmatprep.mubr.bf16.mxu0 0
        %4311 = vmatmul.mubr.bf16.gmra.mxu0 %v3308
        %v4312 = vpop.f32.mrf.mxu0
        %v4313 = vadd.f32 %v4152, %v4312
        %v4314 = vpop.f32.mrf.mxu0
        %v4315 = vpop.f32.mrf.mxu0
        %v4316 = vadd.f32 %v4155, %v4315
        %v4317 = vpop.f32.mrf.mxu0
        %4318 = vmatprep.mubr.bf16.mxu0 0
        %4319 = vmatmul.mubr.bf16.gmra.mxu0 %v3309
        %v4320 = vpop.f32.mrf.mxu0
        %v4321 = vadd.f32 %v4160, %v4320
        %v4322 = vpop.f32.mrf.mxu0
        %v4323 = vpop.f32.mrf.mxu0
        %v4324 = vadd.f32 %v4163, %v4323
        %v4325 = vpop.f32.mrf.mxu0
        %4326 = vmatprep.mubr.bf16.mxu0 0
        %4327 = vmatmul.mubr.bf16.gmra.mxu0 %v3310
        %v4328 = vpop.f32.mrf.mxu0
        %v4329 = vadd.f32 %v4168, %v4328
        %v4330 = vpop.f32.mrf.mxu0
        %v4331 = vpop.f32.mrf.mxu0
        %v4332 = vadd.f32 %v4171, %v4331
        %v4333 = vpop.f32.mrf.mxu0
        %4334 = vmatprep.mubr.bf16.mxu0 0
        %4335 = vmatmul.mubr.bf16.gmra.mxu0 %v3311
        %v4336 = vpop.f32.mrf.mxu0
        %v4337 = vadd.f32 %v4176, %v4336
        %v4338 = vpop.f32.mrf.mxu0
        %v4339 = vpop.f32.mrf.mxu0
        %v4340 = vadd.f32 %v4179, %v4339
        %v4341 = vpop.f32.mrf.mxu0
        %4342 = vdwg.mxu0
        %s4343 = scalar_lea.vmem %s5, 384
        %v4344 = vld [vmem:[%s4343] sm:$0xf]
        %v4345 = vld [vmem:[%s4343 + $0x4] sm:$0xf]
        %v4346 = vld [vmem:[%s4343 + $0x8] sm:$0xf]
        %v4347 = vld [vmem:[%s4343 + $0xc] sm:$0xf]
        %v4348 = vld [vmem:[%s4343 + $0x10] sm:$0xf]
        %v4349 = vld [vmem:[%s4343 + $0x14] sm:$0xf]
        %v4350 = vld [vmem:[%s4343 + $0x18] sm:$0xf]
        %v4351 = vld [vmem:[%s4343 + $0x1c] sm:$0xf]
        %v4352 = vld [vmem:[%s4343 + $0x20] sm:$0xf]
        %v4353 = vld [vmem:[%s4343 + $0x24] sm:$0xf]
        %v4354 = vld [vmem:[%s4343 + $0x28] sm:$0xf]
        %v4355 = vld [vmem:[%s4343 + $0x2c] sm:$0xf]
        %v4356 = vld [vmem:[%s4343 + $0x30] sm:$0xf]
        %v4357 = vld [vmem:[%s4343 + $0x34] sm:$0xf]
        %v4358 = vld [vmem:[%s4343 + $0x38] sm:$0xf]
        %v4359 = vld [vmem:[%s4343 + $0x3c] sm:$0xf]
        %v4360 = vld [vmem:[%s4343 + $0x40] sm:$0xf]
        %v4361 = vld [vmem:[%s4343 + $0x44] sm:$0xf]
        %v4362 = vld [vmem:[%s4343 + $0x48] sm:$0xf]
        %v4363 = vld [vmem:[%s4343 + $0x4c] sm:$0xf]
        %v4364 = vld [vmem:[%s4343 + $0x50] sm:$0xf]
        %v4365 = vld [vmem:[%s4343 + $0x54] sm:$0xf]
        %v4366 = vld [vmem:[%s4343 + $0x58] sm:$0xf]
        %v4367 = vld [vmem:[%s4343 + $0x5c] sm:$0xf]
        %v4368 = vld [vmem:[%s4343 + $0x60] sm:$0xf]
        %v4369 = vld [vmem:[%s4343 + $0x64] sm:$0xf]
        %v4370 = vld [vmem:[%s4343 + $0x68] sm:$0xf]
        %v4371 = vld [vmem:[%s4343 + $0x6c] sm:$0xf]
        %v4372 = vld [vmem:[%s4343 + $0x70] sm:$0xf]
        %v4373 = vld [vmem:[%s4343 + $0x74] sm:$0xf]
        %v4374 = vld [vmem:[%s4343 + $0x78] sm:$0xf]
        %v4375 = vld [vmem:[%s4343 + $0x7c] sm:$0xf]
        %v4376 = vld [vmem:[%s4343 + $0x80] sm:$0xf]
        %v4377 = vld [vmem:[%s4343 + $0x84] sm:$0xf]
        %v4378 = vld [vmem:[%s4343 + $0x88] sm:$0xf]
        %v4379 = vld [vmem:[%s4343 + $0x8c] sm:$0xf]
        %v4380 = vld [vmem:[%s4343 + $0x90] sm:$0xf]
        %v4381 = vld [vmem:[%s4343 + $0x94] sm:$0xf]
        %v4382 = vld [vmem:[%s4343 + $0x98] sm:$0xf]
        %v4383 = vld [vmem:[%s4343 + $0x9c] sm:$0xf]
        %v4384 = vld [vmem:[%s4343 + $0xa0] sm:$0xf]
        %v4385 = vld [vmem:[%s4343 + $0xa4] sm:$0xf]
        %v4386 = vld [vmem:[%s4343 + $0xa8] sm:$0xf]
        %v4387 = vld [vmem:[%s4343 + $0xac] sm:$0xf]
        %v4388 = vld [vmem:[%s4343 + $0xb0] sm:$0xf]
        %v4389 = vld [vmem:[%s4343 + $0xb4] sm:$0xf]
        %v4390 = vld [vmem:[%s4343 + $0xb8] sm:$0xf]
        %v4391 = vld [vmem:[%s4343 + $0xbc] sm:$0xf]
        %v4440 = vunpack.c.l.b16 %v4344
        %v4441 = vunpack.c.l.b16 %v4345
        %v4442 = vunpack.c.l.b16 %v4346
        %v4443 = vunpack.c.l.b16 %v4347
        %v4444 = vunpack.c.l.b16 %v4348
        %v4445 = vunpack.c.l.b16 %v4349
        %v4446 = vunpack.c.l.b16 %v4350
        %v4447 = vunpack.c.l.b16 %v4351
        %v4448 = vunpack.c.l.b16 %v4352
        %v4449 = vunpack.c.l.b16 %v4353
        %v4450 = vunpack.c.l.b16 %v4354
        %v4451 = vunpack.c.l.b16 %v4355
        %v4452 = vunpack.c.l.b16 %v4356
        %v4453 = vunpack.c.l.b16 %v4357
        %v4454 = vunpack.c.l.b16 %v4358
        %v4455 = vunpack.c.l.b16 %v4359
        %v4456 = vunpack.c.l.b16 %v4360
        %v4457 = vunpack.c.l.b16 %v4361
        %v4458 = vunpack.c.l.b16 %v4362
        %v4459 = vunpack.c.l.b16 %v4363
        %v4460 = vunpack.c.l.b16 %v4364
        %v4461 = vunpack.c.l.b16 %v4365
        %v4462 = vunpack.c.l.b16 %v4366
        %v4463 = vunpack.c.l.b16 %v4367
        %v4464 = vunpack.c.l.b16 %v4368
        %v4465 = vunpack.c.l.b16 %v4369
        %v4466 = vunpack.c.l.b16 %v4370
        %v4467 = vunpack.c.l.b16 %v4371
        %v4468 = vunpack.c.l.b16 %v4372
        %v4469 = vunpack.c.l.b16 %v4373
        %v4470 = vunpack.c.l.b16 %v4374
        %v4471 = vunpack.c.l.b16 %v4375
        %v4472 = vunpack.c.l.b16 %v4376
        %v4473 = vunpack.c.l.b16 %v4377
        %v4474 = vunpack.c.l.b16 %v4378
        %v4475 = vunpack.c.l.b16 %v4379
        %v4476 = vunpack.c.l.b16 %v4380
        %v4477 = vunpack.c.l.b16 %v4381
        %v4478 = vunpack.c.l.b16 %v4382
        %v4479 = vunpack.c.l.b16 %v4383
        %v4480 = vunpack.c.l.b16 %v4384
        %v4481 = vunpack.c.l.b16 %v4385
        %v4482 = vunpack.c.l.b16 %v4386
        %v4483 = vunpack.c.l.b16 %v4387
        %v4484 = vunpack.c.l.b16 %v4388
        %v4485 = vunpack.c.l.b16 %v4389
        %v4486 = vunpack.c.l.b16 %v4390
        %v4487 = vunpack.c.l.b16 %v4391
        %v4488 = vpack.c.b16 %v4441, %v4440
        %v4489 = vpack.c.b16 %v4443, %v4442
        %v4490 = vpack.c.b16 %v4445, %v4444
        %v4491 = vpack.c.b16 %v4447, %v4446
        %v4492 = vpack.c.b16 %v4449, %v4448
        %v4493 = vpack.c.b16 %v4451, %v4450
        %v4494 = vpack.c.b16 %v4453, %v4452
        %v4495 = vpack.c.b16 %v4455, %v4454
        %v4496 = vpack.c.b16 %v4457, %v4456
        %v4497 = vpack.c.b16 %v4459, %v4458
        %v4498 = vpack.c.b16 %v4461, %v4460
        %v4499 = vpack.c.b16 %v4463, %v4462
        %v4500 = vpack.c.b16 %v4465, %v4464
        %v4501 = vpack.c.b16 %v4467, %v4466
        %v4502 = vpack.c.b16 %v4469, %v4468
        %v4503 = vpack.c.b16 %v4471, %v4470
        %v4504 = vpack.c.b16 %v4473, %v4472
        %v4505 = vpack.c.b16 %v4475, %v4474
        %v4506 = vpack.c.b16 %v4477, %v4476
        %v4507 = vpack.c.b16 %v4479, %v4478
        %v4508 = vpack.c.b16 %v4481, %v4480
        %v4509 = vpack.c.b16 %v4483, %v4482
        %v4510 = vpack.c.b16 %v4485, %v4484
        %v4511 = vpack.c.b16 %v4487, %v4486
        %4536 = vmatprep.subr.bf16.mxu0 0
        %4537 = vmatpush1.bf16.msra.mxu0 %v4495
        %4538 = vmatprep.subr.bf16.mxu0 0
        %4539 = vmatpush1.bf16.msra.mxu0 %v4494
        %4540 = vmatprep.subr.bf16.mxu0 0
        %4541 = vmatpush1.bf16.msra.mxu0 %v4493
        %4542 = vmatprep.subr.bf16.mxu0 0
        %4543 = vmatpush1.bf16.msra.mxu0 %v4492
        %4544 = vmatprep.subr.bf16.mxu0 0
        %4545 = vmatpush1.bf16.msra.mxu0 %v4491
        %4546 = vmatprep.subr.bf16.mxu0 0
        %4547 = vmatpush1.bf16.msra.mxu0 %v4490
        %4548 = vmatprep.subr.bf16.mxu0 0
        %4549 = vmatpush1.bf16.msra.mxu0 %v4489
        %4550 = vmatprep.subr.bf16.mxu0 0
        %4551 = vmatpush1.bf16.msra.mxu0 %v4488
        %4552 = vmatprep.subr.bf16.mxu0 0
        %4553 = vmatpush2.bf16.msra.mxu0 %v4503
        %4554 = vmatprep.subr.bf16.mxu0 0
        %4555 = vmatpush2.bf16.msra.mxu0 %v4502
        %4556 = vmatprep.subr.bf16.mxu0 0
        %4557 = vmatpush2.bf16.msra.mxu0 %v4501
        %4558 = vmatprep.subr.bf16.mxu0 0
        %4559 = vmatpush2.bf16.msra.mxu0 %v4500
        %4560 = vmatprep.subr.bf16.mxu0 0
        %4561 = vmatpush2.bf16.msra.mxu0 %v4499
        %4562 = vmatprep.subr.bf16.mxu0 0
        %4563 = vmatpush2.bf16.msra.mxu0 %v4498
        %4564 = vmatprep.subr.bf16.mxu0 0
        %4565 = vmatpush2.bf16.msra.mxu0 %v4497
        %4566 = vmatprep.subr.bf16.mxu0 0
        %4567 = vmatpush2.bf16.msra.mxu0 %v4496
        %4568 = vmatprep.mubr.bf16.mxu0 %v3059
        %4569 = vmatmul.mubr.bf16.gmra.mxu0 %v3224
        %v4570 = vpop.f32.mrf.mxu0
        %v4571 = vadd.f32 0.0, %v4570
        %v4572 = vpop.f32.mrf.mxu0
        %v4573 = vpop.f32.mrf.mxu0
        %v4574 = vadd.f32 0.0, %v4573
        %v4575 = vpop.f32.mrf.mxu0
        %4576 = vmatprep.mubr.bf16.mxu0 %v3060
        %4577 = vmatmul.mubr.bf16.gmra.mxu0 %v3225
        %v4578 = vpop.f32.mrf.mxu0
        %v4579 = vadd.f32 0.0, %v4578
        %v4580 = vpop.f32.mrf.mxu0
        %v4581 = vpop.f32.mrf.mxu0
        %v4582 = vadd.f32 0.0, %v4581
        %v4583 = vpop.f32.mrf.mxu0
        %4584 = vmatprep.mubr.bf16.mxu0 %v3061
        %4585 = vmatmul.mubr.bf16.gmra.mxu0 %v3226
        %v4586 = vpop.f32.mrf.mxu0
        %v4587 = vadd.f32 0.0, %v4586
        %v4588 = vpop.f32.mrf.mxu0
        %v4589 = vpop.f32.mrf.mxu0
        %v4590 = vadd.f32 0.0, %v4589
        %v4591 = vpop.f32.mrf.mxu0
        %4592 = vmatprep.mubr.bf16.mxu0 %v3062
        %4593 = vmatmul.mubr.bf16.gmra.mxu0 %v3227
        %v4594 = vpop.f32.mrf.mxu0
        %v4595 = vadd.f32 0.0, %v4594
        %v4596 = vpop.f32.mrf.mxu0
        %v4597 = vpop.f32.mrf.mxu0
        %v4598 = vadd.f32 0.0, %v4597
        %v4599 = vpop.f32.mrf.mxu0
        %4600 = vmatprep.mubr.bf16.mxu0 %v3063
        %4601 = vmatmul.mubr.bf16.gmra.mxu0 %v3228
        %v4602 = vpop.f32.mrf.mxu0
        %v4603 = vadd.f32 0.0, %v4602
        %v4604 = vpop.f32.mrf.mxu0
        %v4605 = vpop.f32.mrf.mxu0
        %v4606 = vadd.f32 0.0, %v4605
        %v4607 = vpop.f32.mrf.mxu0
        %4608 = vmatprep.mubr.bf16.mxu0 %v3064
        %4609 = vmatmul.mubr.bf16.gmra.mxu0 %v3229
        %v4610 = vpop.f32.mrf.mxu0
        %v4611 = vadd.f32 0.0, %v4610
        %v4612 = vpop.f32.mrf.mxu0
        %v4613 = vpop.f32.mrf.mxu0
        %v4614 = vadd.f32 0.0, %v4613
        %v4615 = vpop.f32.mrf.mxu0
        %4616 = vmatprep.mubr.bf16.mxu0 %v3065
        %4617 = vmatmul.mubr.bf16.gmra.mxu0 %v3230
        %v4618 = vpop.f32.mrf.mxu0
        %v4619 = vadd.f32 0.0, %v4618
        %v4620 = vpop.f32.mrf.mxu0
        %v4621 = vpop.f32.mrf.mxu0
        %v4622 = vadd.f32 0.0, %v4621
        %v4623 = vpop.f32.mrf.mxu0
        %4624 = vmatprep.mubr.bf16.mxu0 %v3066
        %4625 = vmatmul.mubr.bf16.gmra.mxu0 %v3231
        %v4626 = vpop.f32.mrf.mxu0
        %v4627 = vadd.f32 0.0, %v4626
        %v4628 = vpop.f32.mrf.mxu0
        %v4629 = vpop.f32.mrf.mxu0
        %v4630 = vadd.f32 0.0, %v4629
        %v4631 = vpop.f32.mrf.mxu0
        %4632 = vmatprep.mubr.bf16.mxu0 %v3067
        %4633 = vmatmul.mubr.bf16.gmra.mxu0 %v3232
        %v4634 = vpop.f32.mrf.mxu0
        %v4635 = vadd.f32 0.0, %v4634
        %v4636 = vpop.f32.mrf.mxu0
        %v4637 = vpop.f32.mrf.mxu0
        %v4638 = vadd.f32 0.0, %v4637
        %v4639 = vpop.f32.mrf.mxu0
        %4640 = vmatprep.mubr.bf16.mxu0 %v3068
        %4641 = vmatmul.mubr.bf16.gmra.mxu0 %v3233
        %v4642 = vpop.f32.mrf.mxu0
        %v4643 = vadd.f32 0.0, %v4642
        %v4644 = vpop.f32.mrf.mxu0
        %v4645 = vpop.f32.mrf.mxu0
        %v4646 = vadd.f32 0.0, %v4645
        %v4647 = vpop.f32.mrf.mxu0
        %4648 = vmatprep.mubr.bf16.mxu0 %v3069
        %4649 = vmatmul.mubr.bf16.gmra.mxu0 %v3234
        %v4650 = vpop.f32.mrf.mxu0
        %v4651 = vadd.f32 0.0, %v4650
        %v4652 = vpop.f32.mrf.mxu0
        %v4653 = vpop.f32.mrf.mxu0
        %v4654 = vadd.f32 0.0, %v4653
        %v4655 = vpop.f32.mrf.mxu0
        %4656 = vmatprep.mubr.bf16.mxu0 %v3070
        %4657 = vmatmul.mubr.bf16.gmra.mxu0 %v3235
        %v4658 = vpop.f32.mrf.mxu0
        %v4659 = vadd.f32 0.0, %v4658
        %v4660 = vpop.f32.mrf.mxu0
        %v4661 = vpop.f32.mrf.mxu0
        %v4662 = vadd.f32 0.0, %v4661
        %v4663 = vpop.f32.mrf.mxu0
        %4664 = vmatprep.mubr.bf16.mxu0 %v3071
        %4665 = vmatmul.mubr.bf16.gmra.mxu0 %v3236
        %v4666 = vpop.f32.mrf.mxu0
        %v4667 = vadd.f32 0.0, %v4666
        %v4668 = vpop.f32.mrf.mxu0
        %v4669 = vpop.f32.mrf.mxu0
        %v4670 = vadd.f32 0.0, %v4669
        %v4671 = vpop.f32.mrf.mxu0
        %4672 = vmatprep.mubr.bf16.mxu0 %v3072
        %4673 = vmatmul.mubr.bf16.gmra.mxu0 %v3237
        %v4674 = vpop.f32.mrf.mxu0
        %v4675 = vadd.f32 0.0, %v4674
        %v4676 = vpop.f32.mrf.mxu0
        %v4677 = vpop.f32.mrf.mxu0
        %v4678 = vadd.f32 0.0, %v4677
        %v4679 = vpop.f32.mrf.mxu0
        %4680 = vmatprep.mubr.bf16.mxu0 %v3073
        %4681 = vmatmul.mubr.bf16.gmra.mxu0 %v3238
        %v4682 = vpop.f32.mrf.mxu0
        %v4683 = vadd.f32 0.0, %v4682
        %v4684 = vpop.f32.mrf.mxu0
        %v4685 = vpop.f32.mrf.mxu0
        %v4686 = vadd.f32 0.0, %v4685
        %v4687 = vpop.f32.mrf.mxu0
        %4688 = vmatprep.mubr.bf16.mxu0 %v3074
        %4689 = vmatmul.mubr.bf16.gmra.mxu0 %v3239
        %v4690 = vpop.f32.mrf.mxu0
        %v4691 = vadd.f32 0.0, %v4690
        %v4692 = vpop.f32.mrf.mxu0
        %v4693 = vpop.f32.mrf.mxu0
        %v4694 = vadd.f32 0.0, %v4693
        %v4695 = vpop.f32.mrf.mxu0
        %4696 = vdwg.mxu0
        %4697 = vmatprep.subr.bf16.mxu0 0
        %4698 = vmatpush1.bf16.msra.mxu0 %v4511
        %4699 = vmatprep.subr.bf16.mxu0 0
        %4700 = vmatpush1.bf16.msra.mxu0 %v4510
        %4701 = vmatprep.subr.bf16.mxu0 0
        %4702 = vmatpush1.bf16.msra.mxu0 %v4509
        %4703 = vmatprep.subr.bf16.mxu0 0
        %4704 = vmatpush1.bf16.msra.mxu0 %v4508
        %4705 = vmatprep.subr.bf16.mxu0 0
        %4706 = vmatpush1.bf16.msra.mxu0 %v4507
        %4707 = vmatprep.subr.bf16.mxu0 0
        %4708 = vmatpush1.bf16.msra.mxu0 %v4506
        %4709 = vmatprep.subr.bf16.mxu0 0
        %4710 = vmatpush1.bf16.msra.mxu0 %v4505
        %4711 = vmatprep.subr.bf16.mxu0 0
        %4712 = vmatpush1.bf16.msra.mxu0 %v4504
        %4713 = vmatprep.subr.bf16.mxu0 0
        %4714 = vmatpush2.bf16.msra.mxu0 0
        %4715 = vmatprep.subr.bf16.mxu0 0
        %4716 = vmatpush2.bf16.msra.mxu0 0
        %4717 = vmatprep.subr.bf16.mxu0 0
        %4718 = vmatpush2.bf16.msra.mxu0 0
        %4719 = vmatprep.subr.bf16.mxu0 0
        %4720 = vmatpush2.bf16.msra.mxu0 0
        %4721 = vmatprep.subr.bf16.mxu0 0
        %4722 = vmatpush2.bf16.msra.mxu0 0
        %4723 = vmatprep.subr.bf16.mxu0 0
        %4724 = vmatpush2.bf16.msra.mxu0 0
        %4725 = vmatprep.subr.bf16.mxu0 0
        %4726 = vmatpush2.bf16.msra.mxu0 0
        %4727 = vmatprep.subr.bf16.mxu0 0
        %4728 = vmatpush2.bf16.msra.mxu0 0
        %4729 = vmatprep.mubr.bf16.mxu0 0
        %4730 = vmatmul.mubr.bf16.gmra.mxu0 %v3298
        %v4731 = vpop.f32.mrf.mxu0
        %v4732 = vadd.f32 %v4571, %v4731
        %v4733 = vpop.f32.mrf.mxu0
        %v4734 = vpop.f32.mrf.mxu0
        %v4735 = vadd.f32 %v4574, %v4734
        %v4736 = vpop.f32.mrf.mxu0
        %4737 = vmatprep.mubr.bf16.mxu0 0
        %4738 = vmatmul.mubr.bf16.gmra.mxu0 %v3299
        %v4739 = vpop.f32.mrf.mxu0
        %v4740 = vadd.f32 %v4579, %v4739
        %v4741 = vpop.f32.mrf.mxu0
        %v4742 = vpop.f32.mrf.mxu0
        %v4743 = vadd.f32 %v4582, %v4742
        %v4744 = vpop.f32.mrf.mxu0
        %4745 = vmatprep.mubr.bf16.mxu0 0
        %4746 = vmatmul.mubr.bf16.gmra.mxu0 %v3300
        %v4747 = vpop.f32.mrf.mxu0
        %v4748 = vadd.f32 %v4587, %v4747
        %v4749 = vpop.f32.mrf.mxu0
        %v4750 = vpop.f32.mrf.mxu0
        %v4751 = vadd.f32 %v4590, %v4750
        %v4752 = vpop.f32.mrf.mxu0
        %4753 = vmatprep.mubr.bf16.mxu0 0
        %4754 = vmatmul.mubr.bf16.gmra.mxu0 %v3301
        %v4755 = vpop.f32.mrf.mxu0
        %v4756 = vadd.f32 %v4595, %v4755
        %v4757 = vpop.f32.mrf.mxu0
        %v4758 = vpop.f32.mrf.mxu0
        %v4759 = vadd.f32 %v4598, %v4758
        %v4760 = vpop.f32.mrf.mxu0
        %4761 = vmatprep.mubr.bf16.mxu0 0
        %4762 = vmatmul.mubr.bf16.gmra.mxu0 %v3302
        %v4763 = vpop.f32.mrf.mxu0
        %v4764 = vadd.f32 %v4603, %v4763
        %v4765 = vpop.f32.mrf.mxu0
        %v4766 = vpop.f32.mrf.mxu0
        %v4767 = vadd.f32 %v4606, %v4766
        %v4768 = vpop.f32.mrf.mxu0
        %4769 = vmatprep.mubr.bf16.mxu0 0
        %4770 = vmatmul.mubr.bf16.gmra.mxu0 %v3303
        %v4771 = vpop.f32.mrf.mxu0
        %v4772 = vadd.f32 %v4611, %v4771
        %v4773 = vpop.f32.mrf.mxu0
        %v4774 = vpop.f32.mrf.mxu0
        %v4775 = vadd.f32 %v4614, %v4774
        %v4776 = vpop.f32.mrf.mxu0
        %4777 = vmatprep.mubr.bf16.mxu0 0
        %4778 = vmatmul.mubr.bf16.gmra.mxu0 %v3304
        %v4779 = vpop.f32.mrf.mxu0
        %v4780 = vadd.f32 %v4619, %v4779
        %v4781 = vpop.f32.mrf.mxu0
        %v4782 = vpop.f32.mrf.mxu0
        %v4783 = vadd.f32 %v4622, %v4782
        %v4784 = vpop.f32.mrf.mxu0
        %4785 = vmatprep.mubr.bf16.mxu0 0
        %4786 = vmatmul.mubr.bf16.gmra.mxu0 %v3305
        %v4787 = vpop.f32.mrf.mxu0
        %v4788 = vadd.f32 %v4627, %v4787
        %v4789 = vpop.f32.mrf.mxu0
        %v4790 = vpop.f32.mrf.mxu0
        %v4791 = vadd.f32 %v4630, %v4790
        %v4792 = vpop.f32.mrf.mxu0
        %4793 = vmatprep.mubr.bf16.mxu0 0
        %4794 = vmatmul.mubr.bf16.gmra.mxu0 %v3306
        %v4795 = vpop.f32.mrf.mxu0
        %v4796 = vadd.f32 %v4635, %v4795
        %v4797 = vpop.f32.mrf.mxu0
        %v4798 = vpop.f32.mrf.mxu0
        %v4799 = vadd.f32 %v4638, %v4798
        %v4800 = vpop.f32.mrf.mxu0
        %4801 = vmatprep.mubr.bf16.mxu0 0
        %4802 = vmatmul.mubr.bf16.gmra.mxu0 %v3307
        %v4803 = vpop.f32.mrf.mxu0
        %v4804 = vadd.f32 %v4643, %v4803
        %v4805 = vpop.f32.mrf.mxu0
        %v4806 = vpop.f32.mrf.mxu0
        %v4807 = vadd.f32 %v4646, %v4806
        %v4808 = vpop.f32.mrf.mxu0
        %4809 = vmatprep.mubr.bf16.mxu0 0
        %4810 = vmatmul.mubr.bf16.gmra.mxu0 %v3308
        %v4811 = vpop.f32.mrf.mxu0
        %v4812 = vadd.f32 %v4651, %v4811
        %v4813 = vpop.f32.mrf.mxu0
        %v4814 = vpop.f32.mrf.mxu0
        %v4815 = vadd.f32 %v4654, %v4814
        %v4816 = vpop.f32.mrf.mxu0
        %4817 = vmatprep.mubr.bf16.mxu0 0
        %4818 = vmatmul.mubr.bf16.gmra.mxu0 %v3309
        %v4819 = vpop.f32.mrf.mxu0
        %v4820 = vadd.f32 %v4659, %v4819
        %v4821 = vpop.f32.mrf.mxu0
        %v4822 = vpop.f32.mrf.mxu0
        %v4823 = vadd.f32 %v4662, %v4822
        %v4824 = vpop.f32.mrf.mxu0
        %4825 = vmatprep.mubr.bf16.mxu0 0
        %4826 = vmatmul.mubr.bf16.gmra.mxu0 %v3310
        %v4827 = vpop.f32.mrf.mxu0
        %v4828 = vadd.f32 %v4667, %v4827
        %v4829 = vpop.f32.mrf.mxu0
        %v4830 = vpop.f32.mrf.mxu0
        %v4831 = vadd.f32 %v4670, %v4830
        %v4832 = vpop.f32.mrf.mxu0
        %4833 = vmatprep.mubr.bf16.mxu0 0
        %4834 = vmatmul.mubr.bf16.gmra.mxu0 %v3311
        %v4835 = vpop.f32.mrf.mxu0
        %v4836 = vadd.f32 %v4675, %v4835
        %v4837 = vpop.f32.mrf.mxu0
        %v4838 = vpop.f32.mrf.mxu0
        %v4839 = vadd.f32 %v4678, %v4838
        %v4840 = vpop.f32.mrf.mxu0
        %4841 = vmatprep.mubr.bf16.mxu0 0
        %4842 = vmatmul.mubr.bf16.gmra.mxu0 %v3312
        %v4843 = vpop.f32.mrf.mxu0
        %v4844 = vadd.f32 %v4683, %v4843
        %v4845 = vpop.f32.mrf.mxu0
        %v4846 = vpop.f32.mrf.mxu0
        %v4847 = vadd.f32 %v4686, %v4846
        %v4848 = vpop.f32.mrf.mxu0
        %4849 = vmatprep.mubr.bf16.mxu0 0
        %4850 = vmatmul.mubr.bf16.gmra.mxu0 %v3313
        %v4851 = vpop.f32.mrf.mxu0
        %v4852 = vadd.f32 %v4691, %v4851
        %v4853 = vpop.f32.mrf.mxu0
        %v4854 = vpop.f32.mrf.mxu0
        %v4855 = vadd.f32 %v4694, %v4854
        %v4856 = vpop.f32.mrf.mxu0
        %4857 = vdwg.mxu0
        %v4858 = vadd.f32 %v4217, %v4732
        %v4859 = vadd.f32 %v4220, %v4735
        %v4860 = vadd.f32 %v4225, %v4740
        %v4861 = vadd.f32 %v4228, %v4743
        %v4862 = vadd.f32 %v4233, %v4748
        %v4863 = vadd.f32 %v4236, %v4751
        %v4864 = vadd.f32 %v4241, %v4756
        %v4865 = vadd.f32 %v4244, %v4759
        %v4866 = vadd.f32 %v4249, %v4764
        %v4867 = vadd.f32 %v4252, %v4767
        %v4868 = vadd.f32 %v4257, %v4772
        %v4869 = vadd.f32 %v4260, %v4775
        %v4870 = vadd.f32 %v4265, %v4780
        %v4871 = vadd.f32 %v4268, %v4783
        %v4872 = vadd.f32 %v4273, %v4788
        %v4873 = vadd.f32 %v4276, %v4791
        %v4874 = vadd.f32 %v4281, %v4796
        %v4875 = vadd.f32 %v4284, %v4799
        %v4876 = vadd.f32 %v4289, %v4804
        %v4877 = vadd.f32 %v4292, %v4807
        %v4878 = vadd.f32 %v4297, %v4812
        %v4879 = vadd.f32 %v4300, %v4815
        %v4880 = vadd.f32 %v4305, %v4820
        %v4881 = vadd.f32 %v4308, %v4823
        %v4882 = vadd.f32 %v4313, %v4828
        %v4883 = vadd.f32 %v4316, %v4831
        %v4884 = vadd.f32 %v4321, %v4836
        %v4885 = vadd.f32 %v4324, %v4839
        %v4886 = vadd.f32 %v4329, %v4844
        %v4887 = vadd.f32 %v4332, %v4847
        %v4888 = vadd.f32 %v4337, %v4852
        %v4889 = vadd.f32 %v4340, %v4855
        %v4890 = vld [vmem:[%s6] sm:$0x1]
        %v4892 = vlaneseq
        %v4893 = vshrl.u32 %v4892, 7
        %v4894 = vsub.s32 0, %v4893
        %v4895 = vrot.slane %v4890, %v4894
        %v4897 = vmul.f32 %v4858, %v4895
        %v4898 = vmul.f32 %v4859, %v4895
        %v4899 = vmul.f32 %v4860, %v4895
        %v4900 = vmul.f32 %v4861, %v4895
        %v4901 = vmul.f32 %v4862, %v4895
        %v4902 = vmul.f32 %v4863, %v4895
        %v4903 = vmul.f32 %v4864, %v4895
        %v4904 = vmul.f32 %v4865, %v4895
        %v4905 = vmul.f32 %v4866, %v4895
        %v4906 = vmul.f32 %v4867, %v4895
        %v4907 = vmul.f32 %v4868, %v4895
        %v4908 = vmul.f32 %v4869, %v4895
        %v4909 = vmul.f32 %v4870, %v4895
        %v4910 = vmul.f32 %v4871, %v4895
        %v4911 = vmul.f32 %v4872, %v4895
        %v4912 = vmul.f32 %v4873, %v4895
        %v4913 = vmul.f32 %v4874, %v4895
        %v4914 = vmul.f32 %v4875, %v4895
        %v4915 = vmul.f32 %v4876, %v4895
        %v4916 = vmul.f32 %v4877, %v4895
        %v4917 = vmul.f32 %v4878, %v4895
        %v4918 = vmul.f32 %v4879, %v4895
        %v4919 = vmul.f32 %v4880, %v4895
        %v4920 = vmul.f32 %v4881, %v4895
        %v4921 = vmul.f32 %v4882, %v4895
        %v4922 = vmul.f32 %v4883, %v4895
        %v4923 = vmul.f32 %v4884, %v4895
        %v4924 = vmul.f32 %v4885, %v4895
        %v4925 = vmul.f32 %v4886, %v4895
        %v4926 = vmul.f32 %v4887, %v4895
        %v4927 = vmul.f32 %v4888, %v4895
        %v4928 = vmul.f32 %v4889, %v4895
        %v4929 = vld [vmem:[%s7] sm:$0x1]
        %v4931 = vlaneseq
        %v4932 = vshrl.u32 %v4931, 7
        %v4933 = vsub.s32 0, %v4932
        %v4934 = vrot.slane %v4929, %v4933
        %v4936 = vadd.f32 %v4897, %v4934
        %v4937 = vadd.f32 %v4898, %v4934
        %v4938 = vadd.f32 %v4899, %v4934
        %v4939 = vadd.f32 %v4900, %v4934
        %v4940 = vadd.f32 %v4901, %v4934
        %v4941 = vadd.f32 %v4902, %v4934
        %v4942 = vadd.f32 %v4903, %v4934
        %v4943 = vadd.f32 %v4904, %v4934
        %v4944 = vadd.f32 %v4905, %v4934
        %v4945 = vadd.f32 %v4906, %v4934
        %v4946 = vadd.f32 %v4907, %v4934
        %v4947 = vadd.f32 %v4908, %v4934
        %v4948 = vadd.f32 %v4909, %v4934
        %v4949 = vadd.f32 %v4910, %v4934
        %v4950 = vadd.f32 %v4911, %v4934
        %v4951 = vadd.f32 %v4912, %v4934
        %v4952 = vadd.f32 %v4913, %v4934
        %v4953 = vadd.f32 %v4914, %v4934
        %v4954 = vadd.f32 %v4915, %v4934
        %v4955 = vadd.f32 %v4916, %v4934
        %v4956 = vadd.f32 %v4917, %v4934
        %v4957 = vadd.f32 %v4918, %v4934
        %v4958 = vadd.f32 %v4919, %v4934
        %v4959 = vadd.f32 %v4920, %v4934
        %v4960 = vadd.f32 %v4921, %v4934
        %v4961 = vadd.f32 %v4922, %v4934
        %v4962 = vadd.f32 %v4923, %v4934
        %v4963 = vadd.f32 %v4924, %v4934
        %v4964 = vadd.f32 %v4925, %v4934
        %v4965 = vadd.f32 %v4926, %v4934
        %v4966 = vadd.f32 %v4927, %v4934
        %v4967 = vadd.f32 %v4928, %v4934
        %v4968 = vmax.f32 %v4936, 0.0
        %v4969 = vmax.f32 %v4937, 0.0
        %v4970 = vmax.f32 %v4938, 0.0
        %v4971 = vmax.f32 %v4939, 0.0
        %v4972 = vmax.f32 %v4940, 0.0
        %v4973 = vmax.f32 %v4941, 0.0
        %v4974 = vmax.f32 %v4942, 0.0
        %v4975 = vmax.f32 %v4943, 0.0
        %v4976 = vmax.f32 %v4944, 0.0
        %v4977 = vmax.f32 %v4945, 0.0
        %v4978 = vmax.f32 %v4946, 0.0
        %v4979 = vmax.f32 %v4947, 0.0
        %v4980 = vmax.f32 %v4948, 0.0
        %v4981 = vmax.f32 %v4949, 0.0
        %v4982 = vmax.f32 %v4950, 0.0
        %v4983 = vmax.f32 %v4951, 0.0
        %v4984 = vmax.f32 %v4952, 0.0
        %v4985 = vmax.f32 %v4953, 0.0
        %v4986 = vmax.f32 %v4954, 0.0
        %v4987 = vmax.f32 %v4955, 0.0
        %v4988 = vmax.f32 %v4956, 0.0
        %v4989 = vmax.f32 %v4957, 0.0
        %v4990 = vmax.f32 %v4958, 0.0
        %v4991 = vmax.f32 %v4959, 0.0
        %v4992 = vmax.f32 %v4960, 0.0
        %v4993 = vmax.f32 %v4961, 0.0
        %v4994 = vmax.f32 %v4962, 0.0
        %v4995 = vmax.f32 %v4963, 0.0
        %v4996 = vmax.f32 %v4964, 0.0
        %v4997 = vmax.f32 %v4965, 0.0
        %v4998 = vmax.f32 %v4966, 0.0
        %v4999 = vmax.f32 %v4967, 0.0
        %v5000 = vpack.c.bf16 %v4969, %v4968
        %v5001 = vpack.c.bf16 %v4971, %v4970
        %v5002 = vpack.c.bf16 %v4973, %v4972
        %v5003 = vpack.c.bf16 %v4975, %v4974
        %v5004 = vpack.c.bf16 %v4977, %v4976
        %v5005 = vpack.c.bf16 %v4979, %v4978
        %v5006 = vpack.c.bf16 %v4981, %v4980
        %v5007 = vpack.c.bf16 %v4983, %v4982
        %v5008 = vpack.c.bf16 %v4985, %v4984
        %v5009 = vpack.c.bf16 %v4987, %v4986
        %v5010 = vpack.c.bf16 %v4989, %v4988
        %v5011 = vpack.c.bf16 %v4991, %v4990
        %v5012 = vpack.c.bf16 %v4993, %v4992
        %v5013 = vpack.c.bf16 %v4995, %v4994
        %v5014 = vpack.c.bf16 %v4997, %v4996
        %v5015 = vpack.c.bf16 %v4999, %v4998
        %v5032 = vunpack.c.l.b16 %v5000
        %v5033 = vunpack.c.h.b16 %v5000
        %v5034 = vunpack.c.l.b16 %v5001
        %v5035 = vunpack.c.h.b16 %v5001
        %v5036 = vunpack.c.l.b16 %v5002
        %v5037 = vunpack.c.h.b16 %v5002
        %v5038 = vunpack.c.l.b16 %v5003
        %v5039 = vunpack.c.h.b16 %v5003
        %v5040 = vunpack.c.l.b16 %v5004
        %v5041 = vunpack.c.h.b16 %v5004
        %v5042 = vunpack.c.l.b16 %v5005
        %v5043 = vunpack.c.h.b16 %v5005
        %v5044 = vunpack.c.l.b16 %v5006
        %v5045 = vunpack.c.h.b16 %v5006
        %v5046 = vunpack.c.l.b16 %v5007
        %v5047 = vunpack.c.h.b16 %v5007
        %v5048 = vunpack.c.l.b16 %v5008
        %v5049 = vunpack.c.h.b16 %v5008
        %v5050 = vunpack.c.l.b16 %v5009
        %v5051 = vunpack.c.h.b16 %v5009
        %v5052 = vunpack.c.l.b16 %v5010
        %v5053 = vunpack.c.h.b16 %v5010
        %v5054 = vunpack.c.l.b16 %v5011
        %v5055 = vunpack.c.h.b16 %v5011
        %v5056 = vunpack.c.l.b16 %v5012
        %v5057 = vunpack.c.h.b16 %v5012
        %v5058 = vunpack.c.l.b16 %v5013
        %v5059 = vunpack.c.h.b16 %v5013
        %v5060 = vunpack.c.l.b16 %v5014
        %v5061 = vunpack.c.h.b16 %v5014
        %v5062 = vunpack.c.l.b16 %v5015
        %v5063 = vunpack.c.h.b16 %v5015
        %v5064 = vpack.c.b16 %v5032, %v5032
        %v5065 = vpack.c.b16 %v5033, %v5033
        %v5066 = vpack.c.b16 %v5034, %v5034
        %v5067 = vpack.c.b16 %v5035, %v5035
        %v5068 = vpack.c.b16 %v5036, %v5036
        %v5069 = vpack.c.b16 %v5037, %v5037
        %v5070 = vpack.c.b16 %v5038, %v5038
        %v5071 = vpack.c.b16 %v5039, %v5039
        %v5072 = vpack.c.b16 %v5040, %v5040
        %v5073 = vpack.c.b16 %v5041, %v5041
        %v5074 = vpack.c.b16 %v5042, %v5042
        %v5075 = vpack.c.b16 %v5043, %v5043
        %v5076 = vpack.c.b16 %v5044, %v5044
        %v5077 = vpack.c.b16 %v5045, %v5045
        %v5078 = vpack.c.b16 %v5046, %v5046
        %v5079 = vpack.c.b16 %v5047, %v5047
        %v5080 = vpack.c.b16 %v5048, %v5048
        %v5081 = vpack.c.b16 %v5049, %v5049
        %v5082 = vpack.c.b16 %v5050, %v5050
        %v5083 = vpack.c.b16 %v5051, %v5051
        %v5084 = vpack.c.b16 %v5052, %v5052
        %v5085 = vpack.c.b16 %v5053, %v5053
        %v5086 = vpack.c.b16 %v5054, %v5054
        %v5087 = vpack.c.b16 %v5055, %v5055
        %v5088 = vpack.c.b16 %v5056, %v5056
        %v5089 = vpack.c.b16 %v5057, %v5057
        %v5090 = vpack.c.b16 %v5058, %v5058
        %v5091 = vpack.c.b16 %v5059, %v5059
        %v5092 = vpack.c.b16 %v5060, %v5060
        %v5093 = vpack.c.b16 %v5061, %v5061
        %v5094 = vpack.c.b16 %v5062, %v5062
        %v5095 = vpack.c.b16 %v5063, %v5063
        %5128 = vst [vmem:[%s378] sm:$0xf] %v5064
        %5129 = vst [vmem:[%s378 + $0x4] sm:$0xf] %v5065
        %5130 = vst [vmem:[%s378 + $0x8] sm:$0xf] %v5066
        %5131 = vst [vmem:[%s378 + $0xc] sm:$0xf] %v5067
        %5132 = vst [vmem:[%s378 + $0x10] sm:$0xf] %v5068
        %5133 = vst [vmem:[%s378 + $0x14] sm:$0xf] %v5069
        %5134 = vst [vmem:[%s378 + $0x18] sm:$0xf] %v5070
        %5135 = vst [vmem:[%s378 + $0x1c] sm:$0xf] %v5071
        %5136 = vst [vmem:[%s378 + $0x20] sm:$0xf] %v5072
        %5137 = vst [vmem:[%s378 + $0x24] sm:$0xf] %v5073
        %5138 = vst [vmem:[%s378 + $0x28] sm:$0xf] %v5074
        %5139 = vst [vmem:[%s378 + $0x2c] sm:$0xf] %v5075
        %5140 = vst [vmem:[%s378 + $0x30] sm:$0xf] %v5076
        %5141 = vst [vmem:[%s378 + $0x34] sm:$0xf] %v5077
        %5142 = vst [vmem:[%s378 + $0x38] sm:$0xf] %v5078
        %5143 = vst [vmem:[%s378 + $0x3c] sm:$0xf] %v5079
        %5144 = vst [vmem:[%s378 + $0x40] sm:$0xf] %v5080
        %5145 = vst [vmem:[%s378 + $0x44] sm:$0xf] %v5081
        %5146 = vst [vmem:[%s378 + $0x48] sm:$0xf] %v5082
        %5147 = vst [vmem:[%s378 + $0x4c] sm:$0xf] %v5083
        %5148 = vst [vmem:[%s378 + $0x50] sm:$0xf] %v5084
        %5149 = vst [vmem:[%s378 + $0x54] sm:$0xf] %v5085
        %5150 = vst [vmem:[%s378 + $0x58] sm:$0xf] %v5086
        %5151 = vst [vmem:[%s378 + $0x5c] sm:$0xf] %v5087
        %5152 = vst [vmem:[%s378 + $0x60] sm:$0xf] %v5088
        %5153 = vst [vmem:[%s378 + $0x64] sm:$0xf] %v5089
        %5154 = vst [vmem:[%s378 + $0x68] sm:$0xf] %v5090
        %5155 = vst [vmem:[%s378 + $0x6c] sm:$0xf] %v5091
        %5156 = vst [vmem:[%s378 + $0x70] sm:$0xf] %v5092
        %5157 = vst [vmem:[%s378 + $0x74] sm:$0xf] %v5093
        %5158 = vst [vmem:[%s378 + $0x78] sm:$0xf] %v5094
        %5159 = vst [vmem:[%s378 + $0x7c] sm:$0xf] %v5095
        %s5160 = sand.u32 %s230, 1
        %s5161 = scalar_lea.sflag [#allocation3], %s5160
        %s5162 = sand.u32 %s230, 1
        %s5163 = smul.addr %s5162, 128
        %s5164 = scalar_lea.vmem [#allocation2], %s5163
        // Predicated region
        $region53: #{tpu_custom_call.1} parent=51 // pred_check
          %p5165 = pneg %p240
        $region54: #{tpu_custom_call.1} parent=51 // pred_check_branch
          %5167 = sbr.rel (%p5165) target = $region56
        $region55: #{tpu_custom_call.1} parent=51 // pred_region
          %s5168 = smul.u32 16, %s27
          %s5170 = ssub.s32 2048, 2048
          %5171 = vsyncadd %s5161, %s5170
          %s5172 = smul.addr %s5168, 2
          %s5173 = smul.addr %s26, 32
          %s5174 = sadd.s32 %s5172, %s5173
          %s5175 = smul.addr %s5174, 64
          %s5176 = scalar_lea.hbm %s8, %s5175
          %s5177 = sshll.u32 %s5164, 4
          %s5178 = int_to_ptr.vmem [resolvable:$true] %s5177
          %5183 = dma.vmem_to_hbm [thread:$0]  %s5178, 2048, %s5176, %s5161, 64, 64, 4
        $region56: #{tpu_custom_call.1} parent=51 // pred_fallthru
          _
      $region52: #{tpu_custom_call.1} parent=5 // pred_fallthru
        _
      %p5184 = scmp.le.s32.totalorder 2, %s17
      // Predicated region
      $region57: #{tpu_custom_call.1} parent=5 // pred_check
        %p5185 = pneg %p5184
      $region58: #{tpu_custom_call.1} parent=5 // pred_check_branch
        %5187 = sbr.rel (%p5185) target = $region60
      $region59: #{tpu_custom_call.1} parent=5 // pred_region
        %s5188 = ssub.s32 %s17, 2
        // Predicated region
        $region61: #{tpu_custom_call.1} parent=59 // pred_check
          %p5189 = pneg %p246
        $region62: #{tpu_custom_call.1} parent=59 // pred_check_branch
          %5191 = sbr.rel (%p5189) target = $region64
        $region63: #{tpu_custom_call.1} parent=59 // pred_region
          %s5192 = sand.u32 %s231, 1
          %s5193 = scalar_lea.sflag [#allocation3], %s5192
          %s5194 = sand.u32 %s231, 1
          %s5195 = smul.addr %s5194, 128
          %s5196 = scalar_lea.vmem [#allocation2], %s5195
          %5197 = dma.done %s5193, 2048
        $region64: #{tpu_custom_call.1} parent=59 // pred_fallthru
          _
      $region60: #{tpu_custom_call.1} parent=5 // pred_fallthru
        _
    $region6: #{tpu_custom_call.1} parent=1 // loop_footer
      %s21 = sadd.s32 1, %s17
    $region7: #{tpu_custom_call.1} parent=1 // loop_footer_branch
      %16 = sbr.rel target = $region3
    $region8: #{tpu_custom_call.1} parent=1 // loop_exit
      _
    %5198 = vsyncpa [#allocation3], 1
    %s5199 = scalar_lea.sflag [#allocation3], 1
    %5200 = vsyncpa %s5199, 1

</llo_original>
